<compile_context>
chip_gen: v7x
topology: tpu7x:2x2x1
jax: 0.10.0
libtpu: 0.0.40
codegen_flags: <defaults>
</compile_context>

<pallas_src>
import math
import functools

import jax
import jax.numpy as jnp
from jax import lax
from jax.experimental import pallas as pl
from jax.experimental.pallas import tpu as pltpu

_LN_EPS = 1e-5


# -----------------------------------------------------------------------------
# Pure-JAX reference (faithful f32 translation of the PyTorch forward pass).
# Used only for the correctness check in __main__.
# -----------------------------------------------------------------------------
def _layer_norm(x, gamma, beta, eps=_LN_EPS):
    mean = jnp.mean(x, axis=-1, keepdims=True)
    var = jnp.mean(jnp.square(x - mean), axis=-1, keepdims=True)
    return (x - mean) * lax.rsqrt(var + eps) * gamma + beta


def _softmax_last(s):
    m = jnp.max(s, axis=-1, keepdims=True)
    e = jnp.exp(s - m)
    return e / jnp.sum(e, axis=-1, keepdims=True)


def _flow_block_reference(x, mask, p, *, half, hidden, n_heads):
    (w_pre, b_pre, wq, bq, wk, bk, wv, bv, wo, bo,
     ln1_g, ln1_b, w_f1, b_f1, w_f2, b_f2, ln2_g, ln2_b,
     w_post, b_post) = p
    head_dim = hidden // n_heads

    x0 = x[:, :, :half]
    x1 = x[:, :, half:]

    h = jnp.einsum('btc,ch->bth', x0, w_pre) + b_pre
    h = h * mask

    xe = h * mask
    msq = mask[:, :, 0]
    amask = msq[:, :, None] * msq[:, None, :]

    q = jnp.einsum('bth,hd->btd', xe, wq) + bq
    k = jnp.einsum('bth,hd->btd', xe, wk) + bk
    v = jnp.einsum('bth,hd->btd', xe, wv) + bv

    scale = 1.0 / math.sqrt(head_dim)
    heads = []
    for i in range(n_heads):
        lo, hi = i * head_dim, (i + 1) * head_dim
        s = jnp.einsum('btd,bsd->bts', q[:, :, lo:hi] * scale, k[:, :, lo:hi])
        s = jnp.where(amask == 0.0, jnp.float32(-1e4), s)
        heads.append(jnp.einsum('bts,bsd->btd', _softmax_last(s), v[:, :, lo:hi]))
    attn = jnp.concatenate(heads, axis=-1)
    attn = jnp.einsum('bth,hd->btd', attn, wo) + bo

    xe = _layer_norm(xe + attn, ln1_g, ln1_b)

    def conv3(inp, w, b):
        Bt, Tt, Ci = inp.shape
        zero = jnp.zeros((Bt, 1, Ci), inp.dtype)
        x_m1 = jnp.concatenate([zero, inp[:, :Tt - 1, :]], axis=1)
        x_p1 = jnp.concatenate([inp[:, 1:, :], zero], axis=1)
        y = (jnp.einsum('btc,cf->btf', x_m1, w[0])
             + jnp.einsum('btc,cf->btf', inp, w[1])
             + jnp.einsum('btc,cf->btf', x_p1, w[2]))
        return y + b

    f = conv3(xe * mask, w_f1, b_f1)
    f = jnp.maximum(f, 0.0)
    f = conv3(f * mask, w_f2, b_f2)
    f = f * mask

    xe = _layer_norm(xe + f, ln2_g, ln2_b)
    xe = xe * mask

    h = xe + h

    stats = jnp.einsum('bth,hc->btc', h, w_post) + b_post
    stats = stats * mask
    m = stats[:, :, :half]
    logs = stats[:, :, half:]

    x1n = m + x1 * jnp.exp(logs) * mask
    y = jnp.concatenate([x0, x1n], axis=-1)
    logdet = jnp.sum(jnp.sum(logs, axis=-1), axis=-1)      # (B,)
    return y, logdet


# -----------------------------------------------------------------------------
# Pallas kernel
# -----------------------------------------------------------------------------
def _ln_padded(x, gamma, beta, n_valid):
    # x: (T, Cpad) f32 with padded lanes exactly zero; gamma/beta are zero-
    # padded so padded output lanes stay exactly zero.  One-pass variance is
    # adequate at these hidden sizes (see review note).
    inv_n = 1.0 / float(n_valid)
    mean = jnp.sum(x, axis=-1, keepdims=True) * inv_n
    ex2 = jnp.sum(x * x, axis=-1, keepdims=True) * inv_n
    var = ex2 - mean * mean
    return (x - mean) * lax.rsqrt(var + _LN_EPS) * gamma + beta


def _flow_block_kernel(x0_ref, x1_ref, mcol_ref, mrow_ref,
                       w_pre, b_pre, wq, bq, wk, bk, wv, bv, wo, bo,
                       ln1_g, ln1_b, wf1, bf1, wf2, bf2, ln2_g, ln2_b,
                       w_post, b_post,
                       y1_ref, ld_ref,
                       *, n_heads, hidden, half_pad, head_dim_pad, seq_len,
                       exp_in_bf16):
    f32 = jnp.float32
    bf16 = jnp.bfloat16
    T = seq_len
    HDP = head_dim_pad

    x0 = x0_ref[0]                                  # (T, HP) f32, padded lanes 0
    x1 = x1_ref[0]                                  # (T, HP)
    msk = mcol_ref[0]                               # (T, 1)
    # additive key-axis mask: 0 for valid keys, -1e4 for masked/padded keys.
    key_bias = (mrow_ref[0] - 1.0) * 1e4            # (1, T)

    def mm(a_bf, w_ref):                            # bf16 MXU matmul, f32 accum
        return jnp.dot(a_bf, w_ref[...], preferred_element_type=f32)

    # ---- pre 1x1 conv ----
    h = (mm(x0.astype(bf16), w_pre) + b_pre[...]) * msk          # (T, HID)
    xe = h                                                       # enc() input

    # ---- multi-head self-attention (fused QKV / fused out-proj) ----
    xe_bf = xe.astype(bf16)                                      # cast hoisted
    q = mm(xe_bf, wq) + bq[...]                                  # (T, NH*HDP), scale folded
    k = mm(xe_bf, wk) + bk[...]
    v = mm(xe_bf, wv) + bv[...]
    q_bf = q.astype(bf16)
    k_bf = k.astype(bf16)
    v_bf = v.astype(bf16)

    head_outs = []
    for i in range(n_heads):                        # static unroll; 128-aligned slices
        lo = i * HDP
        q_i = q_bf[:, lo:lo + HDP]
        k_i = k_bf[:, lo:lo + HDP]
        v_i = v_bf[:, lo:lo + HDP]
        s = lax.dot_general(q_i, k_i, (((1,), (1,)), ((), ())),
                            preferred_element_type=f32)          # (T, T) = q k^T
        s = s + key_bias
        s = s - jnp.max(s, axis=-1, keepdims=True)
        if exp_in_bf16:
            p = jnp.exp(s.astype(bf16))                          # bf16 EUP (v6e/v7x)
            denom = jnp.sum(p.astype(f32), axis=-1, keepdims=True)
        else:
            p_f = jnp.exp(s)                                     # f32 EUP (v5e)
            denom = jnp.sum(p_f, axis=-1, keepdims=True)
            p = p_f.astype(bf16)
        # deferred normalisation: PV matmul on unnormalised probs, then scale
        # the small (T, HDP) result instead of the (T, T) matrix.
        o_i = jnp.dot(p, v_i, preferred_element_type=f32)        # (T, HDP)
        o_i = o_i * pl.reciprocal(denom, approx=True)
        head_outs.append(o_i.astype(bf16))
    o_all = head_outs[0] if n_heads == 1 else jnp.concatenate(head_outs, axis=-1)
    attn = mm(o_all, wo) + bo[...]                               # (T, HID)

    xe = _ln_padded(xe + attn, ln1_g[...], ln1_b[...], hidden)

    # ---- FFN: two kernel_size=3 "same" convs, each as ONE fused matmul ----
    t_idx = lax.broadcasted_iota(jnp.int32, (T, 1), 0)
    not_first = (t_idx > 0).astype(f32)
    not_last = (t_idx < T - 1).astype(f32)

    def conv3(inp, w3_cat, b):
        # taps (t-1, t, t+1); zero padding at the sequence edges via masks
        x_m1 = pltpu.roll(inp, 1, 0) * not_first
        x_p1 = pltpu.roll(inp, T - 1, 0) * not_last
        cat = jnp.concatenate([x_m1, inp, x_p1], axis=-1).astype(bf16)  # (T, 3C)
        return jnp.dot(cat, w3_cat[...], preferred_element_type=f32) + b[...]

    f = conv3(xe * msk, wf1, bf1)
    f = jnp.maximum(f, 0.0)
    f = conv3(f * msk, wf2, bf2)
    f = f * msk

    xe = _ln_padded(xe + f, ln2_g[...], ln2_b[...], hidden)
    xe = xe * msk
    # TODO(synk): gin_channels>0 / g-conditioning branch of attentions.Encoder
    # not implemented (module is used with gin_channels=0, g=None).

    h = xe + h                                      # enc(h) + h

    # ---- post 1x1 conv + affine coupling ----
    stats = (mm(h.astype(bf16), w_post) + b_post[...]) * msk     # (T, 2*HP)
    m = stats[:, :half_pad]
    logs = stats[:, half_pad:]

    x1n = m + x1 * jnp.exp(logs) * msk
    y1_ref[0] = x1n

    ld_t = jnp.sum(logs, axis=1, keepdims=True)                  # (T, 1)
    ld_ref[0] = jnp.sum(ld_t, axis=0, keepdims=True)             # (1, 1)


# -----------------------------------------------------------------------------
# Wrapper: lane/time padding, weight packing, pallas_call
# -----------------------------------------------------------------------------
def _round_up(n, m=128):
    return ((n + m - 1) // m) * m


def _pad_to(a, shape):
    return jnp.pad(a, [(0, s - d) for d, s in zip(a.shape, shape)])


def _tpu_tuning():
    """Per-generation knobs: scoped VMEM limit and bf16-exp availability."""
    kind = ""
    try:
        kind = jax.devices()[0].device_kind.lower()
    except Exception:
        pass
    if "v7" in kind or "7x" in kind:
        # 64 MiB physical VMEM per TC on v7x: leave headroom for compiler scratch.
        return 40 * 1024 * 1024, True
    if "v6" in kind:
        return 100 * 1024 * 1024, True
    if "v5" in kind:
        # v5e has no bf16 VPU/EUP -> keep exp in f32 there.
        return 100 * 1024 * 1024, False
    return 48 * 1024 * 1024, False


def _pack_params(params, *, half, hidden, n_heads):
    """Zero-pad every channel dim to a multiple of 128 lanes (head_dim padded
    per head), fuse QKV / out-proj / conv3-taps into wide weights, fold the
    1/sqrt(head_dim) attention scale into wq/bq and cast matmul weights to
    bf16.  Done once, outside the kernel."""
    (w_pre, b_pre, wq, bq, wk, bk, wv, bv, wo, bo,
     ln1_g, ln1_b, w_f1, b_f1, w_f2, b_f2, ln2_g, ln2_b,
     w_post, b_post) = params
    hd = hidden // n_heads
    filter_ch = w_f1.shape[2]
    HP, HID, FIL, HDP = (_round_up(half), _round_up(hidden),
                         _round_up(filter_ch), _round_up(hd))
    bf16, f32 = jnp.bfloat16, jnp.float32
    scale = 1.0 / math.sqrt(hd)

    def qkv_w(w):        # (hidden, hidden) -> (HID, n_heads*HDP), head-blocked
        w3 = _pad_to(w.reshape(hidden, n_heads, hd), (HID, n_heads, HDP))
        return w3.reshape(HID, n_heads * HDP).astype(bf16)

    def qkv_b(b):        # (1, hidden) -> (1, n_heads*HDP)
        b3 = _pad_to(b.reshape(1, n_heads, hd), (1, n_heads, HDP))
        return b3.reshape(1, n_heads * HDP).astype(f32)

    # out-proj rows are head-concatenated hidden features
    wo3 = _pad_to(wo.reshape(n_heads, hd, hidden), (n_heads, HDP, HID))
    wo_all = wo3.reshape(n_heads * HDP, HID).astype(bf16)

    # FFN convs: fold the three time taps into one (3*C_in_pad, C_out_pad) weight
    wf1_cat = _pad_to(w_f1, (3, HID, FIL)).reshape(3 * HID, FIL).astype(bf16)
    wf2_cat = _pad_to(w_f2, (3, FIL, HID)).reshape(3 * FIL, HID).astype(bf16)

    # post conv: split the m / logs column halves before padding so the kernel
    # slices them at a lane-aligned 128-multiple boundary.
    wp_m = _pad_to(w_post[:, :half], (hidden, HP))
    wp_s = _pad_to(w_post[:, half:], (hidden, HP))
    w_post_p = _pad_to(jnp.concatenate([wp_m, wp_s], axis=1), (HID, 2 * HP)).astype(bf16)
    bp_m = _pad_to(b_post[:, :half], (1, HP))
    bp_s = _pad_to(b_post[:, half:], (1, HP))
    b_post_p = jnp.concatenate([bp_m, bp_s], axis=1).astype(f32)

    packed = (
        _pad_to(w_pre, (HP, HID)).astype(bf16),
        _pad_to(b_pre, (1, HID)).astype(f32),
        qkv_w(wq * scale), qkv_b(bq * scale),
        qkv_w(wk), qkv_b(bk),
        qkv_w(wv), qkv_b(bv),
        wo_all, _pad_to(bo, (1, HID)).astype(f32),
        _pad_to(ln1_g, (1, HID)).astype(f32), _pad_to(ln1_b, (1, HID)).astype(f32),
        wf1_cat, _pad_to(b_f1, (1, FIL)).astype(f32),
        wf2_cat, _pad_to(b_f2, (1, HID)).astype(f32),
        _pad_to(ln2_g, (1, HID)).astype(f32), _pad_to(ln2_b, (1, HID)).astype(f32),
        w_post_p, b_post_p,
    )
    return packed, (HP, HID, FIL, HDP)


def transformer_flow_block(x, x_mask, params, *, half, hidden, n_heads):
    """x: (B, T, channels) f32; x_mask: (B, T, 1) f32. Returns (y, logdet)."""
    B, T, C = x.shape
    assert C == 2 * half and hidden % n_heads == 0

    packed, (HP, HID, FIL, HDP) = _pack_params(params, half=half, hidden=hidden,
                                               n_heads=n_heads)
    NHD = n_heads * HDP
    vmem_limit, exp_in_bf16 = _tpu_tuning()

    # Pad T to a lane multiple: score tensors, activations and the y1 writeback
    # all become fully dense; padded keys are masked, padded rows contribute 0.
    Tp = _round_up(T, 128)

    x0 = x[..., :half]                              # pure passthrough half
    x1 = x[..., half:]
    x0p = _pad_to(x0, (B, Tp, HP))
    x1p = _pad_to(x1, (B, Tp, HP))
    mask_col = _pad_to(x_mask.astype(jnp.float32), (B, Tp, 1))   # (B, Tp, 1)
    mask_row = jnp.transpose(mask_col, (0, 2, 1))                # (B, 1, Tp)

    kernel = functools.partial(_flow_block_kernel, n_heads=n_heads,
                               hidden=hidden, half_pad=HP, head_dim_pad=HDP,
                               seq_len=Tp, exp_in_bf16=exp_in_bf16)

    def act_spec(shape):   # per-batch block: (1, ...) tile of the activation
        nd = len(shape)
        return pl.BlockSpec((1,) + tuple(shape[1:]),
                            lambda b: (b,) + (0,) * (nd - 1))

    def full_spec(shape):  # weights: whole array, constant across the grid
        nd = len(shape)
        return pl.BlockSpec(tuple(shape), lambda b: (0,) * nd)

    in_specs = ([act_spec(x0p.shape), act_spec(x1p.shape),
                 act_spec(mask_col.shape), act_spec(mask_row.shape)]
                + [full_spec(p.shape) for p in packed])
    out_specs = (act_spec((B, Tp, HP)), act_spec((B, 1, 1)))
    out_shape = (jax.ShapeDtypeStruct((B, Tp, HP), jnp.float32),
                 jax.ShapeDtypeStruct((B, 1, 1), jnp.float32))

    # Advisory cost estimate so XLA schedules around this long custom call.
    flops_per_b = 2 * Tp * (
        HP * HID                        # pre 1x1
        + 3 * HID * NHD                 # fused QKV
        + 2 * n_heads * Tp * HDP        # scores + PV
        + NHD * HID                     # fused out-proj
        + 3 * HID * FIL + 3 * FIL * HID # two fused conv3 layers
        + HID * 2 * HP)                 # post 1x1
    trans_per_b = n_heads * Tp * Tp + Tp * HP + 2 * Tp + n_heads * Tp
    bytes_accessed = int(
        sum(int(a.size) * a.dtype.itemsize for a in (x0p, x1p, mask_col, mask_row))
        + sum(int(p.size) * p.dtype.itemsize for p in packed)
        + B * Tp * HP * 4 + B * 4)
    cost = pl.CostEstimate(flops=int(B * flops_per_b),
                           transcendentals=int(B * trans_per_b),
                           bytes_accessed=bytes_accessed)

    y1p, ld = pl.pallas_call(
        kernel,
        grid=(B,),
        in_specs=in_specs,
        out_specs=out_specs,
        out_shape=out_shape,
        compiler_params=pltpu.CompilerParams(
            # batch elements are independent -> megacore / 2nd-TC sharding
            dimension_semantics=("parallel",),
            vmem_limit_bytes=vmem_limit),
        cost_estimate=cost,
    )(x0p, x1p, mask_col, mask_row, *packed)

    # x0 never goes through the kernel compute path; re-attach it here.
    y = jnp.concatenate([x0, y1p[:, :T, :half]], axis=-1)
    return y, ld[:, 0, 0]


# -----------------------------------------------------------------------------
# Synthetic parameters matching the module's shapes
# -----------------------------------------------------------------------------
def init_params(key, channels, hidden, filter_ch, kernel_size=3):
    assert kernel_size == 3, "conv3 path assumes kernel_size=3"
    half = channels // 2
    ks = jax.random.split(key, 12)

    def nrm(k, shape, scale=0.2):
        return scale * jax.random.normal(k, shape, jnp.float32)

    w_pre = nrm(ks[0], (half, hidden));  b_pre = nrm(ks[1], (1, hidden), 0.05)
    wq = nrm(ks[2], (hidden, hidden));   bq = jnp.zeros((1, hidden), jnp.float32)
    wk = nrm(ks[3], (hidden, hidden));   bk = jnp.zeros((1, hidden), jnp.float32)
    wv = nrm(ks[4], (hidden, hidden));   bv = jnp.zeros((1, hidden), jnp.float32)
    wo = nrm(ks[5], (hidden, hidden));   bo = jnp.zeros((1, hidden), jnp.float32)
    ln1_g = jnp.ones((1, hidden), jnp.float32)
    ln1_b = jnp.zeros((1, hidden), jnp.float32)
    w_f1 = nrm(ks[6], (kernel_size, hidden, filter_ch))
    b_f1 = nrm(ks[7], (1, filter_ch), 0.05)
    w_f2 = nrm(ks[8], (kernel_size, filter_ch, hidden))
    b_f2 = nrm(ks[9], (1, hidden), 0.05)
    ln2_g = jnp.ones((1, hidden), jnp.float32)
    ln2_b = jnp.zeros((1, hidden), jnp.float32)
    # The PyTorch module zero-initialises the post conv; use small non-zero
    # values here so the correctness check exercises the full encoder->post
    # ->coupling path instead of trivially producing y=x, logdet=0.
    w_post = nrm(ks[10], (hidden, 2 * half), 0.05)
    b_post = nrm(ks[11], (1, 2 * half), 0.02)
    return (w_pre, b_pre, wq, bq, wk, bk, wv, bv, wo, bo,
            ln1_g, ln1_b, w_f1, b_f1, w_f2, b_f2, ln2_g, ln2_b,
            w_post, b_post)


if __name__ == "__main__":
    B, T = 2, 16
    channels, hidden, filter_ch, n_heads = 8, 32, 64, 2
    half = channels // 2

    key = jax.random.PRNGKey(0)
    kx, kp = jax.random.split(key)

    x = jax.random.normal(kx, (B, T, channels), jnp.float32)
    lengths = jnp.array([T, T - 4], jnp.int32)
    x_mask = (jnp.arange(T)[None, :] < lengths[:, None]).astype(jnp.float32)[:, :, None]

    params = init_params(kp, channels, hidden, filter_ch)

    y, logdet = transformer_flow_block(x, x_mask, params,
                                       half=half, hidden=hidden, n_heads=n_heads)
    jax.block_until_ready((y, logdet))

    # Pure-JAX f32 reference.  The kernel uses bf16 MXU operands, (on v6e/v7x)
    # bf16 exp, and an approx softmax reciprocal, so tolerances target bf16-
    # level agreement.
    y_ref, logdet_ref = _flow_block_reference(x, x_mask, params,
                                              half=half, hidden=hidden,
                                              n_heads=n_heads)
    assert jnp.allclose(y, y_ref, atol=5e-2, rtol=5e-2), "output mismatch vs reference"
    assert jnp.allclose(logdet, logdet_ref, atol=1e-1, rtol=1e-1), "logdet mismatch"

    print("KERNEL_OK")
</pallas_src>

<mosaic_0001>
module attributes {stable_mosaic.version = 11 : i64} {
  func.func @_flow_block_kernel(%arg0: i32, %arg1: memref<1x128x128xf32, #tpu.memory_space<vmem>>, %arg2: memref<1x128x128xf32, #tpu.memory_space<vmem>>, %arg3: memref<1x128x1xf32, #tpu.memory_space<vmem>>, %arg4: memref<1x1x128xf32, #tpu.memory_space<vmem>>, %arg5: memref<128x128xbf16, #tpu.memory_space<vmem>>, %arg6: memref<1x128xf32, #tpu.memory_space<vmem>>, %arg7: memref<128x256xbf16, #tpu.memory_space<vmem>>, %arg8: memref<1x256xf32, #tpu.memory_space<vmem>>, %arg9: memref<128x256xbf16, #tpu.memory_space<vmem>>, %arg10: memref<1x256xf32, #tpu.memory_space<vmem>>, %arg11: memref<128x256xbf16, #tpu.memory_space<vmem>>, %arg12: memref<1x256xf32, #tpu.memory_space<vmem>>, %arg13: memref<256x128xbf16, #tpu.memory_space<vmem>>, %arg14: memref<1x128xf32, #tpu.memory_space<vmem>>, %arg15: memref<1x128xf32, #tpu.memory_space<vmem>>, %arg16: memref<1x128xf32, #tpu.memory_space<vmem>>, %arg17: memref<384x128xbf16, #tpu.memory_space<vmem>>, %arg18: memref<1x128xf32, #tpu.memory_space<vmem>>, %arg19: memref<384x128xbf16, #tpu.memory_space<vmem>>, %arg20: memref<1x128xf32, #tpu.memory_space<vmem>>, %arg21: memref<1x128xf32, #tpu.memory_space<vmem>>, %arg22: memref<1x128xf32, #tpu.memory_space<vmem>>, %arg23: memref<128x256xbf16, #tpu.memory_space<vmem>>, %arg24: memref<1x256xf32, #tpu.memory_space<vmem>>, %arg25: memref<1x128x128xf32, #tpu.memory_space<vmem>>, %arg26: memref<1x1x1xf32, #tpu.memory_space<vmem>>) attributes {dimension_semantics = [#tpu.dimension_semantics<parallel>], iteration_bounds = array<i64: 2>, scalar_prefetch = 0 : i64, scratch_operands = 0 : i64, tpu.core_type = #tpu.core_type<tc>, window_params = [{transform_indices = @transform_0, window_bounds = array<i64: 1, 128, 128>}, {transform_indices = @transform_1, window_bounds = array<i64: 1, 128, 128>}, {transform_indices = @transform_2, window_bounds = array<i64: 1, 128, 1>}, {transform_indices = @transform_3, window_bounds = array<i64: 1, 1, 128>}, {pipeline_mode = #tpu.pipeline_mode<synchronous>, transform_indices = @transform_4, window_bounds = array<i64: 128, 128>}, {pipeline_mode = #tpu.pipeline_mode<synchronous>, transform_indices = @transform_5, window_bounds = array<i64: 1, 128>}, {pipeline_mode = #tpu.pipeline_mode<synchronous>, transform_indices = @transform_6, window_bounds = array<i64: 128, 256>}, {pipeline_mode = #tpu.pipeline_mode<synchronous>, transform_indices = @transform_7, window_bounds = array<i64: 1, 256>}, {pipeline_mode = #tpu.pipeline_mode<synchronous>, transform_indices = @transform_8, window_bounds = array<i64: 128, 256>}, {pipeline_mode = #tpu.pipeline_mode<synchronous>, transform_indices = @transform_9, window_bounds = array<i64: 1, 256>}, {pipeline_mode = #tpu.pipeline_mode<synchronous>, transform_indices = @transform_10, window_bounds = array<i64: 128, 256>}, {pipeline_mode = #tpu.pipeline_mode<synchronous>, transform_indices = @transform_11, window_bounds = array<i64: 1, 256>}, {pipeline_mode = #tpu.pipeline_mode<synchronous>, transform_indices = @transform_12, window_bounds = array<i64: 256, 128>}, {pipeline_mode = #tpu.pipeline_mode<synchronous>, transform_indices = @transform_13, window_bounds = array<i64: 1, 128>}, {pipeline_mode = #tpu.pipeline_mode<synchronous>, transform_indices = @transform_14, window_bounds = array<i64: 1, 128>}, {pipeline_mode = #tpu.pipeline_mode<synchronous>, transform_indices = @transform_15, window_bounds = array<i64: 1, 128>}, {pipeline_mode = #tpu.pipeline_mode<synchronous>, transform_indices = @transform_16, window_bounds = array<i64: 384, 128>}, {pipeline_mode = #tpu.pipeline_mode<synchronous>, transform_indices = @transform_17, window_bounds = array<i64: 1, 128>}, {pipeline_mode = #tpu.pipeline_mode<synchronous>, transform_indices = @transform_18, window_bounds = array<i64: 384, 128>}, {pipeline_mode = #tpu.pipeline_mode<synchronous>, transform_indices = @transform_19, window_bounds = array<i64: 1, 128>}, {pipeline_mode = #tpu.pipeline_mode<synchronous>, transform_indices = @transform_20, window_bounds = array<i64: 1, 128>}, {pipeline_mode = #tpu.pipeline_mode<synchronous>, transform_indices = @transform_21, window_bounds = array<i64: 1, 128>}, {pipeline_mode = #tpu.pipeline_mode<synchronous>, transform_indices = @transform_22, window_bounds = array<i64: 128, 256>}, {pipeline_mode = #tpu.pipeline_mode<synchronous>, transform_indices = @transform_23, window_bounds = array<i64: 1, 256>}, {transform_indices = @transform_24, window_bounds = array<i64: 1, 128, 128>}, {transform_indices = @transform_25, window_bounds = array<i64: 1, 1, 1>}]} {
    %c0 = arith.constant 0 : index
    %c0_0 = arith.constant 0 : index
    %c0_1 = arith.constant 0 : index
    %0 = vector.load %arg1[%c0, %c0_0, %c0_1] : memref<1x128x128xf32, #tpu.memory_space<vmem>>, vector<1x128x128xf32>
    %1 = vector.shape_cast %0 : vector<1x128x128xf32> to vector<128x128xf32>
    %c0_2 = arith.constant 0 : index
    %c0_3 = arith.constant 0 : index
    %c0_4 = arith.constant 0 : index
    %2 = vector.load %arg2[%c0_2, %c0_3, %c0_4] : memref<1x128x128xf32, #tpu.memory_space<vmem>>, vector<1x128x128xf32>
    %3 = vector.shape_cast %2 : vector<1x128x128xf32> to vector<128x128xf32>
    %c0_5 = arith.constant 0 : index
    %c0_6 = arith.constant 0 : index
    %c0_7 = arith.constant 0 : index
    %4 = vector.load %arg3[%c0_5, %c0_6, %c0_7] : memref<1x128x1xf32, #tpu.memory_space<vmem>>, vector<1x128x1xf32>
    %5 = vector.shape_cast %4 : vector<1x128x1xf32> to vector<128x1xf32>
    %c0_8 = arith.constant 0 : index
    %c0_9 = arith.constant 0 : index
    %c0_10 = arith.constant 0 : index
    %6 = vector.load %arg4[%c0_8, %c0_9, %c0_10] : memref<1x1x128xf32, #tpu.memory_space<vmem>>, vector<1x1x128xf32>
    %7 = vector.shape_cast %6 : vector<1x1x128xf32> to vector<1x128xf32>
    %cst = arith.constant 1.000000e+00 : f32
    %8 = vector.broadcast %cst : f32 to vector<1x128xf32>
    %9 = arith.subf %7, %8 : vector<1x128xf32>
    %cst_11 = arith.constant 1.000000e+04 : f32
    %10 = vector.broadcast %cst_11 : f32 to vector<1x128xf32>
    %11 = arith.mulf %9, %10 : vector<1x128xf32>
    %12 = arith.truncf %1 : vector<128x128xf32> to vector<128x128xbf16>
    %c0_12 = arith.constant 0 : index
    %c0_13 = arith.constant 0 : index
    %13 = vector.load %arg5[%c0_12, %c0_13] : memref<128x128xbf16, #tpu.memory_space<vmem>>, vector<128x128xbf16>
    %cst_14 = arith.constant dense<0.000000e+00> : vector<128x128xf32>
    %14 = tpu.matmul %12, %13, %cst_14 {dimension_numbers = #tpu.dot_dimension_numbers<[1], [0], [0], [1], [0, 0, 1, 1], [], []>} : vector<128x128xbf16>, vector<128x128xbf16>, vector<128x128xf32> -> vector<128x128xf32>
    %c0_15 = arith.constant 0 : index
    %c0_16 = arith.constant 0 : index
    %15 = vector.load %arg6[%c0_15, %c0_16] : memref<1x128xf32, #tpu.memory_space<vmem>>, vector<1x128xf32>
    %16 = vector.broadcast %15 : vector<1x128xf32> to vector<128x128xf32>
    %17 = arith.addf %14, %16 : vector<128x128xf32>
    %18 = vector.broadcast %5 : vector<128x1xf32> to vector<128x128xf32>
    %19 = arith.mulf %17, %18 : vector<128x128xf32>
    %20 = arith.truncf %19 : vector<128x128xf32> to vector<128x128xbf16>
    %c0_17 = arith.constant 0 : index
    %c0_18 = arith.constant 0 : index
    %21 = vector.load %arg7[%c0_17, %c0_18] : memref<128x256xbf16, #tpu.memory_space<vmem>>, vector<128x256xbf16>
    %cst_19 = arith.constant dense<0.000000e+00> : vector<128x256xf32>
    %22 = tpu.matmul %20, %21, %cst_19 {dimension_numbers = #tpu.dot_dimension_numbers<[1], [0], [0], [1], [0, 0, 1, 1], [], []>} : vector<128x128xbf16>, vector<128x256xbf16>, vector<128x256xf32> -> vector<128x256xf32>
    %c0_20 = arith.constant 0 : index
    %c0_21 = arith.constant 0 : index
    %23 = vector.load %arg8[%c0_20, %c0_21] : memref<1x256xf32, #tpu.memory_space<vmem>>, vector<1x256xf32>
    %24 = vector.broadcast %23 : vector<1x256xf32> to vector<128x256xf32>
    %25 = arith.addf %22, %24 : vector<128x256xf32>
    %c0_22 = arith.constant 0 : index
    %c0_23 = arith.constant 0 : index
    %26 = vector.load %arg9[%c0_22, %c0_23] : memref<128x256xbf16, #tpu.memory_space<vmem>>, vector<128x256xbf16>
    %cst_24 = arith.constant dense<0.000000e+00> : vector<128x256xf32>
    %27 = tpu.matmul %20, %26, %cst_24 {dimension_numbers = #tpu.dot_dimension_numbers<[1], [0], [0], [1], [0, 0, 1, 1], [], []>} : vector<128x128xbf16>, vector<128x256xbf16>, vector<128x256xf32> -> vector<128x256xf32>
    %c0_25 = arith.constant 0 : index
    %c0_26 = arith.constant 0 : index
    %28 = vector.load %arg10[%c0_25, %c0_26] : memref<1x256xf32, #tpu.memory_space<vmem>>, vector<1x256xf32>
    %29 = vector.broadcast %28 : vector<1x256xf32> to vector<128x256xf32>
    %30 = arith.addf %27, %29 : vector<128x256xf32>
    %c0_27 = arith.constant 0 : index
    %c0_28 = arith.constant 0 : index
    %31 = vector.load %arg11[%c0_27, %c0_28] : memref<128x256xbf16, #tpu.memory_space<vmem>>, vector<128x256xbf16>
    %cst_29 = arith.constant dense<0.000000e+00> : vector<128x256xf32>
    %32 = tpu.matmul %20, %31, %cst_29 {dimension_numbers = #tpu.dot_dimension_numbers<[1], [0], [0], [1], [0, 0, 1, 1], [], []>} : vector<128x128xbf16>, vector<128x256xbf16>, vector<128x256xf32> -> vector<128x256xf32>
    %c0_30 = arith.constant 0 : index
    %c0_31 = arith.constant 0 : index
    %33 = vector.load %arg12[%c0_30, %c0_31] : memref<1x256xf32, #tpu.memory_space<vmem>>, vector<1x256xf32>
    %34 = vector.broadcast %33 : vector<1x256xf32> to vector<128x256xf32>
    %35 = arith.addf %32, %34 : vector<128x256xf32>
    %36 = arith.truncf %25 : vector<128x256xf32> to vector<128x256xbf16>
    %37 = arith.truncf %30 : vector<128x256xf32> to vector<128x256xbf16>
    %38 = arith.truncf %35 : vector<128x256xf32> to vector<128x256xbf16>
    %39 = vector.extract_strided_slice %36 {offsets = [0, 0], sizes = [128, 128], strides = [1, 1]} : vector<128x256xbf16> to vector<128x128xbf16>
    %40 = vector.extract_strided_slice %37 {offsets = [0, 0], sizes = [128, 128], strides = [1, 1]} : vector<128x256xbf16> to vector<128x128xbf16>
    %41 = vector.extract_strided_slice %38 {offsets = [0, 0], sizes = [128, 128], strides = [1, 1]} : vector<128x256xbf16> to vector<128x128xbf16>
    %cst_32 = arith.constant dense<0.000000e+00> : vector<128x128xf32>
    %42 = tpu.matmul %39, %40, %cst_32 {dimension_numbers = #tpu.dot_dimension_numbers<[1], [1], [0], [0], [0, 0, 1, 0], [], []>} : vector<128x128xbf16>, vector<128x128xbf16>, vector<128x128xf32> -> vector<128x128xf32>
    %43 = vector.broadcast %11 : vector<1x128xf32> to vector<128x128xf32>
    %44 = arith.addf %42, %43 : vector<128x128xf32>
    %cst_33 = arith.constant dense<0xFF800000> : vector<128xf32>
    %45 = vector.multi_reduction <maximumf>, %44, %cst_33 [1] : vector<128x128xf32> to vector<128xf32>
    %46 = vector.shape_cast %45 : vector<128xf32> to vector<128x1xf32>
    %47 = vector.broadcast %46 : vector<128x1xf32> to vector<128x128xf32>
    %48 = arith.subf %44, %47 : vector<128x128xf32>
    %49 = math.exp %48 : vector<128x128xf32>
    %cst_34 = arith.constant dense<0.000000e+00> : vector<128xf32>
    %50 = vector.multi_reduction <add>, %49, %cst_34 [1] : vector<128x128xf32> to vector<128xf32>
    %51 = vector.shape_cast %50 : vector<128xf32> to vector<128x1xf32>
    %52 = arith.truncf %49 : vector<128x128xf32> to vector<128x128xbf16>
    %cst_35 = arith.constant dense<0.000000e+00> : vector<128x128xf32>
    %53 = tpu.matmul %52, %41, %cst_35 {dimension_numbers = #tpu.dot_dimension_numbers<[1], [0], [0], [1], [0, 0, 1, 1], [], []>} : vector<128x128xbf16>, vector<128x128xbf16>, vector<128x128xf32> -> vector<128x128xf32>
    %54 = tpu.reciprocal %51 {approx = true} : vector<128x1xf32> -> vector<128x1xf32>
    %55 = vector.broadcast %54 : vector<128x1xf32> to vector<128x128xf32>
    %56 = arith.mulf %53, %55 : vector<128x128xf32>
    %57 = arith.truncf %56 : vector<128x128xf32> to vector<128x128xbf16>
    %58 = vector.extract_strided_slice %36 {offsets = [0, 128], sizes = [128, 128], strides = [1, 1]} : vector<128x256xbf16> to vector<128x128xbf16>
    %59 = vector.extract_strided_slice %37 {offsets = [0, 128], sizes = [128, 128], strides = [1, 1]} : vector<128x256xbf16> to vector<128x128xbf16>
    %60 = vector.extract_strided_slice %38 {offsets = [0, 128], sizes = [128, 128], strides = [1, 1]} : vector<128x256xbf16> to vector<128x128xbf16>
    %cst_36 = arith.constant dense<0.000000e+00> : vector<128x128xf32>
    %61 = tpu.matmul %58, %59, %cst_36 {dimension_numbers = #tpu.dot_dimension_numbers<[1], [1], [0], [0], [0, 0, 1, 0], [], []>} : vector<128x128xbf16>, vector<128x128xbf16>, vector<128x128xf32> -> vector<128x128xf32>
    %62 = vector.broadcast %11 : vector<1x128xf32> to vector<128x128xf32>
    %63 = arith.addf %61, %62 : vector<128x128xf32>
    %cst_37 = arith.constant dense<0xFF800000> : vector<128xf32>
    %64 = vector.multi_reduction <maximumf>, %63, %cst_37 [1] : vector<128x128xf32> to vector<128xf32>
    %65 = vector.shape_cast %64 : vector<128xf32> to vector<128x1xf32>
    %66 = vector.broadcast %65 : vector<128x1xf32> to vector<128x128xf32>
    %67 = arith.subf %63, %66 : vector<128x128xf32>
    %68 = math.exp %67 : vector<128x128xf32>
    %cst_38 = arith.constant dense<0.000000e+00> : vector<128xf32>
    %69 = vector.multi_reduction <add>, %68, %cst_38 [1] : vector<128x128xf32> to vector<128xf32>
    %70 = vector.shape_cast %69 : vector<128xf32> to vector<128x1xf32>
    %71 = arith.truncf %68 : vector<128x128xf32> to vector<128x128xbf16>
    %cst_39 = arith.constant dense<0.000000e+00> : vector<128x128xf32>
    %72 = tpu.matmul %71, %60, %cst_39 {dimension_numbers = #tpu.dot_dimension_numbers<[1], [0], [0], [1], [0, 0, 1, 1], [], []>} : vector<128x128xbf16>, vector<128x128xbf16>, vector<128x128xf32> -> vector<128x128xf32>
    %73 = tpu.reciprocal %70 {approx = true} : vector<128x1xf32> -> vector<128x1xf32>
    %74 = vector.broadcast %73 : vector<128x1xf32> to vector<128x128xf32>
    %75 = arith.mulf %72, %74 : vector<128x128xf32>
    %76 = arith.truncf %75 : vector<128x128xf32> to vector<128x128xbf16>
    %77 = tpu.concatenate %57, %76 in 1 : vector<128x128xbf16>, vector<128x128xbf16> -> vector<128x256xbf16>
    %c0_40 = arith.constant 0 : index
    %c0_41 = arith.constant 0 : index
    %78 = vector.load %arg13[%c0_40, %c0_41] : memref<256x128xbf16, #tpu.memory_space<vmem>>, vector<256x128xbf16>
    %cst_42 = arith.constant dense<0.000000e+00> : vector<128x128xf32>
    %79 = tpu.matmul %77, %78, %cst_42 {dimension_numbers = #tpu.dot_dimension_numbers<[1], [0], [0], [1], [0, 0, 1, 1], [], []>} : vector<128x256xbf16>, vector<256x128xbf16>, vector<128x128xf32> -> vector<128x128xf32>
    %c0_43 = arith.constant 0 : index
    %c0_44 = arith.constant 0 : index
    %80 = vector.load %arg14[%c0_43, %c0_44] : memref<1x128xf32, #tpu.memory_space<vmem>>, vector<1x128xf32>
    %81 = vector.broadcast %80 : vector<1x128xf32> to vector<128x128xf32>
    %82 = arith.addf %79, %81 : vector<128x128xf32>
    %83 = arith.addf %19, %82 : vector<128x128xf32>
    %c0_45 = arith.constant 0 : index
    %c0_46 = arith.constant 0 : index
    %84 = vector.load %arg15[%c0_45, %c0_46] : memref<1x128xf32, #tpu.memory_space<vmem>>, vector<1x128xf32>
    %c0_47 = arith.constant 0 : index
    %c0_48 = arith.constant 0 : index
    %85 = vector.load %arg16[%c0_47, %c0_48] : memref<1x128xf32, #tpu.memory_space<vmem>>, vector<1x128xf32>
    %cst_49 = arith.constant dense<0.000000e+00> : vector<128xf32>
    %86 = vector.multi_reduction <add>, %83, %cst_49 [1] : vector<128x128xf32> to vector<128xf32>
    %87 = vector.shape_cast %86 : vector<128xf32> to vector<128x1xf32>
    %cst_50 = arith.constant 3.125000e-02 : f32
    %88 = vector.broadcast %cst_50 : f32 to vector<128x1xf32>
    %89 = arith.mulf %87, %88 : vector<128x1xf32>
    %90 = arith.mulf %83, %83 : vector<128x128xf32>
    %cst_51 = arith.constant dense<0.000000e+00> : vector<128xf32>
    %91 = vector.multi_reduction <add>, %90, %cst_51 [1] : vector<128x128xf32> to vector<128xf32>
    %92 = vector.shape_cast %91 : vector<128xf32> to vector<128x1xf32>
    %cst_52 = arith.constant 3.125000e-02 : f32
    %93 = vector.broadcast %cst_52 : f32 to vector<128x1xf32>
    %94 = arith.mulf %92, %93 : vector<128x1xf32>
    %95 = arith.mulf %89, %89 : vector<128x1xf32>
    %96 = arith.subf %94, %95 : vector<128x1xf32>
    %97 = vector.broadcast %89 : vector<128x1xf32> to vector<128x128xf32>
    %98 = arith.subf %83, %97 : vector<128x128xf32>
    %cst_53 = arith.constant 9.99999974E-6 : f32
    %99 = vector.broadcast %cst_53 : f32 to vector<128x1xf32>
    %100 = arith.addf %96, %99 : vector<128x1xf32>
    %101 = math.rsqrt %100 : vector<128x1xf32>
    %102 = vector.broadcast %101 : vector<128x1xf32> to vector<128x128xf32>
    %103 = arith.mulf %98, %102 : vector<128x128xf32>
    %104 = vector.broadcast %84 : vector<1x128xf32> to vector<128x128xf32>
    %105 = arith.mulf %103, %104 : vector<128x128xf32>
    %106 = vector.broadcast %85 : vector<1x128xf32> to vector<128x128xf32>
    %107 = arith.addf %105, %106 : vector<128x128xf32>
    %108 = tpu.iota {dimensions = array<i32: 0>} : vector<128x1xi32>
    %c0_i32 = arith.constant 0 : i32
    %109 = vector.broadcast %c0_i32 : i32 to vector<128x1xi32>
    %110 = arith.cmpi sgt, %108, %109 : vector<128x1xi32>
    %111 = arith.extui %110 : vector<128x1xi1> to vector<128x1xi32>
    %112 = arith.sitofp %111 : vector<128x1xi32> to vector<128x1xf32>
    %c127_i32 = arith.constant 127 : i32
    %113 = vector.broadcast %c127_i32 : i32 to vector<128x1xi32>
    %114 = arith.cmpi slt, %108, %113 : vector<128x1xi32>
    %115 = arith.extui %114 : vector<128x1xi1> to vector<128x1xi32>
    %116 = arith.sitofp %115 : vector<128x1xi32> to vector<128x1xf32>
    %117 = vector.broadcast %5 : vector<128x1xf32> to vector<128x128xf32>
    %118 = arith.mulf %107, %117 : vector<128x128xf32>
    %c1_i32 = arith.constant 1 : i32
    %119 = tpu.dynamic_rotate %118 by %c1_i32 dim 0 : vector<128x128xf32>, i32 -> vector<128x128xf32>
    %120 = vector.broadcast %112 : vector<128x1xf32> to vector<128x128xf32>
    %121 = arith.mulf %119, %120 : vector<128x128xf32>
    %c127_i32_54 = arith.constant 127 : i32
    %122 = tpu.dynamic_rotate %118 by %c127_i32_54 dim 0 : vector<128x128xf32>, i32 -> vector<128x128xf32>
    %123 = vector.broadcast %116 : vector<128x1xf32> to vector<128x128xf32>
    %124 = arith.mulf %122, %123 : vector<128x128xf32>
    %125 = tpu.concatenate %121, %118, %124 in 1 : vector<128x128xf32>, vector<128x128xf32>, vector<128x128xf32> -> vector<128x384xf32>
    %126 = arith.truncf %125 : vector<128x384xf32> to vector<128x384xbf16>
    %c0_55 = arith.constant 0 : index
    %c0_56 = arith.constant 0 : index
    %127 = vector.load %arg17[%c0_55, %c0_56] : memref<384x128xbf16, #tpu.memory_space<vmem>>, vector<384x128xbf16>
    %cst_57 = arith.constant dense<0.000000e+00> : vector<128x128xf32>
    %128 = tpu.matmul %126, %127, %cst_57 {dimension_numbers = #tpu.dot_dimension_numbers<[1], [0], [0], [1], [0, 0, 1, 1], [], []>} : vector<128x384xbf16>, vector<384x128xbf16>, vector<128x128xf32> -> vector<128x128xf32>
    %c0_58 = arith.constant 0 : index
    %c0_59 = arith.constant 0 : index
    %129 = vector.load %arg18[%c0_58, %c0_59] : memref<1x128xf32, #tpu.memory_space<vmem>>, vector<1x128xf32>
    %130 = vector.broadcast %129 : vector<1x128xf32> to vector<128x128xf32>
    %131 = arith.addf %128, %130 : vector<128x128xf32>
    %cst_60 = arith.constant 0.000000e+00 : f32
    %132 = vector.broadcast %cst_60 : f32 to vector<128x128xf32>
    %133 = arith.maximumf %131, %132 : vector<128x128xf32>
    %134 = vector.broadcast %5 : vector<128x1xf32> to vector<128x128xf32>
    %135 = arith.mulf %133, %134 : vector<128x128xf32>
    %c1_i32_61 = arith.constant 1 : i32
    %136 = tpu.dynamic_rotate %135 by %c1_i32_61 dim 0 : vector<128x128xf32>, i32 -> vector<128x128xf32>
    %137 = vector.broadcast %112 : vector<128x1xf32> to vector<128x128xf32>
    %138 = arith.mulf %136, %137 : vector<128x128xf32>
    %c127_i32_62 = arith.constant 127 : i32
    %139 = tpu.dynamic_rotate %135 by %c127_i32_62 dim 0 : vector<128x128xf32>, i32 -> vector<128x128xf32>
    %140 = vector.broadcast %116 : vector<128x1xf32> to vector<128x128xf32>
    %141 = arith.mulf %139, %140 : vector<128x128xf32>
    %142 = tpu.concatenate %138, %135, %141 in 1 : vector<128x128xf32>, vector<128x128xf32>, vector<128x128xf32> -> vector<128x384xf32>
    %143 = arith.truncf %142 : vector<128x384xf32> to vector<128x384xbf16>
    %c0_63 = arith.constant 0 : index
    %c0_64 = arith.constant 0 : index
    %144 = vector.load %arg19[%c0_63, %c0_64] : memref<384x128xbf16, #tpu.memory_space<vmem>>, vector<384x128xbf16>
    %cst_65 = arith.constant dense<0.000000e+00> : vector<128x128xf32>
    %145 = tpu.matmul %143, %144, %cst_65 {dimension_numbers = #tpu.dot_dimension_numbers<[1], [0], [0], [1], [0, 0, 1, 1], [], []>} : vector<128x384xbf16>, vector<384x128xbf16>, vector<128x128xf32> -> vector<128x128xf32>
    %c0_66 = arith.constant 0 : index
    %c0_67 = arith.constant 0 : index
    %146 = vector.load %arg20[%c0_66, %c0_67] : memref<1x128xf32, #tpu.memory_space<vmem>>, vector<1x128xf32>
    %147 = vector.broadcast %146 : vector<1x128xf32> to vector<128x128xf32>
    %148 = arith.addf %145, %147 : vector<128x128xf32>
    %149 = vector.broadcast %5 : vector<128x1xf32> to vector<128x128xf32>
    %150 = arith.mulf %148, %149 : vector<128x128xf32>
    %151 = arith.addf %107, %150 : vector<128x128xf32>
    %c0_68 = arith.constant 0 : index
    %c0_69 = arith.constant 0 : index
    %152 = vector.load %arg21[%c0_68, %c0_69] : memref<1x128xf32, #tpu.memory_space<vmem>>, vector<1x128xf32>
    %c0_70 = arith.constant 0 : index
    %c0_71 = arith.constant 0 : index
    %153 = vector.load %arg22[%c0_70, %c0_71] : memref<1x128xf32, #tpu.memory_space<vmem>>, vector<1x128xf32>
    %cst_72 = arith.constant dense<0.000000e+00> : vector<128xf32>
    %154 = vector.multi_reduction <add>, %151, %cst_72 [1] : vector<128x128xf32> to vector<128xf32>
    %155 = vector.shape_cast %154 : vector<128xf32> to vector<128x1xf32>
    %cst_73 = arith.constant 3.125000e-02 : f32
    %156 = vector.broadcast %cst_73 : f32 to vector<128x1xf32>
    %157 = arith.mulf %155, %156 : vector<128x1xf32>
    %158 = arith.mulf %151, %151 : vector<128x128xf32>
    %cst_74 = arith.constant dense<0.000000e+00> : vector<128xf32>
    %159 = vector.multi_reduction <add>, %158, %cst_74 [1] : vector<128x128xf32> to vector<128xf32>
    %160 = vector.shape_cast %159 : vector<128xf32> to vector<128x1xf32>
    %cst_75 = arith.constant 3.125000e-02 : f32
    %161 = vector.broadcast %cst_75 : f32 to vector<128x1xf32>
    %162 = arith.mulf %160, %161 : vector<128x1xf32>
    %163 = arith.mulf %157, %157 : vector<128x1xf32>
    %164 = arith.subf %162, %163 : vector<128x1xf32>
    %165 = vector.broadcast %157 : vector<128x1xf32> to vector<128x128xf32>
    %166 = arith.subf %151, %165 : vector<128x128xf32>
    %cst_76 = arith.constant 9.99999974E-6 : f32
    %167 = vector.broadcast %cst_76 : f32 to vector<128x1xf32>
    %168 = arith.addf %164, %167 : vector<128x1xf32>
    %169 = math.rsqrt %168 : vector<128x1xf32>
    %170 = vector.broadcast %169 : vector<128x1xf32> to vector<128x128xf32>
    %171 = arith.mulf %166, %170 : vector<128x128xf32>
    %172 = vector.broadcast %152 : vector<1x128xf32> to vector<128x128xf32>
    %173 = arith.mulf %171, %172 : vector<128x128xf32>
    %174 = vector.broadcast %153 : vector<1x128xf32> to vector<128x128xf32>
    %175 = arith.addf %173, %174 : vector<128x128xf32>
    %176 = vector.broadcast %5 : vector<128x1xf32> to vector<128x128xf32>
    %177 = arith.mulf %175, %176 : vector<128x128xf32>
    %178 = arith.addf %177, %19 : vector<128x128xf32>
    %179 = arith.truncf %178 : vector<128x128xf32> to vector<128x128xbf16>
    %c0_77 = arith.constant 0 : index
    %c0_78 = arith.constant 0 : index
    %180 = vector.load %arg23[%c0_77, %c0_78] : memref<128x256xbf16, #tpu.memory_space<vmem>>, vector<128x256xbf16>
    %cst_79 = arith.constant dense<0.000000e+00> : vector<128x256xf32>
    %181 = tpu.matmul %179, %180, %cst_79 {dimension_numbers = #tpu.dot_dimension_numbers<[1], [0], [0], [1], [0, 0, 1, 1], [], []>} : vector<128x128xbf16>, vector<128x256xbf16>, vector<128x256xf32> -> vector<128x256xf32>
    %c0_80 = arith.constant 0 : index
    %c0_81 = arith.constant 0 : index
    %182 = vector.load %arg24[%c0_80, %c0_81] : memref<1x256xf32, #tpu.memory_space<vmem>>, vector<1x256xf32>
    %183 = vector.broadcast %182 : vector<1x256xf32> to vector<128x256xf32>
    %184 = arith.addf %181, %183 : vector<128x256xf32>
    %185 = vector.broadcast %5 : vector<128x1xf32> to vector<128x256xf32>
    %186 = arith.mulf %184, %185 : vector<128x256xf32>
    %187 = vector.extract_strided_slice %186 {offsets = [0, 0], sizes = [128, 128], strides = [1, 1]} : vector<128x256xf32> to vector<128x128xf32>
    %188 = vector.extract_strided_slice %186 {offsets = [0, 128], sizes = [128, 128], strides = [1, 1]} : vector<128x256xf32> to vector<128x128xf32>
    %189 = math.exp %188 : vector<128x128xf32>
    %190 = arith.mulf %3, %189 : vector<128x128xf32>
    %191 = vector.broadcast %5 : vector<128x1xf32> to vector<128x128xf32>
    %192 = arith.mulf %190, %191 : vector<128x128xf32>
    %193 = arith.addf %187, %192 : vector<128x128xf32>
    %c0_82 = arith.constant 0 : index
    %c0_83 = arith.constant 0 : index
    %c0_84 = arith.constant 0 : index
    %194 = vector.load %arg25[%c0_82, %c0_83, %c0_84] : memref<1x128x128xf32, #tpu.memory_space<vmem>>, vector<1x128x128xf32>
    %195 = vector.shape_cast %194 : vector<1x128x128xf32> to vector<128x128xf32>
    %196 = vector.shape_cast %193 : vector<128x128xf32> to vector<1x128x128xf32>
    tpu.vector_store %arg25[%c0_82, %c0_83, %c0_84], %196 {strides = array<i32>} : memref<1x128x128xf32, #tpu.memory_space<vmem>>, vector<1x128x128xf32>,
    %cst_85 = arith.constant dense<0.000000e+00> : vector<128xf32>
    %197 = vector.multi_reduction <add>, %188, %cst_85 [1] : vector<128x128xf32> to vector<128xf32>
    %198 = vector.shape_cast %197 : vector<128xf32> to vector<128x1xf32>
    %cst_86 = arith.constant dense<0.000000e+00> : vector<1xf32>
    %199 = vector.multi_reduction <add>, %198, %cst_86 [0] : vector<128x1xf32> to vector<1xf32>
    %200 = vector.shape_cast %199 : vector<1xf32> to vector<1x1xf32>
    %c0_87 = arith.constant 0 : index
    %c0_88 = arith.constant 0 : index
    %c0_89 = arith.constant 0 : index
    %201 = vector.load %arg26[%c0_87, %c0_88, %c0_89] : memref<1x1x1xf32, #tpu.memory_space<vmem>>, vector<1x1x1xf32>
    %202 = vector.shape_cast %201 : vector<1x1x1xf32> to vector<1x1xf32>
    %203 = vector.shape_cast %200 : vector<1x1xf32> to vector<1x1x1xf32>
    tpu.vector_store %arg26[%c0_87, %c0_88, %c0_89], %203 {strides = array<i32>} : memref<1x1x1xf32, #tpu.memory_space<vmem>>, vector<1x1x1xf32>,
    return
  }
  func.func @transform_0(%arg0: i32) -> (i32, i32, i32) {
    %c0_i32 = arith.constant 0 : i32
    %c0_i32_0 = arith.constant 0 : i32
    %c0_i32_1 = arith.constant 0 : i32
    return %arg0, %c0_i32, %c0_i32_0 : i32, i32, i32
  }
  func.func @transform_1(%arg0: i32) -> (i32, i32, i32) {
    %c0_i32 = arith.constant 0 : i32
    %c0_i32_0 = arith.constant 0 : i32
    %c0_i32_1 = arith.constant 0 : i32
    return %arg0, %c0_i32, %c0_i32_0 : i32, i32, i32
  }
  func.func @transform_2(%arg0: i32) -> (i32, i32, i32) {
    %c0_i32 = arith.constant 0 : i32
    %c0_i32_0 = arith.constant 0 : i32
    %c0_i32_1 = arith.constant 0 : i32
    return %arg0, %c0_i32, %c0_i32_0 : i32, i32, i32
  }
  func.func @transform_3(%arg0: i32) -> (i32, i32, i32) {
    %c0_i32 = arith.constant 0 : i32
    %c0_i32_0 = arith.constant 0 : i32
    %c0_i32_1 = arith.constant 0 : i32
    return %arg0, %c0_i32, %c0_i32_0 : i32, i32, i32
  }
  func.func @transform_4(%arg0: i32) -> (i32, i32) {
    %c0_i32 = arith.constant 0 : i32
    %c0_i32_0 = arith.constant 0 : i32
    %c0_i32_1 = arith.constant 0 : i32
    return %c0_i32, %c0_i32_0 : i32, i32
  }
  func.func @transform_5(%arg0: i32) -> (i32, i32) {
    %c0_i32 = arith.constant 0 : i32
    %c0_i32_0 = arith.constant 0 : i32
    %c0_i32_1 = arith.constant 0 : i32
    return %c0_i32, %c0_i32_0 : i32, i32
  }
  func.func @transform_6(%arg0: i32) -> (i32, i32) {
    %c0_i32 = arith.constant 0 : i32
    %c0_i32_0 = arith.constant 0 : i32
    %c0_i32_1 = arith.constant 0 : i32
    return %c0_i32, %c0_i32_0 : i32, i32
  }
  func.func @transform_7(%arg0: i32) -> (i32, i32) {
    %c0_i32 = arith.constant 0 : i32
    %c0_i32_0 = arith.constant 0 : i32
    %c0_i32_1 = arith.constant 0 : i32
    return %c0_i32, %c0_i32_0 : i32, i32
  }
  func.func @transform_8(%arg0: i32) -> (i32, i32) {
    %c0_i32 = arith.constant 0 : i32
    %c0_i32_0 = arith.constant 0 : i32
    %c0_i32_1 = arith.constant 0 : i32
    return %c0_i32, %c0_i32_0 : i32, i32
  }
  func.func @transform_9(%arg0: i32) -> (i32, i32) {
    %c0_i32 = arith.constant 0 : i32
    %c0_i32_0 = arith.constant 0 : i32
    %c0_i32_1 = arith.constant 0 : i32
    return %c0_i32, %c0_i32_0 : i32, i32
  }
  func.func @transform_10(%arg0: i32) -> (i32, i32) {
    %c0_i32 = arith.constant 0 : i32
    %c0_i32_0 = arith.constant 0 : i32
    %c0_i32_1 = arith.constant 0 : i32
    return %c0_i32, %c0_i32_0 : i32, i32
  }
  func.func @transform_11(%arg0: i32) -> (i32, i32) {
    %c0_i32 = arith.constant 0 : i32
    %c0_i32_0 = arith.constant 0 : i32
    %c0_i32_1 = arith.constant 0 : i32
    return %c0_i32, %c0_i32_0 : i32, i32
  }
  func.func @transform_12(%arg0: i32) -> (i32, i32) {
    %c0_i32 = arith.constant 0 : i32
    %c0_i32_0 = arith.constant 0 : i32
    %c0_i32_1 = arith.constant 0 : i32
    return %c0_i32, %c0_i32_0 : i32, i32
  }
  func.func @transform_13(%arg0: i32) -> (i32, i32) {
    %c0_i32 = arith.constant 0 : i32
    %c0_i32_0 = arith.constant 0 : i32
    %c0_i32_1 = arith.constant 0 : i32
    return %c0_i32, %c0_i32_0 : i32, i32
  }
  func.func @transform_14(%arg0: i32) -> (i32, i32) {
    %c0_i32 = arith.constant 0 : i32
    %c0_i32_0 = arith.constant 0 : i32
    %c0_i32_1 = arith.constant 0 : i32
    return %c0_i32, %c0_i32_0 : i32, i32
  }
  func.func @transform_15(%arg0: i32) -> (i32, i32) {
    %c0_i32 = arith.constant 0 : i32
    %c0_i32_0 = arith.constant 0 : i32
    %c0_i32_1 = arith.constant 0 : i32
    return %c0_i32, %c0_i32_0 : i32, i32
  }
  func.func @transform_16(%arg0: i32) -> (i32, i32) {
    %c0_i32 = arith.constant 0 : i32
    %c0_i32_0 = arith.constant 0 : i32
    %c0_i32_1 = arith.constant 0 : i32
    return %c0_i32, %c0_i32_0 : i32, i32
  }
  func.func @transform_17(%arg0: i32) -> (i32, i32) {
    %c0_i32 = arith.constant 0 : i32
    %c0_i32_0 = arith.constant 0 : i32
    %c0_i32_1 = arith.constant 0 : i32
    return %c0_i32, %c0_i32_0 : i32, i32
  }
  func.func @transform_18(%arg0: i32) -> (i32, i32) {
    %c0_i32 = arith.constant 0 : i32
    %c0_i32_0 = arith.constant 0 : i32
    %c0_i32_1 = arith.constant 0 : i32
    return %c0_i32, %c0_i32_0 : i32, i32
  }
  func.func @transform_19(%arg0: i32) -> (i32, i32) {
    %c0_i32 = arith.constant 0 : i32
    %c0_i32_0 = arith.constant 0 : i32
    %c0_i32_1 = arith.constant 0 : i32
    return %c0_i32, %c0_i32_0 : i32, i32
  }
  func.func @transform_20(%arg0: i32) -> (i32, i32) {
    %c0_i32 = arith.constant 0 : i32
    %c0_i32_0 = arith.constant 0 : i32
    %c0_i32_1 = arith.constant 0 : i32
    return %c0_i32, %c0_i32_0 : i32, i32
  }
  func.func @transform_21(%arg0: i32) -> (i32, i32) {
    %c0_i32 = arith.constant 0 : i32
    %c0_i32_0 = arith.constant 0 : i32
    %c0_i32_1 = arith.constant 0 : i32
    return %c0_i32, %c0_i32_0 : i32, i32
  }
  func.func @transform_22(%arg0: i32) -> (i32, i32) {
    %c0_i32 = arith.constant 0 : i32
    %c0_i32_0 = arith.constant 0 : i32
    %c0_i32_1 = arith.constant 0 : i32
    return %c0_i32, %c0_i32_0 : i32, i32
  }
  func.func @transform_23(%arg0: i32) -> (i32, i32) {
    %c0_i32 = arith.constant 0 : i32
    %c0_i32_0 = arith.constant 0 : i32
    %c0_i32_1 = arith.constant 0 : i32
    return %c0_i32, %c0_i32_0 : i32, i32
  }
  func.func @transform_24(%arg0: i32) -> (i32, i32, i32) {
    %c0_i32 = arith.constant 0 : i32
    %c0_i32_0 = arith.constant 0 : i32
    %c0_i32_1 = arith.constant 0 : i32
    return %arg0, %c0_i32, %c0_i32_0 : i32, i32, i32
  }
  func.func @transform_25(%arg0: i32) -> (i32, i32, i32) {
    %c0_i32 = arith.constant 0 : i32
    %c0_i32_0 = arith.constant 0 : i32
    %c0_i32_1 = arith.constant 0 : i32
    return %arg0, %c0_i32, %c0_i32_0 : i32, i32, i32
  }
}

</mosaic_0001>

<llo_original>
// kernel: tpu_custom_call.1
$region0: #{tpu_custom_call.1}
  #allocation0 [shape = 'u32[]', space=smem, size = 0x4, offset = 0x4, fixed_abs, tag = 'smem constant byte address 0x4 - core index']
  #allocation1 [shape = 'u32[144,128]{1,0:T(1,128)}', space=vmem, size = 0x12000, scoped, tag = 'internal scratch']
  %s0 = inlined_call_operand.vmem [shape: f32[2,128,128], index: 0, kind: input, shape index: {}]
  %s1 = inlined_call_operand.hbm [shape: f32[2,128,128], index: 1, kind: input, shape index: {}]
  %s2 = inlined_call_operand.vmem [shape: f32[2,128,1], index: 2, kind: input, shape index: {}]
  %s3 = inlined_call_operand.vmem [shape: f32[2,1,128], index: 3, kind: input, shape index: {}]
  %s4 = inlined_call_operand.hbm [shape: bf16[128,128], index: 4, kind: input, shape index: {}]
  %s5 = inlined_call_operand.vmem [shape: f32[1,128], index: 5, kind: input, shape index: {}]
  %s6 = inlined_call_operand.hbm [shape: bf16[128,256], index: 6, kind: input, shape index: {}]
  %s7 = inlined_call_operand.vmem [shape: f32[1,256], index: 7, kind: input, shape index: {}]
  %s8 = inlined_call_operand.hbm [shape: bf16[128,256], index: 8, kind: input, shape index: {}]
  %s9 = inlined_call_operand.vmem [shape: f32[1,256], index: 9, kind: input, shape index: {}]
  %s10 = inlined_call_operand.hbm [shape: bf16[128,256], index: 10, kind: input, shape index: {}]
  %s11 = inlined_call_operand.vmem [shape: f32[1,256], index: 11, kind: input, shape index: {}]
  %s12 = inlined_call_operand.hbm [shape: bf16[256,128], index: 12, kind: input, shape index: {}]
  %s13 = inlined_call_operand.vmem [shape: f32[1,128], index: 13, kind: input, shape index: {}]
  %s14 = inlined_call_operand.vmem [shape: f32[1,128], index: 14, kind: input, shape index: {}]
  %s15 = inlined_call_operand.vmem [shape: f32[1,128], index: 15, kind: input, shape index: {}]
  %s16 = inlined_call_operand.hbm [shape: bf16[384,128], index: 16, kind: input, shape index: {}]
  %s17 = inlined_call_operand.vmem [shape: f32[1,128], index: 17, kind: input, shape index: {}]
  %s18 = inlined_call_operand.hbm [shape: bf16[384,128], index: 18, kind: input, shape index: {}]
  %s19 = inlined_call_operand.vmem [shape: f32[1,128], index: 19, kind: input, shape index: {}]
  %s20 = inlined_call_operand.vmem [shape: f32[1,128], index: 20, kind: input, shape index: {}]
  %s21 = inlined_call_operand.vmem [shape: f32[1,128], index: 21, kind: input, shape index: {}]
  %s22 = inlined_call_operand.hbm [shape: bf16[128,256], index: 22, kind: input, shape index: {}]
  %s23 = inlined_call_operand.vmem [shape: f32[1,256], index: 23, kind: input, shape index: {}]
  %s24 = inlined_call_operand.hbm [shape: f32[2,128,128], index: 24, kind: output, shape index: {0}]
  %s25 = inlined_call_operand.vmem [shape: f32[2,1,1], index: 25, kind: output, shape index: {1}]
  %26 = xla_tuple %s24, %s25
  %s27 = sld [smem:[#allocation0]]
  $region173: #{tpu_custom_call.1} parent=0
    _
  %s29 = ssub.s32 1, %s27
  %s30 = scalar_select 0, %s29, %s27
  $region1: #{tpu_custom_call.1} parent=0
    #allocation2 [shape = 'u8[131072]{0}', space=vmem, size = 0x20000, scoped, tag = 'input window, operand 1']
    #allocation3 [shape = 's32[2]{0}', space=sflag, size = 0x8, scoped, tag = 'scoped memory for tpu_custom_call.1']
    #allocation4 [shape = 's32[2]{0}', space=sflag, size = 0x8, scoped, tag = 'scoped memory for tpu_custom_call.1']
    #allocation5 [shape = 'u8[32768]{0}', space=vmem, size = 0x8000, scoped, tag = 'input window, operand 4, single buffered']
    #allocation6 [shape = 's32[1]{0}', space=sflag, size = 0x4, scoped, tag = 'scoped memory for tpu_custom_call.1']
    #allocation7 [shape = 'u8[65536]{0}', space=vmem, size = 0x10000, scoped, tag = 'input window, operand 6, single buffered']
    #allocation8 [shape = 'u8[65536]{0}', space=vmem, size = 0x10000, scoped, tag = 'input window, operand 8, single buffered']
    #allocation9 [shape = 's32[1]{0}', space=sflag, size = 0x4, scoped, tag = 'scoped memory for tpu_custom_call.1']
    #allocation10 [shape = 'u8[65536]{0}', space=vmem, size = 0x10000, scoped, tag = 'input window, operand 10, single buffered']
    #allocation11 [shape = 'u8[65536]{0}', space=vmem, size = 0x10000, scoped, tag = 'input window, operand 12, single buffered']
    #allocation12 [shape = 's32[1]{0}', space=sflag, size = 0x4, scoped, tag = 'scoped memory for tpu_custom_call.1']
    #allocation13 [shape = 'u8[98304]{0}', space=vmem, size = 0x18000, scoped, tag = 'input window, operand 16, single buffered']
    #allocation14 [shape = 'u8[98304]{0}', space=vmem, size = 0x18000, scoped, tag = 'input window, operand 18, single buffered']
    #allocation15 [shape = 's32[1]{0}', space=sflag, size = 0x4, scoped, tag = 'scoped memory for tpu_custom_call.1']
    #allocation16 [shape = 'u8[65536]{0}', space=vmem, size = 0x10000, scoped, tag = 'input window, operand 22, single buffered']
    #allocation17 [shape = 'u8[131072]{0}', space=vmem, size = 0x20000, scoped, tag = 'output window, operand 0']
    %31 = vsyncpa [#allocation3], 0
    %s32 = scalar_lea.sflag [#allocation3], 1
    %33 = vsyncpa %s32, 0
    %34 = vsyncpa [#allocation6], 0
    %35 = vsyncpa [#allocation9], 0
    %36 = vsyncpa [#allocation12], 0
    %37 = vsyncpa [#allocation15], 0
    %38 = vsyncpa [#allocation4], 0
    %s39 = scalar_lea.sflag [#allocation4], 1
    %40 = vsyncpa %s39, 0
    loop: start=0, step=1, limit=4
    $region2: #{tpu_custom_call.1} parent=1 // loop_pre_header
      _
    $region3: #{tpu_custom_call.1} parent=1 // loop_header
      %s42 = sphi 0, %s46
      %p43 = scmp.ge.s32.totalorder %s42, 4
      %s52 = sphi 0, %s54
      %s55 = sphi 0, %s52
      %s56 = sphi 0, %s55
      %s72 = sphi 0, %s56
      %s78 = sphi 0, %s80
      %s81 = sphi 0, %s78
      %s82 = sphi 0, %s81
      %s98 = sphi 0, %s82
      %s104 = sphi 0, %s106
      %s107 = sphi 0, %s104
      %s108 = sphi 0, %s107
      %s124 = sphi 0, %s108
      %s130 = sphi 0, %s132
      %s133 = sphi 0, %s130
      %s134 = sphi 0, %s133
      %s150 = sphi 0, %s134
      %s154 = sphi 0, %s154
      %s156 = sphi 0, %s154
      %s157 = sphi 0, %s156
      %s171 = sphi 0, %s157
      %s175 = sphi 0, %s175
      %s177 = sphi 0, %s175
      %s178 = sphi 0, %s177
      %s192 = sphi 0, %s178
      %s196 = sphi 0, %s196
      %s198 = sphi 0, %s196
      %s199 = sphi 0, %s198
      %s213 = sphi 0, %s199
      %s217 = sphi 0, %s217
      %s219 = sphi 0, %s217
      %s220 = sphi 0, %s219
      %s234 = sphi 0, %s220
      %s238 = sphi 0, %s238
      %s240 = sphi 0, %s238
      %s241 = sphi 0, %s240
      %s255 = sphi 0, %s241
      %s259 = sphi 0, %s259
      %s261 = sphi 0, %s259
      %s262 = sphi 0, %s261
      %s276 = sphi 0, %s262
      %s280 = sphi 0, %s280
      %s282 = sphi 0, %s280
      %s283 = sphi 0, %s282
      %s297 = sphi 0, %s283
      %s301 = sphi 0, %s301
      %s303 = sphi 0, %s301
      %s304 = sphi 0, %s303
      %s318 = sphi 0, %s304
      %s322 = sphi 0, %s322
      %s324 = sphi 0, %s322
      %s325 = sphi 0, %s324
      %s339 = sphi 0, %s325
      %s343 = sphi 0, %s343
      %s345 = sphi 0, %s343
      %s346 = sphi 0, %s345
      %s360 = sphi 0, %s346
      %s364 = sphi 0, %s364
      %s366 = sphi 0, %s364
      %s367 = sphi 0, %s366
      %s381 = sphi 0, %s367
      %s385 = sphi 0, %s385
      %s387 = sphi 0, %s385
      %s388 = sphi 0, %s387
      %s402 = sphi 0, %s388
      %s406 = sphi 0, %s406
      %s408 = sphi 0, %s406
      %s409 = sphi 0, %s408
      %s423 = sphi 0, %s409
      %s427 = sphi 0, %s427
      %s429 = sphi 0, %s427
      %s430 = sphi 0, %s429
      %s444 = sphi 0, %s430
      %s448 = sphi 0, %s448
      %s450 = sphi 0, %s448
      %s451 = sphi 0, %s450
      %s465 = sphi 0, %s451
      %s469 = sphi 0, %s469
      %s471 = sphi 0, %s469
      %s472 = sphi 0, %s471
      %s486 = sphi 0, %s472
      %s490 = sphi 0, %s490
      %s492 = sphi 0, %s490
      %s493 = sphi 0, %s492
      %s507 = sphi 0, %s493
      %s511 = sphi 0, %s511
      %s513 = sphi 0, %s511
      %s514 = sphi 0, %s513
      %s528 = sphi 0, %s514
      %s532 = sphi 0, %s532
      %s534 = sphi 0, %s532
      %s535 = sphi 0, %s534
      %s549 = sphi 0, %s535
      %s553 = sphi 0, %s553
      %s555 = sphi 0, %s553
      %s556 = sphi 0, %s555
      %s570 = sphi 0, %s556
      %s576 = sphi 0, %s578
      %s579 = sphi 0, %s576
      %s580 = sphi 0, %s579
      %s596 = sphi 0, %s580
      %s602 = sphi 0, %s604
      %s605 = sphi 0, %s602
      %s606 = sphi 0, %s605
      %s622 = sphi 0, %s606
    $region4: #{tpu_custom_call.1} parent=1 // loop_header_branch
      %45 = sbr.rel (%p43) target = $region8
    $region5: #{tpu_custom_call.1} parent=1 // loop_body
      %s47 = ssub.s32 %s42, 1
      %s48 = ssub.s32 %s42, 2
      %s49 = sadd.s32 %s42, 1
      %s50 = ssub.s32 %s42, %s49
      %p51 = scmp.eq.s32.totalorder %s50, 0
      %s53 = sadd.s32 %s52, 1
      %s54 = scalar_select %p51, %s52, %s53
      %p57 = pneg %p51
      %p58 = scmp.eq.s32.totalorder %s42, 1
      %p59 = por %p57, %p58
      %p60 = scmp.ne.s32.totalorder %s52, %s55
      %p61 = scmp.eq.s32.totalorder %s42, 0
      %p62 = por %p60, %p61
      %p63 = scmp.ne.s32.totalorder %s52, %s55
      %p64 = scmp.eq.s32.totalorder %s47, 1
      %p65 = por %p63, %p64
      %p66 = scmp.ne.s32.totalorder %s55, %s56
      %p67 = scmp.eq.s32.totalorder %s47, 0
      %p68 = por %p66, %p67
      %p69 = scmp.ne.s32.totalorder %s55, %s56
      %p70 = scmp.eq.s32.totalorder %s48, 1
      %p71 = por %p69, %p70
      %p73 = scmp.ne.s32.totalorder %s56, %s72
      %p74 = scmp.eq.s32.totalorder %s48, 0
      %p75 = por %p73, %p74
      %s76 = ssub.s32 %s42, %s49
      %p77 = scmp.eq.s32.totalorder %s76, 0
      %s79 = sadd.s32 %s78, 1
      %s80 = scalar_select %p77, %s78, %s79
      %p83 = pneg %p77
      %p84 = scmp.eq.s32.totalorder %s42, 1
      %p85 = por %p83, %p84
      %p86 = scmp.ne.s32.totalorder %s78, %s81
      %p87 = scmp.eq.s32.totalorder %s42, 0
      %p88 = por %p86, %p87
      %p89 = scmp.ne.s32.totalorder %s78, %s81
      %p90 = scmp.eq.s32.totalorder %s47, 1
      %p91 = por %p89, %p90
      %p92 = scmp.ne.s32.totalorder %s81, %s82
      %p93 = scmp.eq.s32.totalorder %s47, 0
      %p94 = por %p92, %p93
      %p95 = scmp.ne.s32.totalorder %s81, %s82
      %p96 = scmp.eq.s32.totalorder %s48, 1
      %p97 = por %p95, %p96
      %p99 = scmp.ne.s32.totalorder %s82, %s98
      %p100 = scmp.eq.s32.totalorder %s48, 0
      %p101 = por %p99, %p100
      %s102 = ssub.s32 %s42, %s49
      %p103 = scmp.eq.s32.totalorder %s102, 0
      %s105 = sadd.s32 %s104, 1
      %s106 = scalar_select %p103, %s104, %s105
      %p109 = pneg %p103
      %p110 = scmp.eq.s32.totalorder %s42, 1
      %p111 = por %p109, %p110
      %p112 = scmp.ne.s32.totalorder %s104, %s107
      %p113 = scmp.eq.s32.totalorder %s42, 0
      %p114 = por %p112, %p113
      %p115 = scmp.ne.s32.totalorder %s104, %s107
      %p116 = scmp.eq.s32.totalorder %s47, 1
      %p117 = por %p115, %p116
      %p118 = scmp.ne.s32.totalorder %s107, %s108
      %p119 = scmp.eq.s32.totalorder %s47, 0
      %p120 = por %p118, %p119
      %p121 = scmp.ne.s32.totalorder %s107, %s108
      %p122 = scmp.eq.s32.totalorder %s48, 1
      %p123 = por %p121, %p122
      %p125 = scmp.ne.s32.totalorder %s108, %s124
      %p126 = scmp.eq.s32.totalorder %s48, 0
      %p127 = por %p125, %p126
      %s128 = ssub.s32 %s42, %s49
      %p129 = scmp.eq.s32.totalorder %s128, 0
      %s131 = sadd.s32 %s130, 1
      %s132 = scalar_select %p129, %s130, %s131
      %p135 = pneg %p129
      %p136 = scmp.eq.s32.totalorder %s42, 1
      %p137 = por %p135, %p136
      %p138 = scmp.ne.s32.totalorder %s130, %s133
      %p139 = scmp.eq.s32.totalorder %s42, 0
      %p140 = por %p138, %p139
      %p141 = scmp.ne.s32.totalorder %s130, %s133
      %p142 = scmp.eq.s32.totalorder %s47, 1
      %p143 = por %p141, %p142
      %p144 = scmp.ne.s32.totalorder %s133, %s134
      %p145 = scmp.eq.s32.totalorder %s47, 0
      %p146 = por %p144, %p145
      %p147 = scmp.ne.s32.totalorder %s133, %s134
      %p148 = scmp.eq.s32.totalorder %s48, 1
      %p149 = por %p147, %p148
      %p151 = scmp.ne.s32.totalorder %s134, %s150
      %p152 = scmp.eq.s32.totalorder %s48, 0
      %p153 = por %p151, %p152
      %s155 = sadd.s32 %s154, 1
      %p158 = scmp.eq.s32.totalorder %s42, 1
      %p159 = scmp.ne.s32.totalorder %s154, %s156
      %p160 = scmp.eq.s32.totalorder %s42, 0
      %p161 = por %p159, %p160
      %p162 = scmp.ne.s32.totalorder %s154, %s156
      %p163 = scmp.eq.s32.totalorder %s47, 1
      %p164 = por %p162, %p163
      %p165 = scmp.ne.s32.totalorder %s156, %s157
      %p166 = scmp.eq.s32.totalorder %s47, 0
      %p167 = por %p165, %p166
      %p168 = scmp.ne.s32.totalorder %s156, %s157
      %p169 = scmp.eq.s32.totalorder %s48, 1
      %p170 = por %p168, %p169
      %p172 = scmp.ne.s32.totalorder %s157, %s171
      %p173 = scmp.eq.s32.totalorder %s48, 0
      %p174 = por %p172, %p173
      %s176 = sadd.s32 %s175, 1
      %p179 = scmp.eq.s32.totalorder %s42, 1
      %p180 = scmp.ne.s32.totalorder %s175, %s177
      %p181 = scmp.eq.s32.totalorder %s42, 0
      %p182 = por %p180, %p181
      %p183 = scmp.ne.s32.totalorder %s175, %s177
      %p184 = scmp.eq.s32.totalorder %s47, 1
      %p185 = por %p183, %p184
      %p186 = scmp.ne.s32.totalorder %s177, %s178
      %p187 = scmp.eq.s32.totalorder %s47, 0
      %p188 = por %p186, %p187
      %p189 = scmp.ne.s32.totalorder %s177, %s178
      %p190 = scmp.eq.s32.totalorder %s48, 1
      %p191 = por %p189, %p190
      %p193 = scmp.ne.s32.totalorder %s178, %s192
      %p194 = scmp.eq.s32.totalorder %s48, 0
      %p195 = por %p193, %p194
      %s197 = sadd.s32 %s196, 1
      %p200 = scmp.eq.s32.totalorder %s42, 1
      %p201 = scmp.ne.s32.totalorder %s196, %s198
      %p202 = scmp.eq.s32.totalorder %s42, 0
      %p203 = por %p201, %p202
      %p204 = scmp.ne.s32.totalorder %s196, %s198
      %p205 = scmp.eq.s32.totalorder %s47, 1
      %p206 = por %p204, %p205
      %p207 = scmp.ne.s32.totalorder %s198, %s199
      %p208 = scmp.eq.s32.totalorder %s47, 0
      %p209 = por %p207, %p208
      %p210 = scmp.ne.s32.totalorder %s198, %s199
      %p211 = scmp.eq.s32.totalorder %s48, 1
      %p212 = por %p210, %p211
      %p214 = scmp.ne.s32.totalorder %s199, %s213
      %p215 = scmp.eq.s32.totalorder %s48, 0
      %p216 = por %p214, %p215
      %s218 = sadd.s32 %s217, 1
      %p221 = scmp.eq.s32.totalorder %s42, 1
      %p222 = scmp.ne.s32.totalorder %s217, %s219
      %p223 = scmp.eq.s32.totalorder %s42, 0
      %p224 = por %p222, %p223
      %p225 = scmp.ne.s32.totalorder %s217, %s219
      %p226 = scmp.eq.s32.totalorder %s47, 1
      %p227 = por %p225, %p226
      %p228 = scmp.ne.s32.totalorder %s219, %s220
      %p229 = scmp.eq.s32.totalorder %s47, 0
      %p230 = por %p228, %p229
      %p231 = scmp.ne.s32.totalorder %s219, %s220
      %p232 = scmp.eq.s32.totalorder %s48, 1
      %p233 = por %p231, %p232
      %p235 = scmp.ne.s32.totalorder %s220, %s234
      %p236 = scmp.eq.s32.totalorder %s48, 0
      %p237 = por %p235, %p236
      %s239 = sadd.s32 %s238, 1
      %p242 = scmp.eq.s32.totalorder %s42, 1
      %p243 = scmp.ne.s32.totalorder %s238, %s240
      %p244 = scmp.eq.s32.totalorder %s42, 0
      %p245 = por %p243, %p244
      %p246 = scmp.ne.s32.totalorder %s238, %s240
      %p247 = scmp.eq.s32.totalorder %s47, 1
      %p248 = por %p246, %p247
      %p249 = scmp.ne.s32.totalorder %s240, %s241
      %p250 = scmp.eq.s32.totalorder %s47, 0
      %p251 = por %p249, %p250
      %p252 = scmp.ne.s32.totalorder %s240, %s241
      %p253 = scmp.eq.s32.totalorder %s48, 1
      %p254 = por %p252, %p253
      %p256 = scmp.ne.s32.totalorder %s241, %s255
      %p257 = scmp.eq.s32.totalorder %s48, 0
      %p258 = por %p256, %p257
      %s260 = sadd.s32 %s259, 1
      %p263 = scmp.eq.s32.totalorder %s42, 1
      %p264 = scmp.ne.s32.totalorder %s259, %s261
      %p265 = scmp.eq.s32.totalorder %s42, 0
      %p266 = por %p264, %p265
      %p267 = scmp.ne.s32.totalorder %s259, %s261
      %p268 = scmp.eq.s32.totalorder %s47, 1
      %p269 = por %p267, %p268
      %p270 = scmp.ne.s32.totalorder %s261, %s262
      %p271 = scmp.eq.s32.totalorder %s47, 0
      %p272 = por %p270, %p271
      %p273 = scmp.ne.s32.totalorder %s261, %s262
      %p274 = scmp.eq.s32.totalorder %s48, 1
      %p275 = por %p273, %p274
      %p277 = scmp.ne.s32.totalorder %s262, %s276
      %p278 = scmp.eq.s32.totalorder %s48, 0
      %p279 = por %p277, %p278
      %s281 = sadd.s32 %s280, 1
      %p284 = scmp.eq.s32.totalorder %s42, 1
      %p285 = scmp.ne.s32.totalorder %s280, %s282
      %p286 = scmp.eq.s32.totalorder %s42, 0
      %p287 = por %p285, %p286
      %p288 = scmp.ne.s32.totalorder %s280, %s282
      %p289 = scmp.eq.s32.totalorder %s47, 1
      %p290 = por %p288, %p289
      %p291 = scmp.ne.s32.totalorder %s282, %s283
      %p292 = scmp.eq.s32.totalorder %s47, 0
      %p293 = por %p291, %p292
      %p294 = scmp.ne.s32.totalorder %s282, %s283
      %p295 = scmp.eq.s32.totalorder %s48, 1
      %p296 = por %p294, %p295
      %p298 = scmp.ne.s32.totalorder %s283, %s297
      %p299 = scmp.eq.s32.totalorder %s48, 0
      %p300 = por %p298, %p299
      %s302 = sadd.s32 %s301, 1
      %p305 = scmp.eq.s32.totalorder %s42, 1
      %p306 = scmp.ne.s32.totalorder %s301, %s303
      %p307 = scmp.eq.s32.totalorder %s42, 0
      %p308 = por %p306, %p307
      %p309 = scmp.ne.s32.totalorder %s301, %s303
      %p310 = scmp.eq.s32.totalorder %s47, 1
      %p311 = por %p309, %p310
      %p312 = scmp.ne.s32.totalorder %s303, %s304
      %p313 = scmp.eq.s32.totalorder %s47, 0
      %p314 = por %p312, %p313
      %p315 = scmp.ne.s32.totalorder %s303, %s304
      %p316 = scmp.eq.s32.totalorder %s48, 1
      %p317 = por %p315, %p316
      %p319 = scmp.ne.s32.totalorder %s304, %s318
      %p320 = scmp.eq.s32.totalorder %s48, 0
      %p321 = por %p319, %p320
      %s323 = sadd.s32 %s322, 1
      %p326 = scmp.eq.s32.totalorder %s42, 1
      %p327 = scmp.ne.s32.totalorder %s322, %s324
      %p328 = scmp.eq.s32.totalorder %s42, 0
      %p329 = por %p327, %p328
      %p330 = scmp.ne.s32.totalorder %s322, %s324
      %p331 = scmp.eq.s32.totalorder %s47, 1
      %p332 = por %p330, %p331
      %p333 = scmp.ne.s32.totalorder %s324, %s325
      %p334 = scmp.eq.s32.totalorder %s47, 0
      %p335 = por %p333, %p334
      %p336 = scmp.ne.s32.totalorder %s324, %s325
      %p337 = scmp.eq.s32.totalorder %s48, 1
      %p338 = por %p336, %p337
      %p340 = scmp.ne.s32.totalorder %s325, %s339
      %p341 = scmp.eq.s32.totalorder %s48, 0
      %p342 = por %p340, %p341
      %s344 = sadd.s32 %s343, 1
      %p347 = scmp.eq.s32.totalorder %s42, 1
      %p348 = scmp.ne.s32.totalorder %s343, %s345
      %p349 = scmp.eq.s32.totalorder %s42, 0
      %p350 = por %p348, %p349
      %p351 = scmp.ne.s32.totalorder %s343, %s345
      %p352 = scmp.eq.s32.totalorder %s47, 1
      %p353 = por %p351, %p352
      %p354 = scmp.ne.s32.totalorder %s345, %s346
      %p355 = scmp.eq.s32.totalorder %s47, 0
      %p356 = por %p354, %p355
      %p357 = scmp.ne.s32.totalorder %s345, %s346
      %p358 = scmp.eq.s32.totalorder %s48, 1
      %p359 = por %p357, %p358
      %p361 = scmp.ne.s32.totalorder %s346, %s360
      %p362 = scmp.eq.s32.totalorder %s48, 0
      %p363 = por %p361, %p362
      %s365 = sadd.s32 %s364, 1
      %p368 = scmp.eq.s32.totalorder %s42, 1
      %p369 = scmp.ne.s32.totalorder %s364, %s366
      %p370 = scmp.eq.s32.totalorder %s42, 0
      %p371 = por %p369, %p370
      %p372 = scmp.ne.s32.totalorder %s364, %s366
      %p373 = scmp.eq.s32.totalorder %s47, 1
      %p374 = por %p372, %p373
      %p375 = scmp.ne.s32.totalorder %s366, %s367
      %p376 = scmp.eq.s32.totalorder %s47, 0
      %p377 = por %p375, %p376
      %p378 = scmp.ne.s32.totalorder %s366, %s367
      %p379 = scmp.eq.s32.totalorder %s48, 1
      %p380 = por %p378, %p379
      %p382 = scmp.ne.s32.totalorder %s367, %s381
      %p383 = scmp.eq.s32.totalorder %s48, 0
      %p384 = por %p382, %p383
      %s386 = sadd.s32 %s385, 1
      %p389 = scmp.eq.s32.totalorder %s42, 1
      %p390 = scmp.ne.s32.totalorder %s385, %s387
      %p391 = scmp.eq.s32.totalorder %s42, 0
      %p392 = por %p390, %p391
      %p393 = scmp.ne.s32.totalorder %s385, %s387
      %p394 = scmp.eq.s32.totalorder %s47, 1
      %p395 = por %p393, %p394
      %p396 = scmp.ne.s32.totalorder %s387, %s388
      %p397 = scmp.eq.s32.totalorder %s47, 0
      %p398 = por %p396, %p397
      %p399 = scmp.ne.s32.totalorder %s387, %s388
      %p400 = scmp.eq.s32.totalorder %s48, 1
      %p401 = por %p399, %p400
      %p403 = scmp.ne.s32.totalorder %s388, %s402
      %p404 = scmp.eq.s32.totalorder %s48, 0
      %p405 = por %p403, %p404
      %s407 = sadd.s32 %s406, 1
      %p410 = scmp.eq.s32.totalorder %s42, 1
      %p411 = scmp.ne.s32.totalorder %s406, %s408
      %p412 = scmp.eq.s32.totalorder %s42, 0
      %p413 = por %p411, %p412
      %p414 = scmp.ne.s32.totalorder %s406, %s408
      %p415 = scmp.eq.s32.totalorder %s47, 1
      %p416 = por %p414, %p415
      %p417 = scmp.ne.s32.totalorder %s408, %s409
      %p418 = scmp.eq.s32.totalorder %s47, 0
      %p419 = por %p417, %p418
      %p420 = scmp.ne.s32.totalorder %s408, %s409
      %p421 = scmp.eq.s32.totalorder %s48, 1
      %p422 = por %p420, %p421
      %p424 = scmp.ne.s32.totalorder %s409, %s423
      %p425 = scmp.eq.s32.totalorder %s48, 0
      %p426 = por %p424, %p425
      %s428 = sadd.s32 %s427, 1
      %p431 = scmp.eq.s32.totalorder %s42, 1
      %p432 = scmp.ne.s32.totalorder %s427, %s429
      %p433 = scmp.eq.s32.totalorder %s42, 0
      %p434 = por %p432, %p433
      %p435 = scmp.ne.s32.totalorder %s427, %s429
      %p436 = scmp.eq.s32.totalorder %s47, 1
      %p437 = por %p435, %p436
      %p438 = scmp.ne.s32.totalorder %s429, %s430
      %p439 = scmp.eq.s32.totalorder %s47, 0
      %p440 = por %p438, %p439
      %p441 = scmp.ne.s32.totalorder %s429, %s430
      %p442 = scmp.eq.s32.totalorder %s48, 1
      %p443 = por %p441, %p442
      %p445 = scmp.ne.s32.totalorder %s430, %s444
      %p446 = scmp.eq.s32.totalorder %s48, 0
      %p447 = por %p445, %p446
      %s449 = sadd.s32 %s448, 1
      %p452 = scmp.eq.s32.totalorder %s42, 1
      %p453 = scmp.ne.s32.totalorder %s448, %s450
      %p454 = scmp.eq.s32.totalorder %s42, 0
      %p455 = por %p453, %p454
      %p456 = scmp.ne.s32.totalorder %s448, %s450
      %p457 = scmp.eq.s32.totalorder %s47, 1
      %p458 = por %p456, %p457
      %p459 = scmp.ne.s32.totalorder %s450, %s451
      %p460 = scmp.eq.s32.totalorder %s47, 0
      %p461 = por %p459, %p460
      %p462 = scmp.ne.s32.totalorder %s450, %s451
      %p463 = scmp.eq.s32.totalorder %s48, 1
      %p464 = por %p462, %p463
      %p466 = scmp.ne.s32.totalorder %s451, %s465
      %p467 = scmp.eq.s32.totalorder %s48, 0
      %p468 = por %p466, %p467
      %s470 = sadd.s32 %s469, 1
      %p473 = scmp.eq.s32.totalorder %s42, 1
      %p474 = scmp.ne.s32.totalorder %s469, %s471
      %p475 = scmp.eq.s32.totalorder %s42, 0
      %p476 = por %p474, %p475
      %p477 = scmp.ne.s32.totalorder %s469, %s471
      %p478 = scmp.eq.s32.totalorder %s47, 1
      %p479 = por %p477, %p478
      %p480 = scmp.ne.s32.totalorder %s471, %s472
      %p481 = scmp.eq.s32.totalorder %s47, 0
      %p482 = por %p480, %p481
      %p483 = scmp.ne.s32.totalorder %s471, %s472
      %p484 = scmp.eq.s32.totalorder %s48, 1
      %p485 = por %p483, %p484
      %p487 = scmp.ne.s32.totalorder %s472, %s486
      %p488 = scmp.eq.s32.totalorder %s48, 0
      %p489 = por %p487, %p488
      %s491 = sadd.s32 %s490, 1
      %p494 = scmp.eq.s32.totalorder %s42, 1
      %p495 = scmp.ne.s32.totalorder %s490, %s492
      %p496 = scmp.eq.s32.totalorder %s42, 0
      %p497 = por %p495, %p496
      %p498 = scmp.ne.s32.totalorder %s490, %s492
      %p499 = scmp.eq.s32.totalorder %s47, 1
      %p500 = por %p498, %p499
      %p501 = scmp.ne.s32.totalorder %s492, %s493
      %p502 = scmp.eq.s32.totalorder %s47, 0
      %p503 = por %p501, %p502
      %p504 = scmp.ne.s32.totalorder %s492, %s493
      %p505 = scmp.eq.s32.totalorder %s48, 1
      %p506 = por %p504, %p505
      %p508 = scmp.ne.s32.totalorder %s493, %s507
      %p509 = scmp.eq.s32.totalorder %s48, 0
      %p510 = por %p508, %p509
      %s512 = sadd.s32 %s511, 1
      %p515 = scmp.eq.s32.totalorder %s42, 1
      %p516 = scmp.ne.s32.totalorder %s511, %s513
      %p517 = scmp.eq.s32.totalorder %s42, 0
      %p518 = por %p516, %p517
      %p519 = scmp.ne.s32.totalorder %s511, %s513
      %p520 = scmp.eq.s32.totalorder %s47, 1
      %p521 = por %p519, %p520
      %p522 = scmp.ne.s32.totalorder %s513, %s514
      %p523 = scmp.eq.s32.totalorder %s47, 0
      %p524 = por %p522, %p523
      %p525 = scmp.ne.s32.totalorder %s513, %s514
      %p526 = scmp.eq.s32.totalorder %s48, 1
      %p527 = por %p525, %p526
      %p529 = scmp.ne.s32.totalorder %s514, %s528
      %p530 = scmp.eq.s32.totalorder %s48, 0
      %p531 = por %p529, %p530
      %s533 = sadd.s32 %s532, 1
      %p536 = scmp.eq.s32.totalorder %s42, 1
      %p537 = scmp.ne.s32.totalorder %s532, %s534
      %p538 = scmp.eq.s32.totalorder %s42, 0
      %p539 = por %p537, %p538
      %p540 = scmp.ne.s32.totalorder %s532, %s534
      %p541 = scmp.eq.s32.totalorder %s47, 1
      %p542 = por %p540, %p541
      %p543 = scmp.ne.s32.totalorder %s534, %s535
      %p544 = scmp.eq.s32.totalorder %s47, 0
      %p545 = por %p543, %p544
      %p546 = scmp.ne.s32.totalorder %s534, %s535
      %p547 = scmp.eq.s32.totalorder %s48, 1
      %p548 = por %p546, %p547
      %p550 = scmp.ne.s32.totalorder %s535, %s549
      %p551 = scmp.eq.s32.totalorder %s48, 0
      %p552 = por %p550, %p551
      %s554 = sadd.s32 %s553, 1
      %p557 = scmp.eq.s32.totalorder %s42, 1
      %p558 = scmp.ne.s32.totalorder %s553, %s555
      %p559 = scmp.eq.s32.totalorder %s42, 0
      %p560 = por %p558, %p559
      %p561 = scmp.ne.s32.totalorder %s553, %s555
      %p562 = scmp.eq.s32.totalorder %s47, 1
      %p563 = por %p561, %p562
      %p564 = scmp.ne.s32.totalorder %s555, %s556
      %p565 = scmp.eq.s32.totalorder %s47, 0
      %p566 = por %p564, %p565
      %p567 = scmp.ne.s32.totalorder %s555, %s556
      %p568 = scmp.eq.s32.totalorder %s48, 1
      %p569 = por %p567, %p568
      %p571 = scmp.ne.s32.totalorder %s556, %s570
      %p572 = scmp.eq.s32.totalorder %s48, 0
      %p573 = por %p571, %p572
      %s574 = ssub.s32 %s42, %s49
      %p575 = scmp.eq.s32.totalorder %s574, 0
      %s577 = sadd.s32 %s576, 1
      %s578 = scalar_select %p575, %s576, %s577
      %p581 = pneg %p575
      %p582 = scmp.eq.s32.totalorder %s42, 1
      %p583 = por %p581, %p582
      %p584 = scmp.ne.s32.totalorder %s576, %s579
      %p585 = scmp.eq.s32.totalorder %s42, 0
      %p586 = por %p584, %p585
      %p587 = scmp.ne.s32.totalorder %s576, %s579
      %p588 = scmp.eq.s32.totalorder %s47, 1
      %p589 = por %p587, %p588
      %p590 = scmp.ne.s32.totalorder %s579, %s580
      %p591 = scmp.eq.s32.totalorder %s47, 0
      %p592 = por %p590, %p591
      %p593 = scmp.ne.s32.totalorder %s579, %s580
      %p594 = scmp.eq.s32.totalorder %s48, 1
      %p595 = por %p593, %p594
      %p597 = scmp.ne.s32.totalorder %s580, %s596
      %p598 = scmp.eq.s32.totalorder %s48, 0
      %p599 = por %p597, %p598
      %s600 = ssub.s32 %s42, %s49
      %p601 = scmp.eq.s32.totalorder %s600, 0
      %s603 = sadd.s32 %s602, 1
      %s604 = scalar_select %p601, %s602, %s603
      %p607 = pneg %p601
      %p608 = scmp.eq.s32.totalorder %s42, 1
      %p609 = por %p607, %p608
      %p610 = scmp.ne.s32.totalorder %s602, %s605
      %p611 = scmp.eq.s32.totalorder %s42, 0
      %p612 = por %p610, %p611
      %p613 = scmp.ne.s32.totalorder %s602, %s605
      %p614 = scmp.eq.s32.totalorder %s47, 1
      %p615 = por %p613, %p614
      %p616 = scmp.ne.s32.totalorder %s605, %s606
      %p617 = scmp.eq.s32.totalorder %s47, 0
      %p618 = por %p616, %p617
      %p619 = scmp.ne.s32.totalorder %s605, %s606
      %p620 = scmp.eq.s32.totalorder %s48, 1
      %p621 = por %p619, %p620
      %p623 = scmp.ne.s32.totalorder %s606, %s622
      %p624 = scmp.eq.s32.totalorder %s48, 0
      %p625 = por %p623, %p624
      %p626 = scmp.le.s32.totalorder 1, %s42
      %p627 = scmp.lt.s32.totalorder %s42, 3
      %p628 = pnand %p626, %p627
      %p629 = pneg %p628
      // Predicated region
      $region9: #{tpu_custom_call.1} parent=5 // pred_check
        _
      $region10: #{tpu_custom_call.1} parent=5 // pred_check_branch
        %631 = sbr.rel (%p628) target = $region12
      $region11: #{tpu_custom_call.1} parent=5 // pred_region
        %s632 = ssub.s32 %s42, 1
        // Predicated region
        $region13: #{tpu_custom_call.1} parent=11 // pred_check
          %p633 = pneg %p167
        $region14: #{tpu_custom_call.1} parent=11 // pred_check_branch
          %635 = sbr.rel (%p633) target = $region16
        $region15: #{tpu_custom_call.1} parent=11 // pred_region
          %s637 = ssub.s32 1024, 1024
          %638 = vsyncadd [#allocation6], %s637
          %s639 = sshll.u32 [#allocation5], 4
          %s640 = int_to_ptr.vmem [resolvable:$true] %s639
          %645 = dma.hbm_to_vmem [thread:$0]  %s4, 1024, %s640, [#allocation6], 64, 64, 4
        $region16: #{tpu_custom_call.1} parent=11 // pred_fallthru
          _
        // Predicated region
        $region17: #{tpu_custom_call.1} parent=11 // pred_check
          %p646 = pneg %p188
        $region18: #{tpu_custom_call.1} parent=11 // pred_check_branch
          %648 = sbr.rel (%p646) target = $region20
        $region19: #{tpu_custom_call.1} parent=11 // pred_region
          _
        $region20: #{tpu_custom_call.1} parent=11 // pred_fallthru
          _
        // Predicated region
        $region21: #{tpu_custom_call.1} parent=11 // pred_check
          %p649 = pneg %p209
        $region22: #{tpu_custom_call.1} parent=11 // pred_check_branch
          %651 = sbr.rel (%p649) target = $region24
        $region23: #{tpu_custom_call.1} parent=11 // pred_region
          %s653 = ssub.s32 2048, 2048
          %654 = vsyncadd [#allocation6], %s653
          %s655 = sshll.u32 [#allocation7], 4
          %s656 = int_to_ptr.vmem [resolvable:$true] %s655
          %661 = dma.hbm_to_vmem [thread:$0]  %s6, 2048, %s656, [#allocation6], 128, 128, 8
        $region24: #{tpu_custom_call.1} parent=11 // pred_fallthru
          _
        // Predicated region
        $region25: #{tpu_custom_call.1} parent=11 // pred_check
          %p662 = pneg %p230
        $region26: #{tpu_custom_call.1} parent=11 // pred_check_branch
          %664 = sbr.rel (%p662) target = $region28
        $region27: #{tpu_custom_call.1} parent=11 // pred_region
          _
        $region28: #{tpu_custom_call.1} parent=11 // pred_fallthru
          _
        // Predicated region
        $region29: #{tpu_custom_call.1} parent=11 // pred_check
          %p665 = pneg %p251
        $region30: #{tpu_custom_call.1} parent=11 // pred_check_branch
          %667 = sbr.rel (%p665) target = $region32
        $region31: #{tpu_custom_call.1} parent=11 // pred_region
          %s669 = ssub.s32 2048, 2048
          %670 = vsyncadd [#allocation9], %s669
          %s671 = sshll.u32 [#allocation8], 4
          %s672 = int_to_ptr.vmem [resolvable:$true] %s671
          %677 = dma.hbm_to_vmem [thread:$0]  %s8, 2048, %s672, [#allocation9], 128, 128, 8
        $region32: #{tpu_custom_call.1} parent=11 // pred_fallthru
          _
        // Predicated region
        $region33: #{tpu_custom_call.1} parent=11 // pred_check
          %p678 = pneg %p272
        $region34: #{tpu_custom_call.1} parent=11 // pred_check_branch
          %680 = sbr.rel (%p678) target = $region36
        $region35: #{tpu_custom_call.1} parent=11 // pred_region
          _
        $region36: #{tpu_custom_call.1} parent=11 // pred_fallthru
          _
        // Predicated region
        $region37: #{tpu_custom_call.1} parent=11 // pred_check
          %p681 = pneg %p293
        $region38: #{tpu_custom_call.1} parent=11 // pred_check_branch
          %683 = sbr.rel (%p681) target = $region40
        $region39: #{tpu_custom_call.1} parent=11 // pred_region
          %s685 = ssub.s32 2048, 2048
          %686 = vsyncadd [#allocation9], %s685
          %s687 = sshll.u32 [#allocation10], 4
          %s688 = int_to_ptr.vmem [resolvable:$true] %s687
          %693 = dma.hbm_to_vmem [thread:$0]  %s10, 2048, %s688, [#allocation9], 128, 128, 8
        $region40: #{tpu_custom_call.1} parent=11 // pred_fallthru
          _
        // Predicated region
        $region41: #{tpu_custom_call.1} parent=11 // pred_check
          %p694 = pneg %p314
        $region42: #{tpu_custom_call.1} parent=11 // pred_check_branch
          %696 = sbr.rel (%p694) target = $region44
        $region43: #{tpu_custom_call.1} parent=11 // pred_region
          _
        $region44: #{tpu_custom_call.1} parent=11 // pred_fallthru
          _
        // Predicated region
        $region45: #{tpu_custom_call.1} parent=11 // pred_check
          %p697 = pneg %p335
        $region46: #{tpu_custom_call.1} parent=11 // pred_check_branch
          %699 = sbr.rel (%p697) target = $region48
        $region47: #{tpu_custom_call.1} parent=11 // pred_region
          %s701 = ssub.s32 2048, 2048
          %702 = vsyncadd [#allocation12], %s701
          %s703 = sshll.u32 [#allocation11], 4
          %s704 = int_to_ptr.vmem [resolvable:$true] %s703
          %709 = dma.hbm_to_vmem [thread:$0]  %s12, 2048, %s704, [#allocation12], 64, 64, 4
        $region48: #{tpu_custom_call.1} parent=11 // pred_fallthru
          _
        // Predicated region
        $region49: #{tpu_custom_call.1} parent=11 // pred_check
          %p710 = pneg %p356
        $region50: #{tpu_custom_call.1} parent=11 // pred_check_branch
          %712 = sbr.rel (%p710) target = $region52
        $region51: #{tpu_custom_call.1} parent=11 // pred_region
          _
        $region52: #{tpu_custom_call.1} parent=11 // pred_fallthru
          _
        // Predicated region
        $region53: #{tpu_custom_call.1} parent=11 // pred_check
          %p713 = pneg %p377
        $region54: #{tpu_custom_call.1} parent=11 // pred_check_branch
          %715 = sbr.rel (%p713) target = $region56
        $region55: #{tpu_custom_call.1} parent=11 // pred_region
          _
        $region56: #{tpu_custom_call.1} parent=11 // pred_fallthru
          _
        // Predicated region
        $region57: #{tpu_custom_call.1} parent=11 // pred_check
          %p716 = pneg %p398
        $region58: #{tpu_custom_call.1} parent=11 // pred_check_branch
          %718 = sbr.rel (%p716) target = $region60
        $region59: #{tpu_custom_call.1} parent=11 // pred_region
          _
        $region60: #{tpu_custom_call.1} parent=11 // pred_fallthru
          _
        // Predicated region
        $region61: #{tpu_custom_call.1} parent=11 // pred_check
          %p719 = pneg %p419
        $region62: #{tpu_custom_call.1} parent=11 // pred_check_branch
          %721 = sbr.rel (%p719) target = $region64
        $region63: #{tpu_custom_call.1} parent=11 // pred_region
          %s723 = ssub.s32 3072, 3072
          %724 = vsyncadd [#allocation12], %s723
          %s725 = sshll.u32 [#allocation13], 4
          %s726 = int_to_ptr.vmem [resolvable:$true] %s725
          %731 = dma.hbm_to_vmem [thread:$0]  %s16, 3072, %s726, [#allocation12], 64, 64, 4
        $region64: #{tpu_custom_call.1} parent=11 // pred_fallthru
          _
        // Predicated region
        $region65: #{tpu_custom_call.1} parent=11 // pred_check
          %p732 = pneg %p440
        $region66: #{tpu_custom_call.1} parent=11 // pred_check_branch
          %734 = sbr.rel (%p732) target = $region68
        $region67: #{tpu_custom_call.1} parent=11 // pred_region
          _
        $region68: #{tpu_custom_call.1} parent=11 // pred_fallthru
          _
        // Predicated region
        $region69: #{tpu_custom_call.1} parent=11 // pred_check
          %p735 = pneg %p461
        $region70: #{tpu_custom_call.1} parent=11 // pred_check_branch
          %737 = sbr.rel (%p735) target = $region72
        $region71: #{tpu_custom_call.1} parent=11 // pred_region
          %s739 = ssub.s32 3072, 3072
          %740 = vsyncadd [#allocation15], %s739
          %s741 = sshll.u32 [#allocation14], 4
          %s742 = int_to_ptr.vmem [resolvable:$true] %s741
          %747 = dma.hbm_to_vmem [thread:$0]  %s18, 3072, %s742, [#allocation15], 64, 64, 4
        $region72: #{tpu_custom_call.1} parent=11 // pred_fallthru
          _
        // Predicated region
        $region73: #{tpu_custom_call.1} parent=11 // pred_check
          %p748 = pneg %p482
        $region74: #{tpu_custom_call.1} parent=11 // pred_check_branch
          %750 = sbr.rel (%p748) target = $region76
        $region75: #{tpu_custom_call.1} parent=11 // pred_region
          _
        $region76: #{tpu_custom_call.1} parent=11 // pred_fallthru
          _
        // Predicated region
        $region77: #{tpu_custom_call.1} parent=11 // pred_check
          %p751 = pneg %p503
        $region78: #{tpu_custom_call.1} parent=11 // pred_check_branch
          %753 = sbr.rel (%p751) target = $region80
        $region79: #{tpu_custom_call.1} parent=11 // pred_region
          _
        $region80: #{tpu_custom_call.1} parent=11 // pred_fallthru
          _
        // Predicated region
        $region81: #{tpu_custom_call.1} parent=11 // pred_check
          %p754 = pneg %p524
        $region82: #{tpu_custom_call.1} parent=11 // pred_check_branch
          %756 = sbr.rel (%p754) target = $region84
        $region83: #{tpu_custom_call.1} parent=11 // pred_region
          _
        $region84: #{tpu_custom_call.1} parent=11 // pred_fallthru
          _
        // Predicated region
        $region85: #{tpu_custom_call.1} parent=11 // pred_check
          %p757 = pneg %p545
        $region86: #{tpu_custom_call.1} parent=11 // pred_check_branch
          %759 = sbr.rel (%p757) target = $region88
        $region87: #{tpu_custom_call.1} parent=11 // pred_region
          %s761 = ssub.s32 2048, 2048
          %762 = vsyncadd [#allocation15], %s761
          %s763 = sshll.u32 [#allocation16], 4
          %s764 = int_to_ptr.vmem [resolvable:$true] %s763
          %769 = dma.hbm_to_vmem [thread:$0]  %s22, 2048, %s764, [#allocation15], 128, 128, 8
        $region88: #{tpu_custom_call.1} parent=11 // pred_fallthru
          _
        // Predicated region
        $region89: #{tpu_custom_call.1} parent=11 // pred_check
          %p770 = pneg %p566
        $region90: #{tpu_custom_call.1} parent=11 // pred_check_branch
          %772 = sbr.rel (%p770) target = $region92
        $region91: #{tpu_custom_call.1} parent=11 // pred_region
          _
        $region92: #{tpu_custom_call.1} parent=11 // pred_fallthru
          _
      $region12: #{tpu_custom_call.1} parent=5 // pred_fallthru
        _
      %p773 = scmp.lt.s32.totalorder %s42, 2
      // Predicated region
      $region93: #{tpu_custom_call.1} parent=5 // pred_check
        %p774 = pneg %p773
      $region94: #{tpu_custom_call.1} parent=5 // pred_check_branch
        %776 = sbr.rel (%p774) target = $region96
      $region95: #{tpu_custom_call.1} parent=5 // pred_region
        // Predicated region
        $region97: #{tpu_custom_call.1} parent=95 // pred_check
          %p777 = pneg %p62
        $region98: #{tpu_custom_call.1} parent=95 // pred_check_branch
          %779 = sbr.rel (%p777) target = $region100
        $region99: #{tpu_custom_call.1} parent=95 // pred_region
          %p780 = scmp.lt.s32.totalorder %s42, 1
          %s781 = scalar_select %p780, %s42, 1
          %s782 = smul.addr %s781, 16
          %s783 = smul.addr %s782, 8
          %s784 = scalar_lea.vmem %s0, %s783
        $region100: #{tpu_custom_call.1} parent=95 // pred_fallthru
          _
        // Predicated region
        $region101: #{tpu_custom_call.1} parent=95 // pred_check
          %p785 = pneg %p88
        $region102: #{tpu_custom_call.1} parent=95 // pred_check_branch
          %787 = sbr.rel (%p785) target = $region104
        $region103: #{tpu_custom_call.1} parent=95 // pred_region
          %s788 = sand.u32 %s78, 1
          %s789 = scalar_lea.sflag [#allocation3], %s788
          %s790 = sand.u32 %s78, 1
          %s791 = smul.addr %s790, 128
          %s792 = scalar_lea.vmem [#allocation2], %s791
          %s794 = ssub.s32 2048, 2048
          %795 = vsyncadd %s789, %s794
          %s796 = smul.addr %s42, 16
          %s797 = smul.addr %s796, 128
          %s798 = scalar_lea.hbm %s1, %s797
          %s799 = sshll.u32 %s792, 4
          %s800 = int_to_ptr.vmem [resolvable:$true] %s799
          %805 = dma.hbm_to_vmem [thread:$0]  %s798, 2048, %s800, %s789, 128, 128, 8
        $region104: #{tpu_custom_call.1} parent=95 // pred_fallthru
          _
        // Predicated region
        $region105: #{tpu_custom_call.1} parent=95 // pred_check
          %p806 = pneg %p114
        $region106: #{tpu_custom_call.1} parent=95 // pred_check_branch
          %808 = sbr.rel (%p806) target = $region108
        $region107: #{tpu_custom_call.1} parent=95 // pred_region
          %p809 = scmp.lt.s32.totalorder %s42, 1
          %s810 = scalar_select %p809, %s42, 1
          %s811 = smul.addr %s810, 16
          %s812 = smul.addr %s811, 8
          %s813 = scalar_lea.vmem %s2, %s812
        $region108: #{tpu_custom_call.1} parent=95 // pred_fallthru
          _
        // Predicated region
        $region109: #{tpu_custom_call.1} parent=95 // pred_check
          %p814 = pneg %p140
        $region110: #{tpu_custom_call.1} parent=95 // pred_check_branch
          %816 = sbr.rel (%p814) target = $region112
        $region111: #{tpu_custom_call.1} parent=95 // pred_region
          %p817 = scmp.lt.s32.totalorder %s42, 1
          %s818 = scalar_select %p817, %s42, 1
          %s819 = scalar_lea.vmem %s3, %s818
        $region112: #{tpu_custom_call.1} parent=95 // pred_fallthru
          _
      $region96: #{tpu_custom_call.1} parent=5 // pred_fallthru
        _
      %p820 = scmp.le.s32.totalorder 1, %s42
      %p821 = scmp.lt.s32.totalorder %s42, 3
      %p822 = pnand %p820, %p821
      %p823 = pneg %p822
      // Predicated region
      $region113: #{tpu_custom_call.1} parent=5 // pred_check
        _
      $region114: #{tpu_custom_call.1} parent=5 // pred_check_branch
        %825 = sbr.rel (%p822) target = $region116
      $region115: #{tpu_custom_call.1} parent=5 // pred_region
        %s826 = ssub.s32 %s42, 1
        %s827 = sand.u32 %s81, 1
        %s828 = scalar_lea.sflag [#allocation3], %s827
        %s829 = sand.u32 %s81, 1
        %s830 = smul.addr %s829, 128
        %s831 = scalar_lea.vmem [#allocation2], %s830
        // Predicated region
        $region117: #{tpu_custom_call.1} parent=115 // pred_check
          %p832 = pneg %p94
        $region118: #{tpu_custom_call.1} parent=115 // pred_check_branch
          %834 = sbr.rel (%p832) target = $region120
        $region119: #{tpu_custom_call.1} parent=115 // pred_region
          %835 = dma.done %s828, 2048
        $region120: #{tpu_custom_call.1} parent=115 // pred_fallthru
          _
        // Predicated region
        $region121: #{tpu_custom_call.1} parent=115 // pred_check
          %p836 = pneg %p167
        $region122: #{tpu_custom_call.1} parent=115 // pred_check_branch
          %838 = sbr.rel (%p836) target = $region124
        $region123: #{tpu_custom_call.1} parent=115 // pred_region
          %839 = dma.done [#allocation6], 1024
        $region124: #{tpu_custom_call.1} parent=115 // pred_fallthru
          _
        // Predicated region
        $region125: #{tpu_custom_call.1} parent=115 // pred_check
          %p840 = pneg %p209
        $region126: #{tpu_custom_call.1} parent=115 // pred_check_branch
          %842 = sbr.rel (%p840) target = $region128
        $region127: #{tpu_custom_call.1} parent=115 // pred_region
          %843 = dma.done [#allocation6], 2048
        $region128: #{tpu_custom_call.1} parent=115 // pred_fallthru
          _
        // Predicated region
        $region129: #{tpu_custom_call.1} parent=115 // pred_check
          %p844 = pneg %p251
        $region130: #{tpu_custom_call.1} parent=115 // pred_check_branch
          %846 = sbr.rel (%p844) target = $region132
        $region131: #{tpu_custom_call.1} parent=115 // pred_region
          %847 = dma.done [#allocation9], 2048
        $region132: #{tpu_custom_call.1} parent=115 // pred_fallthru
          _
        // Predicated region
        $region133: #{tpu_custom_call.1} parent=115 // pred_check
          %p848 = pneg %p293
        $region134: #{tpu_custom_call.1} parent=115 // pred_check_branch
          %850 = sbr.rel (%p848) target = $region136
        $region135: #{tpu_custom_call.1} parent=115 // pred_region
          %851 = dma.done [#allocation9], 2048
        $region136: #{tpu_custom_call.1} parent=115 // pred_fallthru
          _
        // Predicated region
        $region137: #{tpu_custom_call.1} parent=115 // pred_check
          %p852 = pneg %p335
        $region138: #{tpu_custom_call.1} parent=115 // pred_check_branch
          %854 = sbr.rel (%p852) target = $region140
        $region139: #{tpu_custom_call.1} parent=115 // pred_region
          %855 = dma.done [#allocation12], 2048
        $region140: #{tpu_custom_call.1} parent=115 // pred_fallthru
          _
        // Predicated region
        $region141: #{tpu_custom_call.1} parent=115 // pred_check
          %p856 = pneg %p419
        $region142: #{tpu_custom_call.1} parent=115 // pred_check_branch
          %858 = sbr.rel (%p856) target = $region144
        $region143: #{tpu_custom_call.1} parent=115 // pred_region
          %859 = dma.done [#allocation12], 3072
        $region144: #{tpu_custom_call.1} parent=115 // pred_fallthru
          _
        // Predicated region
        $region145: #{tpu_custom_call.1} parent=115 // pred_check
          %p860 = pneg %p461
        $region146: #{tpu_custom_call.1} parent=115 // pred_check_branch
          %862 = sbr.rel (%p860) target = $region148
        $region147: #{tpu_custom_call.1} parent=115 // pred_region
          %863 = dma.done [#allocation15], 3072
        $region148: #{tpu_custom_call.1} parent=115 // pred_fallthru
          _
        // Predicated region
        $region149: #{tpu_custom_call.1} parent=115 // pred_check
          %p864 = pneg %p545
        $region150: #{tpu_custom_call.1} parent=115 // pred_check_branch
          %866 = sbr.rel (%p864) target = $region152
        $region151: #{tpu_custom_call.1} parent=115 // pred_region
          %867 = dma.done [#allocation15], 2048
        $region152: #{tpu_custom_call.1} parent=115 // pred_fallthru
          _
        %p868 = scmp.lt.s32.totalorder %s47, 1
        %s869 = scalar_select %p868, %s47, 1
        %s870 = smul.addr %s869, 16
        %s871 = smul.addr %s870, 8
        %s872 = scalar_lea.vmem %s0, %s871
        %p873 = pneg %p68
        %p874 = pneg %p65
        %s875 = sand.u32 %s81, 1
        %s876 = scalar_lea.sflag [#allocation3], %s875
        %s877 = sand.u32 %s81, 1
        %s878 = smul.addr %s877, 128
        %s879 = scalar_lea.vmem [#allocation2], %s878
        %p880 = pneg %p94
        %p881 = pneg %p91
        %p882 = scmp.lt.s32.totalorder %s47, 1
        %s883 = scalar_select %p882, %s47, 1
        %s884 = smul.addr %s883, 16
        %s885 = smul.addr %s884, 8
        %s886 = scalar_lea.vmem %s2, %s885
        %p887 = pneg %p120
        %p888 = pneg %p117
        %p889 = scmp.lt.s32.totalorder %s47, 1
        %s890 = scalar_select %p889, %s47, 1
        %s891 = scalar_lea.vmem %s3, %s890
        %p892 = pneg %p146
        %p893 = pneg %p143
        %p894 = pneg %p167
        %p895 = pneg %p164
        %p896 = pneg %p188
        %p897 = pneg %p185
        %p898 = pneg %p209
        %p899 = pneg %p206
        %p900 = pneg %p230
        %p901 = pneg %p227
        %p902 = pneg %p251
        %p903 = pneg %p248
        %p904 = pneg %p272
        %p905 = pneg %p269
        %p906 = pneg %p293
        %p907 = pneg %p290
        %p908 = pneg %p314
        %p909 = pneg %p311
        %p910 = pneg %p335
        %p911 = pneg %p332
        %p912 = pneg %p356
        %p913 = pneg %p353
        %p914 = pneg %p377
        %p915 = pneg %p374
        %p916 = pneg %p398
        %p917 = pneg %p395
        %p918 = pneg %p419
        %p919 = pneg %p416
        %p920 = pneg %p440
        %p921 = pneg %p437
        %p922 = pneg %p461
        %p923 = pneg %p458
        %p924 = pneg %p482
        %p925 = pneg %p479
        %p926 = pneg %p503
        %p927 = pneg %p500
        %p928 = pneg %p524
        %p929 = pneg %p521
        %p930 = pneg %p545
        %p931 = pneg %p542
        %p932 = pneg %p566
        %p933 = pneg %p563
        %p934 = pneg %p592
        %p935 = pneg %p589
        %s936 = sand.u32 %s579, 1
        %s937 = scalar_lea.sflag [#allocation4], %s936
        %s938 = sand.u32 %s579, 1
        %s939 = smul.addr %s938, 128
        %s940 = scalar_lea.vmem [#allocation17], %s939
        %p941 = pneg %p618
        %p942 = pneg %p615
        %p943 = scmp.lt.s32.totalorder %s47, 1
        %s944 = scalar_select %p943, %s47, 1
        %s945 = scalar_lea.vmem %s25, %s944
        %p946 = scmp.lt.s32.totalorder %s47, 1
        %s947 = scalar_select %p946, %s47, 1
        %s948 = smul.addr %s947, 16
        %s949 = smul.addr %s948, 8
        %s950 = scalar_lea.vmem %s0, %s949
        %p951 = scmp.lt.s32.totalorder %s47, 1
        %s952 = scalar_select %p951, %s47, 1
        %s953 = smul.addr %s952, 16
        %s954 = smul.addr %s953, 8
        %s955 = scalar_lea.vmem %s2, %s954
        %p956 = scmp.lt.s32.totalorder %s47, 1
        %s957 = scalar_select %p956, %s47, 1
        %s958 = scalar_lea.vmem %s3, %s957
        %p959 = scmp.lt.s32.totalorder %s47, 1
        %s960 = scalar_select %p959, %s47, 1
        %s961 = scalar_lea.vmem %s25, %s960
        %v963 = vld [vmem:[%s950] sm:$0xff]
        %v964 = vld [vmem:[%s950 + $0x8] sm:$0xff]
        %v965 = vld [vmem:[%s950 + $0x10] sm:$0xff]
        %v966 = vld [vmem:[%s950 + $0x18] sm:$0xff]
        %v967 = vld [vmem:[%s950 + $0x20] sm:$0xff]
        %v968 = vld [vmem:[%s950 + $0x28] sm:$0xff]
        %v969 = vld [vmem:[%s950 + $0x30] sm:$0xff]
        %v970 = vld [vmem:[%s950 + $0x38] sm:$0xff]
        %v971 = vld [vmem:[%s950 + $0x40] sm:$0xff]
        %v972 = vld [vmem:[%s950 + $0x48] sm:$0xff]
        %v973 = vld [vmem:[%s950 + $0x50] sm:$0xff]
        %v974 = vld [vmem:[%s950 + $0x58] sm:$0xff]
        %v975 = vld [vmem:[%s950 + $0x60] sm:$0xff]
        %v976 = vld [vmem:[%s950 + $0x68] sm:$0xff]
        %v977 = vld [vmem:[%s950 + $0x70] sm:$0xff]
        %v978 = vld [vmem:[%s950 + $0x78] sm:$0xff]
        %v979 = vld [vmem:[%s831] sm:$0xff]
        %v980 = vld [vmem:[%s831 + $0x8] sm:$0xff]
        %v981 = vld [vmem:[%s831 + $0x10] sm:$0xff]
        %v982 = vld [vmem:[%s831 + $0x18] sm:$0xff]
        %v983 = vld [vmem:[%s831 + $0x20] sm:$0xff]
        %v984 = vld [vmem:[%s831 + $0x28] sm:$0xff]
        %v985 = vld [vmem:[%s831 + $0x30] sm:$0xff]
        %v986 = vld [vmem:[%s831 + $0x38] sm:$0xff]
        %v987 = vld [vmem:[%s831 + $0x40] sm:$0xff]
        %v988 = vld [vmem:[%s831 + $0x48] sm:$0xff]
        %v989 = vld [vmem:[%s831 + $0x50] sm:$0xff]
        %v990 = vld [vmem:[%s831 + $0x58] sm:$0xff]
        %v991 = vld [vmem:[%s831 + $0x60] sm:$0xff]
        %v992 = vld [vmem:[%s831 + $0x68] sm:$0xff]
        %v993 = vld [vmem:[%s831 + $0x70] sm:$0xff]
        %v994 = vld [vmem:[%s831 + $0x78] sm:$0xff]
        %v995 = vld [vmem:[%s955] sm:$0xff]
        %v996 = vld [vmem:[%s955 + $0x8] sm:$0xff]
        %v997 = vld [vmem:[%s955 + $0x10] sm:$0xff]
        %v998 = vld [vmem:[%s955 + $0x18] sm:$0xff]
        %v999 = vld [vmem:[%s955 + $0x20] sm:$0xff]
        %v1000 = vld [vmem:[%s955 + $0x28] sm:$0xff]
        %v1001 = vld [vmem:[%s955 + $0x30] sm:$0xff]
        %v1002 = vld [vmem:[%s955 + $0x38] sm:$0xff]
        %v1003 = vld [vmem:[%s955 + $0x40] sm:$0xff]
        %v1004 = vld [vmem:[%s955 + $0x48] sm:$0xff]
        %v1005 = vld [vmem:[%s955 + $0x50] sm:$0xff]
        %v1006 = vld [vmem:[%s955 + $0x58] sm:$0xff]
        %v1007 = vld [vmem:[%s955 + $0x60] sm:$0xff]
        %v1008 = vld [vmem:[%s955 + $0x68] sm:$0xff]
        %v1009 = vld [vmem:[%s955 + $0x70] sm:$0xff]
        %v1010 = vld [vmem:[%s955 + $0x78] sm:$0xff]
        %v1011 = vld [vmem:[%s958] sm:$0x1]
        %v1012 = vsub.f32 %v1011, 1.0
        %v1013 = vmul.f32 %v1012, 10000.0
        %v1014 = vpack.c.bf16 %v964, %v963
        %v1015 = vpack.c.bf16 %v966, %v965
        %v1016 = vpack.c.bf16 %v968, %v967
        %v1017 = vpack.c.bf16 %v970, %v969
        %v1018 = vpack.c.bf16 %v972, %v971
        %v1019 = vpack.c.bf16 %v974, %v973
        %v1020 = vpack.c.bf16 %v976, %v975
        %v1021 = vpack.c.bf16 %v978, %v977
        %v1022 = vld [vmem:[#allocation5] sm:$0xf]
        %v1023 = vld [vmem:[#allocation5 + $0x4] sm:$0xf]
        %v1024 = vld [vmem:[#allocation5 + $0x8] sm:$0xf]
        %v1025 = vld [vmem:[#allocation5 + $0xc] sm:$0xf]
        %v1026 = vld [vmem:[#allocation5 + $0x10] sm:$0xf]
        %v1027 = vld [vmem:[#allocation5 + $0x14] sm:$0xf]
        %v1028 = vld [vmem:[#allocation5 + $0x18] sm:$0xf]
        %v1029 = vld [vmem:[#allocation5 + $0x1c] sm:$0xf]
        %v1030 = vld [vmem:[#allocation5 + $0x20] sm:$0xf]
        %v1031 = vld [vmem:[#allocation5 + $0x24] sm:$0xf]
        %v1032 = vld [vmem:[#allocation5 + $0x28] sm:$0xf]
        %v1033 = vld [vmem:[#allocation5 + $0x2c] sm:$0xf]
        %v1034 = vld [vmem:[#allocation5 + $0x30] sm:$0xf]
        %v1035 = vld [vmem:[#allocation5 + $0x34] sm:$0xf]
        %v1036 = vld [vmem:[#allocation5 + $0x38] sm:$0xf]
        %v1037 = vld [vmem:[#allocation5 + $0x3c] sm:$0xf]
        %v1038 = vld [vmem:[%s5] sm:$0x1]
        %v1040 = vlaneseq
        %v1041 = vshrl.u32 %v1040, 7
        %v1042 = vsub.s32 0, %v1041
        %v1043 = vrot.slane %v1038, %v1042
        %v1061 = vunpack.c.l.b16 %v1022
        %v1062 = vunpack.c.l.b16 %v1023
        %v1063 = vunpack.c.l.b16 %v1024
        %v1064 = vunpack.c.l.b16 %v1025
        %v1065 = vunpack.c.l.b16 %v1026
        %v1066 = vunpack.c.l.b16 %v1027
        %v1067 = vunpack.c.l.b16 %v1028
        %v1068 = vunpack.c.l.b16 %v1029
        %v1069 = vunpack.c.l.b16 %v1030
        %v1070 = vunpack.c.l.b16 %v1031
        %v1071 = vunpack.c.l.b16 %v1032
        %v1072 = vunpack.c.l.b16 %v1033
        %v1073 = vunpack.c.l.b16 %v1034
        %v1074 = vunpack.c.l.b16 %v1035
        %v1075 = vunpack.c.l.b16 %v1036
        %v1076 = vunpack.c.l.b16 %v1037
        %v1077 = vpack.c.b16 %v1062, %v1061
        %v1078 = vpack.c.b16 %v1064, %v1063
        %v1079 = vpack.c.b16 %v1066, %v1065
        %v1080 = vpack.c.b16 %v1068, %v1067
        %v1081 = vpack.c.b16 %v1070, %v1069
        %v1082 = vpack.c.b16 %v1072, %v1071
        %v1083 = vpack.c.b16 %v1074, %v1073
        %v1084 = vpack.c.b16 %v1076, %v1075
        %1093 = vmatprep.subr.bf16.mxu0 0
        %1094 = vmatpush1.bf16.msra.mxu0 %v1077
        %1095 = vmatprep.subr.bf16.mxu0 0
        %1096 = vmatpush1.bf16.msra.mxu0 %v1078
        %1097 = vmatprep.subr.bf16.mxu0 0
        %1098 = vmatpush1.bf16.msra.mxu0 %v1079
        %1099 = vmatprep.subr.bf16.mxu0 0
        %1100 = vmatpush1.bf16.msra.mxu0 %v1080
        %1101 = vmatprep.subr.bf16.mxu0 0
        %1102 = vmatpush1.bf16.msra.mxu0 %v1081
        %1103 = vmatprep.subr.bf16.mxu0 0
        %1104 = vmatpush1.bf16.msra.mxu0 %v1082
        %1105 = vmatprep.subr.bf16.mxu0 0
        %1106 = vmatpush1.bf16.msra.mxu0 %v1083
        %1107 = vmatprep.subr.bf16.mxu0 0
        %1108 = vmatpush1.bf16.msra.mxu0 %v1084
        %1109 = vmatprep.subr.bf16.mxu0 0
        %1110 = vmatpush1.bf16.msra.mxu0 0
        %1111 = vmatprep.subr.bf16.mxu0 0
        %1112 = vmatpush1.bf16.msra.mxu0 0
        %1113 = vmatprep.subr.bf16.mxu0 0
        %1114 = vmatpush1.bf16.msra.mxu0 0
        %1115 = vmatprep.subr.bf16.mxu0 0
        %1116 = vmatpush1.bf16.msra.mxu0 0
        %1117 = vmatprep.subr.bf16.mxu0 0
        %1118 = vmatpush1.bf16.msra.mxu0 0
        %1119 = vmatprep.subr.bf16.mxu0 0
        %1120 = vmatpush1.bf16.msra.mxu0 0
        %1121 = vmatprep.subr.bf16.mxu0 0
        %1122 = vmatpush1.bf16.msra.mxu0 0
        %1123 = vmatprep.subr.bf16.mxu0 0
        %1124 = vmatpush1.bf16.msra.mxu0 0
        %1125 = vmatprep.mubr.bf16.mxu0 0
        %1126 = vmatmul.mubr.bf16.gmra.mrb[0].mxu0 %v1014
        %v1127 = vpop.f32.mrb[0].mxu0
        %v1128 = vadd.f32 %v1043, %v1127
        %v1129 = vpop.f32.mrb[0].mxu0
        %v1130 = vpop.f32.mrb[0].mxu0
        %v1131 = vadd.f32 %v1043, %v1130
        %v1132 = vpop.f32.mrb[0].mxu0
        %1133 = vmatprep.mubr.bf16.mxu0 0
        %1134 = vmatmul.mubr.bf16.gmra.mrb[0].mxu0 %v1015
        %v1135 = vpop.f32.mrb[0].mxu0
        %v1136 = vadd.f32 %v1043, %v1135
        %v1137 = vpop.f32.mrb[0].mxu0
        %v1138 = vpop.f32.mrb[0].mxu0
        %v1139 = vadd.f32 %v1043, %v1138
        %v1140 = vpop.f32.mrb[0].mxu0
        %1141 = vmatprep.mubr.bf16.mxu0 0
        %1142 = vmatmul.mubr.bf16.gmra.mrb[0].mxu0 %v1016
        %v1143 = vpop.f32.mrb[0].mxu0
        %v1144 = vadd.f32 %v1043, %v1143
        %v1145 = vpop.f32.mrb[0].mxu0
        %v1146 = vpop.f32.mrb[0].mxu0
        %v1147 = vadd.f32 %v1043, %v1146
        %v1148 = vpop.f32.mrb[0].mxu0
        %1149 = vmatprep.mubr.bf16.mxu0 0
        %1150 = vmatmul.mubr.bf16.gmra.mrb[0].mxu0 %v1017
        %v1151 = vpop.f32.mrb[0].mxu0
        %v1152 = vadd.f32 %v1043, %v1151
        %v1153 = vpop.f32.mrb[0].mxu0
        %v1154 = vpop.f32.mrb[0].mxu0
        %v1155 = vadd.f32 %v1043, %v1154
        %v1156 = vpop.f32.mrb[0].mxu0
        %1157 = vmatprep.mubr.bf16.mxu0 0
        %1158 = vmatmul.mubr.bf16.gmra.mrb[0].mxu0 %v1018
        %v1159 = vpop.f32.mrb[0].mxu0
        %v1160 = vadd.f32 %v1043, %v1159
        %v1161 = vpop.f32.mrb[0].mxu0
        %v1162 = vpop.f32.mrb[0].mxu0
        %v1163 = vadd.f32 %v1043, %v1162
        %v1164 = vpop.f32.mrb[0].mxu0
        %1165 = vmatprep.mubr.bf16.mxu0 0
        %1166 = vmatmul.mubr.bf16.gmra.mrb[0].mxu0 %v1019
        %v1167 = vpop.f32.mrb[0].mxu0
        %v1168 = vadd.f32 %v1043, %v1167
        %v1169 = vpop.f32.mrb[0].mxu0
        %v1170 = vpop.f32.mrb[0].mxu0
        %v1171 = vadd.f32 %v1043, %v1170
        %v1172 = vpop.f32.mrb[0].mxu0
        %1173 = vmatprep.mubr.bf16.mxu0 0
        %1174 = vmatmul.mubr.bf16.gmra.mrb[0].mxu0 %v1020
        %v1175 = vpop.f32.mrb[0].mxu0
        %v1176 = vadd.f32 %v1043, %v1175
        %v1177 = vpop.f32.mrb[0].mxu0
        %v1178 = vpop.f32.mrb[0].mxu0
        %v1179 = vadd.f32 %v1043, %v1178
        %v1180 = vpop.f32.mrb[0].mxu0
        %1181 = vmatprep.mubr.bf16.mxu0 0
        %1182 = vmatmul.mubr.bf16.gmra.mrb[0].mxu0 %v1021
        %v1183 = vpop.f32.mrb[0].mxu0
        %v1184 = vadd.f32 %v1043, %v1183
        %v1185 = vpop.f32.mrb[0].mxu0
        %v1186 = vpop.f32.mrb[0].mxu0
        %v1187 = vadd.f32 %v1043, %v1186
        %v1188 = vpop.f32.mrb[0].mxu0
        %1189 = vdwg.mxu0
        %1191 = vset.pattern.permute.xlu0 0
        %1192 = vperm.xlu0 %1191, %v995
        %v1193 = vpop.permute.xlu0 %1192
        %1196 = vset.pattern.permute.xlu0 0
        %1197 = vperm.xlu0 %1196, %v996
        %v1198 = vpop.permute.xlu0 %1197
        %1201 = vset.pattern.permute.xlu0 0
        %1202 = vperm.xlu0 %1201, %v997
        %v1203 = vpop.permute.xlu0 %1202
        %1206 = vset.pattern.permute.xlu0 0
        %1207 = vperm.xlu0 %1206, %v998
        %v1208 = vpop.permute.xlu0 %1207
        %1211 = vset.pattern.permute.xlu0 0
        %1212 = vperm.xlu0 %1211, %v999
        %v1213 = vpop.permute.xlu0 %1212
        %1216 = vset.pattern.permute.xlu0 0
        %1217 = vperm.xlu0 %1216, %v1000
        %v1218 = vpop.permute.xlu0 %1217
        %1221 = vset.pattern.permute.xlu0 0
        %1222 = vperm.xlu0 %1221, %v1001
        %v1223 = vpop.permute.xlu0 %1222
        %1226 = vset.pattern.permute.xlu0 0
        %1227 = vperm.xlu0 %1226, %v1002
        %v1228 = vpop.permute.xlu0 %1227
        %1231 = vset.pattern.permute.xlu0 0
        %1232 = vperm.xlu0 %1231, %v1003
        %v1233 = vpop.permute.xlu0 %1232
        %1236 = vset.pattern.permute.xlu0 0
        %1237 = vperm.xlu0 %1236, %v1004
        %v1238 = vpop.permute.xlu0 %1237
        %1241 = vset.pattern.permute.xlu0 0
        %1242 = vperm.xlu0 %1241, %v1005
        %v1243 = vpop.permute.xlu0 %1242
        %1246 = vset.pattern.permute.xlu0 0
        %1247 = vperm.xlu0 %1246, %v1006
        %v1248 = vpop.permute.xlu0 %1247
        %1251 = vset.pattern.permute.xlu0 0
        %1252 = vperm.xlu0 %1251, %v1007
        %v1253 = vpop.permute.xlu0 %1252
        %1256 = vset.pattern.permute.xlu0 0
        %1257 = vperm.xlu0 %1256, %v1008
        %v1258 = vpop.permute.xlu0 %1257
        %1261 = vset.pattern.permute.xlu0 0
        %1262 = vperm.xlu0 %1261, %v1009
        %v1263 = vpop.permute.xlu0 %1262
        %1266 = vset.pattern.permute.xlu0 0
        %1267 = vperm.xlu0 %1266, %v1010
        %v1268 = vpop.permute.xlu0 %1267
        %v1270 = vmul.f32 %v1128, %v1193
        %v1271 = vmul.f32 %v1131, %v1198
        %v1272 = vmul.f32 %v1136, %v1203
        %v1273 = vmul.f32 %v1139, %v1208
        %v1274 = vmul.f32 %v1144, %v1213
        %v1275 = vmul.f32 %v1147, %v1218
        %v1276 = vmul.f32 %v1152, %v1223
        %v1277 = vmul.f32 %v1155, %v1228
        %v1278 = vmul.f32 %v1160, %v1233
        %v1279 = vmul.f32 %v1163, %v1238
        %v1280 = vmul.f32 %v1168, %v1243
        %v1281 = vmul.f32 %v1171, %v1248
        %v1282 = vmul.f32 %v1176, %v1253
        %v1283 = vmul.f32 %v1179, %v1258
        %v1284 = vmul.f32 %v1184, %v1263
        %v1285 = vmul.f32 %v1187, %v1268
        %v1286 = vpack.c.bf16 %v1271, %v1270
        %v1287 = vpack.c.bf16 %v1273, %v1272
        %v1288 = vpack.c.bf16 %v1275, %v1274
        %v1289 = vpack.c.bf16 %v1277, %v1276
        %v1290 = vpack.c.bf16 %v1279, %v1278
        %v1291 = vpack.c.bf16 %v1281, %v1280
        %v1292 = vpack.c.bf16 %v1283, %v1282
        %v1293 = vpack.c.bf16 %v1285, %v1284
        %v1294 = vld [vmem:[#allocation7] sm:$0xff]
        %v1295 = vld [vmem:[#allocation7 + $0x8] sm:$0xff]
        %v1296 = vld [vmem:[#allocation7 + $0x10] sm:$0xff]
        %v1297 = vld [vmem:[#allocation7 + $0x18] sm:$0xff]
        %v1298 = vld [vmem:[#allocation7 + $0x20] sm:$0xff]
        %v1299 = vld [vmem:[#allocation7 + $0x28] sm:$0xff]
        %v1300 = vld [vmem:[#allocation7 + $0x30] sm:$0xff]
        %v1301 = vld [vmem:[#allocation7 + $0x38] sm:$0xff]
        %v1302 = vld [vmem:[#allocation7 + $0x40] sm:$0xff]
        %v1303 = vld [vmem:[#allocation7 + $0x48] sm:$0xff]
        %v1304 = vld [vmem:[#allocation7 + $0x50] sm:$0xff]
        %v1305 = vld [vmem:[#allocation7 + $0x58] sm:$0xff]
        %v1306 = vld [vmem:[#allocation7 + $0x60] sm:$0xff]
        %v1307 = vld [vmem:[#allocation7 + $0x68] sm:$0xff]
        %v1308 = vld [vmem:[#allocation7 + $0x70] sm:$0xff]
        %v1309 = vld [vmem:[#allocation7 + $0x78] sm:$0xff]
        %v1310 = vld [vmem:[%s7] sm:$0x3]
        %v1312 = vlaneseq
        %v1313 = vshrl.u32 %v1312, 7
        %v1314 = vsub.s32 0, %v1313
        %v1315 = vrot.slane %v1310, %v1314
        %v1316 = vlaneseq
        %v1317 = vshrl.u32 %v1316, 7
        %v1318 = vsub.s32 1, %v1317
        %v1319 = vrot.slane %v1310, %v1318
        %v1338 = vunpack.c.l.b16 %v1294
        %v1339 = vunpack.c.h.b16 %v1294
        %v1340 = vunpack.c.l.b16 %v1295
        %v1341 = vunpack.c.h.b16 %v1295
        %v1342 = vunpack.c.l.b16 %v1296
        %v1343 = vunpack.c.h.b16 %v1296
        %v1344 = vunpack.c.l.b16 %v1297
        %v1345 = vunpack.c.h.b16 %v1297
        %v1346 = vunpack.c.l.b16 %v1298
        %v1347 = vunpack.c.h.b16 %v1298
        %v1348 = vunpack.c.l.b16 %v1299
        %v1349 = vunpack.c.h.b16 %v1299
        %v1350 = vunpack.c.l.b16 %v1300
        %v1351 = vunpack.c.h.b16 %v1300
        %v1352 = vunpack.c.l.b16 %v1301
        %v1353 = vunpack.c.h.b16 %v1301
        %v1354 = vunpack.c.l.b16 %v1302
        %v1355 = vunpack.c.h.b16 %v1302
        %v1356 = vunpack.c.l.b16 %v1303
        %v1357 = vunpack.c.h.b16 %v1303
        %v1358 = vunpack.c.l.b16 %v1304
        %v1359 = vunpack.c.h.b16 %v1304
        %v1360 = vunpack.c.l.b16 %v1305
        %v1361 = vunpack.c.h.b16 %v1305
        %v1362 = vunpack.c.l.b16 %v1306
        %v1363 = vunpack.c.h.b16 %v1306
        %v1364 = vunpack.c.l.b16 %v1307
        %v1365 = vunpack.c.h.b16 %v1307
        %v1366 = vunpack.c.l.b16 %v1308
        %v1367 = vunpack.c.h.b16 %v1308
        %v1368 = vunpack.c.l.b16 %v1309
        %v1369 = vunpack.c.h.b16 %v1309
        %v1370 = vpack.c.b16 %v1340, %v1338
        %v1371 = vpack.c.b16 %v1341, %v1339
        %v1372 = vpack.c.b16 %v1344, %v1342
        %v1373 = vpack.c.b16 %v1345, %v1343
        %v1374 = vpack.c.b16 %v1348, %v1346
        %v1375 = vpack.c.b16 %v1349, %v1347
        %v1376 = vpack.c.b16 %v1352, %v1350
        %v1377 = vpack.c.b16 %v1353, %v1351
        %v1378 = vpack.c.b16 %v1356, %v1354
        %v1379 = vpack.c.b16 %v1357, %v1355
        %v1380 = vpack.c.b16 %v1360, %v1358
        %v1381 = vpack.c.b16 %v1361, %v1359
        %v1382 = vpack.c.b16 %v1364, %v1362
        %v1383 = vpack.c.b16 %v1365, %v1363
        %v1384 = vpack.c.b16 %v1368, %v1366
        %v1385 = vpack.c.b16 %v1369, %v1367
        %1402 = vmatprep.subr.bf16.mxu0 %v1371
        %1403 = vmatpush1.bf16.msra.mxu0 %v1370
        %1404 = vmatprep.subr.bf16.mxu0 %v1373
        %1405 = vmatpush1.bf16.msra.mxu0 %v1372
        %1406 = vmatprep.subr.bf16.mxu0 %v1375
        %1407 = vmatpush1.bf16.msra.mxu0 %v1374
        %1408 = vmatprep.subr.bf16.mxu0 %v1377
        %1409 = vmatpush1.bf16.msra.mxu0 %v1376
        %1410 = vmatprep.subr.bf16.mxu0 %v1379
        %1411 = vmatpush1.bf16.msra.mxu0 %v1378
        %1412 = vmatprep.subr.bf16.mxu0 %v1381
        %1413 = vmatpush1.bf16.msra.mxu0 %v1380
        %1414 = vmatprep.subr.bf16.mxu0 %v1383
        %1415 = vmatpush1.bf16.msra.mxu0 %v1382
        %1416 = vmatprep.subr.bf16.mxu0 %v1385
        %1417 = vmatpush1.bf16.msra.mxu0 %v1384
        %1418 = vmatprep.subr.bf16.mxu0 0
        %1419 = vmatpush1.bf16.msra.mxu0 0
        %1420 = vmatprep.subr.bf16.mxu0 0
        %1421 = vmatpush1.bf16.msra.mxu0 0
        %1422 = vmatprep.subr.bf16.mxu0 0
        %1423 = vmatpush1.bf16.msra.mxu0 0
        %1424 = vmatprep.subr.bf16.mxu0 0
        %1425 = vmatpush1.bf16.msra.mxu0 0
        %1426 = vmatprep.subr.bf16.mxu0 0
        %1427 = vmatpush1.bf16.msra.mxu0 0
        %1428 = vmatprep.subr.bf16.mxu0 0
        %1429 = vmatpush1.bf16.msra.mxu0 0
        %1430 = vmatprep.subr.bf16.mxu0 0
        %1431 = vmatpush1.bf16.msra.mxu0 0
        %1432 = vmatprep.subr.bf16.mxu0 0
        %1433 = vmatpush1.bf16.msra.mxu0 0
        %1434 = vmatprep.mubr.bf16.mxu0 0
        %1435 = vmatmul.mubr.bf16.gmra.mrb[0].mxu0 %v1286
        %v1436 = vpop.f32.mrb[0].mxu0
        %v1437 = vadd.f32 %v1315, %v1436
        %v1438 = vpop.f32.mrb[0].mxu0
        %v1439 = vadd.f32 %v1319, %v1438
        %v1440 = vpop.f32.mrb[0].mxu0
        %v1441 = vadd.f32 %v1315, %v1440
        %v1442 = vpop.f32.mrb[0].mxu0
        %v1443 = vadd.f32 %v1319, %v1442
        %1444 = vmatprep.mubr.bf16.mxu0 0
        %1445 = vmatmul.mubr.bf16.gmra.mrb[0].mxu0 %v1287
        %v1446 = vpop.f32.mrb[0].mxu0
        %v1447 = vadd.f32 %v1315, %v1446
        %v1448 = vpop.f32.mrb[0].mxu0
        %v1449 = vadd.f32 %v1319, %v1448
        %v1450 = vpop.f32.mrb[0].mxu0
        %v1451 = vadd.f32 %v1315, %v1450
        %v1452 = vpop.f32.mrb[0].mxu0
        %v1453 = vadd.f32 %v1319, %v1452
        %1454 = vmatprep.mubr.bf16.mxu0 0
        %1455 = vmatmul.mubr.bf16.gmra.mrb[0].mxu0 %v1288
        %v1456 = vpop.f32.mrb[0].mxu0
        %v1457 = vadd.f32 %v1315, %v1456
        %v1458 = vpop.f32.mrb[0].mxu0
        %v1459 = vadd.f32 %v1319, %v1458
        %v1460 = vpop.f32.mrb[0].mxu0
        %v1461 = vadd.f32 %v1315, %v1460
        %v1462 = vpop.f32.mrb[0].mxu0
        %v1463 = vadd.f32 %v1319, %v1462
        %1464 = vmatprep.mubr.bf16.mxu0 0
        %1465 = vmatmul.mubr.bf16.gmra.mrb[0].mxu0 %v1289
        %v1466 = vpop.f32.mrb[0].mxu0
        %v1467 = vadd.f32 %v1315, %v1466
        %v1468 = vpop.f32.mrb[0].mxu0
        %v1469 = vadd.f32 %v1319, %v1468
        %v1470 = vpop.f32.mrb[0].mxu0
        %v1471 = vadd.f32 %v1315, %v1470
        %v1472 = vpop.f32.mrb[0].mxu0
        %v1473 = vadd.f32 %v1319, %v1472
        %1474 = vmatprep.mubr.bf16.mxu0 0
        %1475 = vmatmul.mubr.bf16.gmra.mrb[0].mxu0 %v1290
        %v1476 = vpop.f32.mrb[0].mxu0
        %v1477 = vadd.f32 %v1315, %v1476
        %v1478 = vpop.f32.mrb[0].mxu0
        %v1479 = vadd.f32 %v1319, %v1478
        %v1480 = vpop.f32.mrb[0].mxu0
        %v1481 = vadd.f32 %v1315, %v1480
        %v1482 = vpop.f32.mrb[0].mxu0
        %v1483 = vadd.f32 %v1319, %v1482
        %1484 = vmatprep.mubr.bf16.mxu0 0
        %1485 = vmatmul.mubr.bf16.gmra.mrb[0].mxu0 %v1291
        %v1486 = vpop.f32.mrb[0].mxu0
        %v1487 = vadd.f32 %v1315, %v1486
        %v1488 = vpop.f32.mrb[0].mxu0
        %v1489 = vadd.f32 %v1319, %v1488
        %v1490 = vpop.f32.mrb[0].mxu0
        %v1491 = vadd.f32 %v1315, %v1490
        %v1492 = vpop.f32.mrb[0].mxu0
        %v1493 = vadd.f32 %v1319, %v1492
        %1494 = vmatprep.mubr.bf16.mxu0 0
        %1495 = vmatmul.mubr.bf16.gmra.mrb[0].mxu0 %v1292
        %v1496 = vpop.f32.mrb[0].mxu0
        %v1497 = vadd.f32 %v1315, %v1496
        %v1498 = vpop.f32.mrb[0].mxu0
        %v1499 = vadd.f32 %v1319, %v1498
        %v1500 = vpop.f32.mrb[0].mxu0
        %v1501 = vadd.f32 %v1315, %v1500
        %v1502 = vpop.f32.mrb[0].mxu0
        %v1503 = vadd.f32 %v1319, %v1502
        %1504 = vmatprep.mubr.bf16.mxu0 0
        %1505 = vmatmul.mubr.bf16.gmra.mrb[0].mxu0 %v1293
        %v1506 = vpop.f32.mrb[0].mxu0
        %v1507 = vadd.f32 %v1315, %v1506
        %v1508 = vpop.f32.mrb[0].mxu0
        %v1509 = vadd.f32 %v1319, %v1508
        %v1510 = vpop.f32.mrb[0].mxu0
        %v1511 = vadd.f32 %v1315, %v1510
        %v1512 = vpop.f32.mrb[0].mxu0
        %v1513 = vadd.f32 %v1319, %v1512
        %1514 = vdwg.mxu0
        %v1515 = vld [vmem:[#allocation8] sm:$0xff]
        %v1516 = vld [vmem:[#allocation8 + $0x8] sm:$0xff]
        %v1517 = vld [vmem:[#allocation8 + $0x10] sm:$0xff]
        %v1518 = vld [vmem:[#allocation8 + $0x18] sm:$0xff]
        %v1519 = vld [vmem:[#allocation8 + $0x20] sm:$0xff]
        %v1520 = vld [vmem:[#allocation8 + $0x28] sm:$0xff]
        %v1521 = vld [vmem:[#allocation8 + $0x30] sm:$0xff]
        %v1522 = vld [vmem:[#allocation8 + $0x38] sm:$0xff]
        %v1523 = vld [vmem:[#allocation8 + $0x40] sm:$0xff]
        %v1524 = vld [vmem:[#allocation8 + $0x48] sm:$0xff]
        %v1525 = vld [vmem:[#allocation8 + $0x50] sm:$0xff]
        %v1526 = vld [vmem:[#allocation8 + $0x58] sm:$0xff]
        %v1527 = vld [vmem:[#allocation8 + $0x60] sm:$0xff]
        %v1528 = vld [vmem:[#allocation8 + $0x68] sm:$0xff]
        %v1529 = vld [vmem:[#allocation8 + $0x70] sm:$0xff]
        %v1530 = vld [vmem:[#allocation8 + $0x78] sm:$0xff]
        %v1531 = vld [vmem:[%s9] sm:$0x3]
        %v1533 = vlaneseq
        %v1534 = vshrl.u32 %v1533, 7
        %v1535 = vsub.s32 0, %v1534
        %v1536 = vrot.slane %v1531, %v1535
        %v1537 = vlaneseq
        %v1538 = vshrl.u32 %v1537, 7
        %v1539 = vsub.s32 1, %v1538
        %v1540 = vrot.slane %v1531, %v1539
        %v1559 = vunpack.c.l.b16 %v1515
        %v1560 = vunpack.c.h.b16 %v1515
        %v1561 = vunpack.c.l.b16 %v1516
        %v1562 = vunpack.c.h.b16 %v1516
        %v1563 = vunpack.c.l.b16 %v1517
        %v1564 = vunpack.c.h.b16 %v1517
        %v1565 = vunpack.c.l.b16 %v1518
        %v1566 = vunpack.c.h.b16 %v1518
        %v1567 = vunpack.c.l.b16 %v1519
        %v1568 = vunpack.c.h.b16 %v1519
        %v1569 = vunpack.c.l.b16 %v1520
        %v1570 = vunpack.c.h.b16 %v1520
        %v1571 = vunpack.c.l.b16 %v1521
        %v1572 = vunpack.c.h.b16 %v1521
        %v1573 = vunpack.c.l.b16 %v1522
        %v1574 = vunpack.c.h.b16 %v1522
        %v1575 = vunpack.c.l.b16 %v1523
        %v1576 = vunpack.c.h.b16 %v1523
        %v1577 = vunpack.c.l.b16 %v1524
        %v1578 = vunpack.c.h.b16 %v1524
        %v1579 = vunpack.c.l.b16 %v1525
        %v1580 = vunpack.c.h.b16 %v1525
        %v1581 = vunpack.c.l.b16 %v1526
        %v1582 = vunpack.c.h.b16 %v1526
        %v1583 = vunpack.c.l.b16 %v1527
        %v1584 = vunpack.c.h.b16 %v1527
        %v1585 = vunpack.c.l.b16 %v1528
        %v1586 = vunpack.c.h.b16 %v1528
        %v1587 = vunpack.c.l.b16 %v1529
        %v1588 = vunpack.c.h.b16 %v1529
        %v1589 = vunpack.c.l.b16 %v1530
        %v1590 = vunpack.c.h.b16 %v1530
        %v1591 = vpack.c.b16 %v1561, %v1559
        %v1592 = vpack.c.b16 %v1562, %v1560
        %v1593 = vpack.c.b16 %v1565, %v1563
        %v1594 = vpack.c.b16 %v1566, %v1564
        %v1595 = vpack.c.b16 %v1569, %v1567
        %v1596 = vpack.c.b16 %v1570, %v1568
        %v1597 = vpack.c.b16 %v1573, %v1571
        %v1598 = vpack.c.b16 %v1574, %v1572
        %v1599 = vpack.c.b16 %v1577, %v1575
        %v1600 = vpack.c.b16 %v1578, %v1576
        %v1601 = vpack.c.b16 %v1581, %v1579
        %v1602 = vpack.c.b16 %v1582, %v1580
        %v1603 = vpack.c.b16 %v1585, %v1583
        %v1604 = vpack.c.b16 %v1586, %v1584
        %v1605 = vpack.c.b16 %v1589, %v1587
        %v1606 = vpack.c.b16 %v1590, %v1588
        %1623 = vmatprep.subr.bf16.mxu0 %v1592
        %1624 = vmatpush1.bf16.msra.mxu0 %v1591
        %1625 = vmatprep.subr.bf16.mxu0 %v1594
        %1626 = vmatpush1.bf16.msra.mxu0 %v1593
        %1627 = vmatprep.subr.bf16.mxu0 %v1596
        %1628 = vmatpush1.bf16.msra.mxu0 %v1595
        %1629 = vmatprep.subr.bf16.mxu0 %v1598
        %1630 = vmatpush1.bf16.msra.mxu0 %v1597
        %1631 = vmatprep.subr.bf16.mxu0 %v1600
        %1632 = vmatpush1.bf16.msra.mxu0 %v1599
        %1633 = vmatprep.subr.bf16.mxu0 %v1602
        %1634 = vmatpush1.bf16.msra.mxu0 %v1601
        %1635 = vmatprep.subr.bf16.mxu0 %v1604
        %1636 = vmatpush1.bf16.msra.mxu0 %v1603
        %1637 = vmatprep.subr.bf16.mxu0 %v1606
        %1638 = vmatpush1.bf16.msra.mxu0 %v1605
        %1639 = vmatprep.subr.bf16.mxu0 0
        %1640 = vmatpush1.bf16.msra.mxu0 0
        %1641 = vmatprep.subr.bf16.mxu0 0
        %1642 = vmatpush1.bf16.msra.mxu0 0
        %1643 = vmatprep.subr.bf16.mxu0 0
        %1644 = vmatpush1.bf16.msra.mxu0 0
        %1645 = vmatprep.subr.bf16.mxu0 0
        %1646 = vmatpush1.bf16.msra.mxu0 0
        %1647 = vmatprep.subr.bf16.mxu0 0
        %1648 = vmatpush1.bf16.msra.mxu0 0
        %1649 = vmatprep.subr.bf16.mxu0 0
        %1650 = vmatpush1.bf16.msra.mxu0 0
        %1651 = vmatprep.subr.bf16.mxu0 0
        %1652 = vmatpush1.bf16.msra.mxu0 0
        %1653 = vmatprep.subr.bf16.mxu0 0
        %1654 = vmatpush1.bf16.msra.mxu0 0
        %1655 = vmatprep.mubr.bf16.mxu0 0
        %1656 = vmatmul.mubr.bf16.gmra.mrb[0].mxu0 %v1286
        %v1657 = vpop.f32.mrb[0].mxu0
        %v1658 = vadd.f32 %v1536, %v1657
        %v1659 = vpop.f32.mrb[0].mxu0
        %v1660 = vadd.f32 %v1540, %v1659
        %v1661 = vpop.f32.mrb[0].mxu0
        %v1662 = vadd.f32 %v1536, %v1661
        %v1663 = vpop.f32.mrb[0].mxu0
        %v1664 = vadd.f32 %v1540, %v1663
        %1665 = vmatprep.mubr.bf16.mxu0 0
        %1666 = vmatmul.mubr.bf16.gmra.mrb[0].mxu0 %v1287
        %v1667 = vpop.f32.mrb[0].mxu0
        %v1668 = vadd.f32 %v1536, %v1667
        %v1669 = vpop.f32.mrb[0].mxu0
        %v1670 = vadd.f32 %v1540, %v1669
        %v1671 = vpop.f32.mrb[0].mxu0
        %v1672 = vadd.f32 %v1536, %v1671
        %v1673 = vpop.f32.mrb[0].mxu0
        %v1674 = vadd.f32 %v1540, %v1673
        %1675 = vmatprep.mubr.bf16.mxu0 0
        %1676 = vmatmul.mubr.bf16.gmra.mrb[0].mxu0 %v1288
        %v1677 = vpop.f32.mrb[0].mxu0
        %v1678 = vadd.f32 %v1536, %v1677
        %v1679 = vpop.f32.mrb[0].mxu0
        %v1680 = vadd.f32 %v1540, %v1679
        %v1681 = vpop.f32.mrb[0].mxu0
        %v1682 = vadd.f32 %v1536, %v1681
        %v1683 = vpop.f32.mrb[0].mxu0
        %v1684 = vadd.f32 %v1540, %v1683
        %1685 = vmatprep.mubr.bf16.mxu0 0
        %1686 = vmatmul.mubr.bf16.gmra.mrb[0].mxu0 %v1289
        %v1687 = vpop.f32.mrb[0].mxu0
        %v1688 = vadd.f32 %v1536, %v1687
        %v1689 = vpop.f32.mrb[0].mxu0
        %v1690 = vadd.f32 %v1540, %v1689
        %v1691 = vpop.f32.mrb[0].mxu0
        %v1692 = vadd.f32 %v1536, %v1691
        %v1693 = vpop.f32.mrb[0].mxu0
        %v1694 = vadd.f32 %v1540, %v1693
        %1695 = vmatprep.mubr.bf16.mxu0 0
        %1696 = vmatmul.mubr.bf16.gmra.mrb[0].mxu0 %v1290
        %v1697 = vpop.f32.mrb[0].mxu0
        %v1698 = vadd.f32 %v1536, %v1697
        %v1699 = vpop.f32.mrb[0].mxu0
        %v1700 = vadd.f32 %v1540, %v1699
        %v1701 = vpop.f32.mrb[0].mxu0
        %v1702 = vadd.f32 %v1536, %v1701
        %v1703 = vpop.f32.mrb[0].mxu0
        %v1704 = vadd.f32 %v1540, %v1703
        %1705 = vmatprep.mubr.bf16.mxu0 0
        %1706 = vmatmul.mubr.bf16.gmra.mrb[0].mxu0 %v1291
        %v1707 = vpop.f32.mrb[0].mxu0
        %v1708 = vadd.f32 %v1536, %v1707
        %v1709 = vpop.f32.mrb[0].mxu0
        %v1710 = vadd.f32 %v1540, %v1709
        %v1711 = vpop.f32.mrb[0].mxu0
        %v1712 = vadd.f32 %v1536, %v1711
        %v1713 = vpop.f32.mrb[0].mxu0
        %v1714 = vadd.f32 %v1540, %v1713
        %1715 = vmatprep.mubr.bf16.mxu0 0
        %1716 = vmatmul.mubr.bf16.gmra.mrb[0].mxu0 %v1292
        %v1717 = vpop.f32.mrb[0].mxu0
        %v1718 = vadd.f32 %v1536, %v1717
        %v1719 = vpop.f32.mrb[0].mxu0
        %v1720 = vadd.f32 %v1540, %v1719
        %v1721 = vpop.f32.mrb[0].mxu0
        %v1722 = vadd.f32 %v1536, %v1721
        %v1723 = vpop.f32.mrb[0].mxu0
        %v1724 = vadd.f32 %v1540, %v1723
        %1725 = vmatprep.mubr.bf16.mxu0 0
        %1726 = vmatmul.mubr.bf16.gmra.mrb[0].mxu0 %v1293
        %v1727 = vpop.f32.mrb[0].mxu0
        %v1728 = vadd.f32 %v1536, %v1727
        %v1729 = vpop.f32.mrb[0].mxu0
        %v1730 = vadd.f32 %v1540, %v1729
        %v1731 = vpop.f32.mrb[0].mxu0
        %v1732 = vadd.f32 %v1536, %v1731
        %v1733 = vpop.f32.mrb[0].mxu0
        %v1734 = vadd.f32 %v1540, %v1733
        %1735 = vdwg.mxu0
        %v1736 = vld [vmem:[#allocation10] sm:$0xff]
        %v1737 = vld [vmem:[#allocation10 + $0x8] sm:$0xff]
        %v1738 = vld [vmem:[#allocation10 + $0x10] sm:$0xff]
        %v1739 = vld [vmem:[#allocation10 + $0x18] sm:$0xff]
        %v1740 = vld [vmem:[#allocation10 + $0x20] sm:$0xff]
        %v1741 = vld [vmem:[#allocation10 + $0x28] sm:$0xff]
        %v1742 = vld [vmem:[#allocation10 + $0x30] sm:$0xff]
        %v1743 = vld [vmem:[#allocation10 + $0x38] sm:$0xff]
        %v1744 = vld [vmem:[#allocation10 + $0x40] sm:$0xff]
        %v1745 = vld [vmem:[#allocation10 + $0x48] sm:$0xff]
        %v1746 = vld [vmem:[#allocation10 + $0x50] sm:$0xff]
        %v1747 = vld [vmem:[#allocation10 + $0x58] sm:$0xff]
        %v1748 = vld [vmem:[#allocation10 + $0x60] sm:$0xff]
        %v1749 = vld [vmem:[#allocation10 + $0x68] sm:$0xff]
        %v1750 = vld [vmem:[#allocation10 + $0x70] sm:$0xff]
        %v1751 = vld [vmem:[#allocation10 + $0x78] sm:$0xff]
        %v1752 = vld [vmem:[%s11] sm:$0x3]
        %v1754 = vlaneseq
        %v1755 = vshrl.u32 %v1754, 7
        %v1756 = vsub.s32 0, %v1755
        %v1757 = vrot.slane %v1752, %v1756
        %v1758 = vlaneseq
        %v1759 = vshrl.u32 %v1758, 7
        %v1760 = vsub.s32 1, %v1759
        %v1761 = vrot.slane %v1752, %v1760
        %v1780 = vunpack.c.l.b16 %v1736
        %v1781 = vunpack.c.h.b16 %v1736
        %v1782 = vunpack.c.l.b16 %v1737
        %v1783 = vunpack.c.h.b16 %v1737
        %v1784 = vunpack.c.l.b16 %v1738
        %v1785 = vunpack.c.h.b16 %v1738
        %v1786 = vunpack.c.l.b16 %v1739
        %v1787 = vunpack.c.h.b16 %v1739
        %v1788 = vunpack.c.l.b16 %v1740
        %v1789 = vunpack.c.h.b16 %v1740
        %v1790 = vunpack.c.l.b16 %v1741
        %v1791 = vunpack.c.h.b16 %v1741
        %v1792 = vunpack.c.l.b16 %v1742
        %v1793 = vunpack.c.h.b16 %v1742
        %v1794 = vunpack.c.l.b16 %v1743
        %v1795 = vunpack.c.h.b16 %v1743
        %v1796 = vunpack.c.l.b16 %v1744
        %v1797 = vunpack.c.h.b16 %v1744
        %v1798 = vunpack.c.l.b16 %v1745
        %v1799 = vunpack.c.h.b16 %v1745
        %v1800 = vunpack.c.l.b16 %v1746
        %v1801 = vunpack.c.h.b16 %v1746
        %v1802 = vunpack.c.l.b16 %v1747
        %v1803 = vunpack.c.h.b16 %v1747
        %v1804 = vunpack.c.l.b16 %v1748
        %v1805 = vunpack.c.h.b16 %v1748
        %v1806 = vunpack.c.l.b16 %v1749
        %v1807 = vunpack.c.h.b16 %v1749
        %v1808 = vunpack.c.l.b16 %v1750
        %v1809 = vunpack.c.h.b16 %v1750
        %v1810 = vunpack.c.l.b16 %v1751
        %v1811 = vunpack.c.h.b16 %v1751
        %v1812 = vpack.c.b16 %v1782, %v1780
        %v1813 = vpack.c.b16 %v1783, %v1781
        %v1814 = vpack.c.b16 %v1786, %v1784
        %v1815 = vpack.c.b16 %v1787, %v1785
        %v1816 = vpack.c.b16 %v1790, %v1788
        %v1817 = vpack.c.b16 %v1791, %v1789
        %v1818 = vpack.c.b16 %v1794, %v1792
        %v1819 = vpack.c.b16 %v1795, %v1793
        %v1820 = vpack.c.b16 %v1798, %v1796
        %v1821 = vpack.c.b16 %v1799, %v1797
        %v1822 = vpack.c.b16 %v1802, %v1800
        %v1823 = vpack.c.b16 %v1803, %v1801
        %v1824 = vpack.c.b16 %v1806, %v1804
        %v1825 = vpack.c.b16 %v1807, %v1805
        %v1826 = vpack.c.b16 %v1810, %v1808
        %v1827 = vpack.c.b16 %v1811, %v1809
        %1844 = vmatprep.subr.bf16.mxu0 %v1813
        %1845 = vmatpush1.bf16.msra.mxu0 %v1812
        %1846 = vmatprep.subr.bf16.mxu0 %v1815
        %1847 = vmatpush1.bf16.msra.mxu0 %v1814
        %1848 = vmatprep.subr.bf16.mxu0 %v1817
        %1849 = vmatpush1.bf16.msra.mxu0 %v1816
        %1850 = vmatprep.subr.bf16.mxu0 %v1819
        %1851 = vmatpush1.bf16.msra.mxu0 %v1818
        %1852 = vmatprep.subr.bf16.mxu0 %v1821
        %1853 = vmatpush1.bf16.msra.mxu0 %v1820
        %1854 = vmatprep.subr.bf16.mxu0 %v1823
        %1855 = vmatpush1.bf16.msra.mxu0 %v1822
        %1856 = vmatprep.subr.bf16.mxu0 %v1825
        %1857 = vmatpush1.bf16.msra.mxu0 %v1824
        %1858 = vmatprep.subr.bf16.mxu0 %v1827
        %1859 = vmatpush1.bf16.msra.mxu0 %v1826
        %1860 = vmatprep.subr.bf16.mxu0 0
        %1861 = vmatpush1.bf16.msra.mxu0 0
        %1862 = vmatprep.subr.bf16.mxu0 0
        %1863 = vmatpush1.bf16.msra.mxu0 0
        %1864 = vmatprep.subr.bf16.mxu0 0
        %1865 = vmatpush1.bf16.msra.mxu0 0
        %1866 = vmatprep.subr.bf16.mxu0 0
        %1867 = vmatpush1.bf16.msra.mxu0 0
        %1868 = vmatprep.subr.bf16.mxu0 0
        %1869 = vmatpush1.bf16.msra.mxu0 0
        %1870 = vmatprep.subr.bf16.mxu0 0
        %1871 = vmatpush1.bf16.msra.mxu0 0
        %1872 = vmatprep.subr.bf16.mxu0 0
        %1873 = vmatpush1.bf16.msra.mxu0 0
        %1874 = vmatprep.subr.bf16.mxu0 0
        %1875 = vmatpush1.bf16.msra.mxu0 0
        %1876 = vmatprep.mubr.bf16.mxu0 0
        %1877 = vmatmul.mubr.bf16.gmra.mrb[0].mxu0 %v1286
        %v1878 = vpop.f32.mrb[0].mxu0
        %v1879 = vadd.f32 %v1757, %v1878
        %v1880 = vpop.f32.mrb[0].mxu0
        %v1881 = vadd.f32 %v1761, %v1880
        %v1882 = vpop.f32.mrb[0].mxu0
        %v1883 = vadd.f32 %v1757, %v1882
        %v1884 = vpop.f32.mrb[0].mxu0
        %v1885 = vadd.f32 %v1761, %v1884
        %1886 = vmatprep.mubr.bf16.mxu0 0
        %1887 = vmatmul.mubr.bf16.gmra.mrb[0].mxu0 %v1287
        %v1888 = vpop.f32.mrb[0].mxu0
        %v1889 = vadd.f32 %v1757, %v1888
        %v1890 = vpop.f32.mrb[0].mxu0
        %v1891 = vadd.f32 %v1761, %v1890
        %v1892 = vpop.f32.mrb[0].mxu0
        %v1893 = vadd.f32 %v1757, %v1892
        %v1894 = vpop.f32.mrb[0].mxu0
        %v1895 = vadd.f32 %v1761, %v1894
        %1896 = vmatprep.mubr.bf16.mxu0 0
        %1897 = vmatmul.mubr.bf16.gmra.mrb[0].mxu0 %v1288
        %v1898 = vpop.f32.mrb[0].mxu0
        %v1899 = vadd.f32 %v1757, %v1898
        %v1900 = vpop.f32.mrb[0].mxu0
        %v1901 = vadd.f32 %v1761, %v1900
        %v1902 = vpop.f32.mrb[0].mxu0
        %v1903 = vadd.f32 %v1757, %v1902
        %v1904 = vpop.f32.mrb[0].mxu0
        %v1905 = vadd.f32 %v1761, %v1904
        %1906 = vmatprep.mubr.bf16.mxu0 0
        %1907 = vmatmul.mubr.bf16.gmra.mrb[0].mxu0 %v1289
        %v1908 = vpop.f32.mrb[0].mxu0
        %v1909 = vadd.f32 %v1757, %v1908
        %v1910 = vpop.f32.mrb[0].mxu0
        %v1911 = vadd.f32 %v1761, %v1910
        %v1912 = vpop.f32.mrb[0].mxu0
        %v1913 = vadd.f32 %v1757, %v1912
        %v1914 = vpop.f32.mrb[0].mxu0
        %v1915 = vadd.f32 %v1761, %v1914
        %1916 = vmatprep.mubr.bf16.mxu0 0
        %1917 = vmatmul.mubr.bf16.gmra.mrb[0].mxu0 %v1290
        %v1918 = vpop.f32.mrb[0].mxu0
        %v1919 = vadd.f32 %v1757, %v1918
        %v1920 = vpop.f32.mrb[0].mxu0
        %v1921 = vadd.f32 %v1761, %v1920
        %v1922 = vpop.f32.mrb[0].mxu0
        %v1923 = vadd.f32 %v1757, %v1922
        %v1924 = vpop.f32.mrb[0].mxu0
        %v1925 = vadd.f32 %v1761, %v1924
        %1926 = vmatprep.mubr.bf16.mxu0 0
        %1927 = vmatmul.mubr.bf16.gmra.mrb[0].mxu0 %v1291
        %v1928 = vpop.f32.mrb[0].mxu0
        %v1929 = vadd.f32 %v1757, %v1928
        %v1930 = vpop.f32.mrb[0].mxu0
        %v1931 = vadd.f32 %v1761, %v1930
        %v1932 = vpop.f32.mrb[0].mxu0
        %v1933 = vadd.f32 %v1757, %v1932
        %v1934 = vpop.f32.mrb[0].mxu0
        %v1935 = vadd.f32 %v1761, %v1934
        %1936 = vmatprep.mubr.bf16.mxu0 0
        %1937 = vmatmul.mubr.bf16.gmra.mrb[0].mxu0 %v1292
        %v1938 = vpop.f32.mrb[0].mxu0
        %v1939 = vadd.f32 %v1757, %v1938
        %v1940 = vpop.f32.mrb[0].mxu0
        %v1941 = vadd.f32 %v1761, %v1940
        %v1942 = vpop.f32.mrb[0].mxu0
        %v1943 = vadd.f32 %v1757, %v1942
        %v1944 = vpop.f32.mrb[0].mxu0
        %v1945 = vadd.f32 %v1761, %v1944
        %1946 = vmatprep.mubr.bf16.mxu0 0
        %1947 = vmatmul.mubr.bf16.gmra.mrb[0].mxu0 %v1293
        %v1948 = vpop.f32.mrb[0].mxu0
        %v1949 = vadd.f32 %v1757, %v1948
        %v1950 = vpop.f32.mrb[0].mxu0
        %v1951 = vadd.f32 %v1761, %v1950
        %v1952 = vpop.f32.mrb[0].mxu0
        %v1953 = vadd.f32 %v1757, %v1952
        %v1954 = vpop.f32.mrb[0].mxu0
        %v1955 = vadd.f32 %v1761, %v1954
        %1956 = vdwg.mxu0
        %v1957 = vpack.c.bf16 %v1441, %v1437
        %v1958 = vpack.c.bf16 %v1443, %v1439
        %v1959 = vpack.c.bf16 %v1451, %v1447
        %v1960 = vpack.c.bf16 %v1453, %v1449
        %v1961 = vpack.c.bf16 %v1461, %v1457
        %v1962 = vpack.c.bf16 %v1463, %v1459
        %v1963 = vpack.c.bf16 %v1471, %v1467
        %v1964 = vpack.c.bf16 %v1473, %v1469
        %v1965 = vpack.c.bf16 %v1481, %v1477
        %v1966 = vpack.c.bf16 %v1483, %v1479
        %v1967 = vpack.c.bf16 %v1491, %v1487
        %v1968 = vpack.c.bf16 %v1493, %v1489
        %v1969 = vpack.c.bf16 %v1501, %v1497
        %v1970 = vpack.c.bf16 %v1503, %v1499
        %v1971 = vpack.c.bf16 %v1511, %v1507
        %v1972 = vpack.c.bf16 %v1513, %v1509
        %v1973 = vpack.c.bf16 %v1662, %v1658
        %v1974 = vpack.c.bf16 %v1664, %v1660
        %v1975 = vpack.c.bf16 %v1672, %v1668
        %v1976 = vpack.c.bf16 %v1674, %v1670
        %v1977 = vpack.c.bf16 %v1682, %v1678
        %v1978 = vpack.c.bf16 %v1684, %v1680
        %v1979 = vpack.c.bf16 %v1692, %v1688
        %v1980 = vpack.c.bf16 %v1694, %v1690
        %v1981 = vpack.c.bf16 %v1702, %v1698
        %v1982 = vpack.c.bf16 %v1704, %v1700
        %v1983 = vpack.c.bf16 %v1712, %v1708
        %v1984 = vpack.c.bf16 %v1714, %v1710
        %v1985 = vpack.c.bf16 %v1722, %v1718
        %v1986 = vpack.c.bf16 %v1724, %v1720
        %v1987 = vpack.c.bf16 %v1732, %v1728
        %v1988 = vpack.c.bf16 %v1734, %v1730
        %v1989 = vpack.c.bf16 %v1883, %v1879
        %v1990 = vpack.c.bf16 %v1885, %v1881
        %v1991 = vpack.c.bf16 %v1893, %v1889
        %v1992 = vpack.c.bf16 %v1895, %v1891
        %v1993 = vpack.c.bf16 %v1903, %v1899
        %v1994 = vpack.c.bf16 %v1905, %v1901
        %v1995 = vpack.c.bf16 %v1913, %v1909
        %v1996 = vpack.c.bf16 %v1915, %v1911
        %v1997 = vpack.c.bf16 %v1923, %v1919
        %v1998 = vpack.c.bf16 %v1925, %v1921
        %v1999 = vpack.c.bf16 %v1933, %v1929
        %v2000 = vpack.c.bf16 %v1935, %v1931
        %v2001 = vpack.c.bf16 %v1943, %v1939
        %v2002 = vpack.c.bf16 %v1945, %v1941
        %v2003 = vpack.c.bf16 %v1953, %v1949
        %v2004 = vpack.c.bf16 %v1955, %v1951
        %v2006 = vlaneseq
        %v2007 = vshrl.u32 %v2006, 7
        %v2008 = vsub.s32 0, %v2007
        %v2009 = vrot.slane %v1013, %v2008
        %2011 = vmatprep.subr.bf16.mxu0 0
        %2012 = vmatpush1.bf16.xpose.msra.mxu0 %v1973
        %2013 = vmatprep.subr.bf16.mxu0 0
        %2014 = vmatpush1.bf16.xpose.msra.mxu0 %v1975
        %2015 = vmatprep.subr.bf16.mxu0 0
        %2016 = vmatpush1.bf16.xpose.msra.mxu0 %v1977
        %2017 = vmatprep.subr.bf16.mxu0 0
        %2018 = vmatpush1.bf16.xpose.msra.mxu0 %v1979
        %2019 = vmatprep.subr.bf16.mxu0 0
        %2020 = vmatpush1.bf16.xpose.msra.mxu0 %v1981
        %2021 = vmatprep.subr.bf16.mxu0 0
        %2022 = vmatpush1.bf16.xpose.msra.mxu0 %v1983
        %2023 = vmatprep.subr.bf16.mxu0 0
        %2024 = vmatpush1.bf16.xpose.msra.mxu0 %v1985
        %2025 = vmatprep.subr.bf16.mxu0 0
        %2026 = vmatpush1.bf16.xpose.msra.mxu0 %v1987
        %2027 = vmatprep.subr.bf16.mxu0 0
        %2028 = vmatpush1.bf16.xpose.msra.mxu0 0
        %2029 = vmatprep.subr.bf16.mxu0 0
        %2030 = vmatpush1.bf16.xpose.msra.mxu0 0
        %2031 = vmatprep.subr.bf16.mxu0 0
        %2032 = vmatpush1.bf16.xpose.msra.mxu0 0
        %2033 = vmatprep.subr.bf16.mxu0 0
        %2034 = vmatpush1.bf16.xpose.msra.mxu0 0
        %2035 = vmatprep.subr.bf16.mxu0 0
        %2036 = vmatpush1.bf16.xpose.msra.mxu0 0
        %2037 = vmatprep.subr.bf16.mxu0 0
        %2038 = vmatpush1.bf16.xpose.msra.mxu0 0
        %2039 = vmatprep.subr.bf16.mxu0 0
        %2040 = vmatpush1.bf16.xpose.msra.mxu0 0
        %2041 = vmatprep.subr.bf16.mxu0 0
        %2042 = vmatpush1.bf16.xpose.msra.mxu0 0
        %2043 = vmatprep.mubr.bf16.mxu0 0
        %2044 = vmatmul.mubr.bf16.gmra.mrb[0].mxu0 %v1957
        %v2045 = vpop.f32.mrb[0].mxu0
        %v2046 = vadd.f32 %v2009, %v2045
        %v2047 = vpop.f32.mrb[0].mxu0
        %v2048 = vpop.f32.mrb[0].mxu0
        %v2049 = vadd.f32 %v2009, %v2048
        %v2050 = vpop.f32.mrb[0].mxu0
        %2051 = vmatprep.mubr.bf16.mxu0 0
        %2052 = vmatmul.mubr.bf16.gmra.mrb[0].mxu0 %v1959
        %v2053 = vpop.f32.mrb[0].mxu0
        %v2054 = vadd.f32 %v2009, %v2053
        %v2055 = vpop.f32.mrb[0].mxu0
        %v2056 = vpop.f32.mrb[0].mxu0
        %v2057 = vadd.f32 %v2009, %v2056
        %v2058 = vpop.f32.mrb[0].mxu0
        %2059 = vmatprep.mubr.bf16.mxu0 0
        %2060 = vmatmul.mubr.bf16.gmra.mrb[0].mxu0 %v1961
        %v2061 = vpop.f32.mrb[0].mxu0
        %v2062 = vadd.f32 %v2009, %v2061
        %v2063 = vpop.f32.mrb[0].mxu0
        %v2064 = vpop.f32.mrb[0].mxu0
        %v2065 = vadd.f32 %v2009, %v2064
        %v2066 = vpop.f32.mrb[0].mxu0
        %2067 = vmatprep.mubr.bf16.mxu0 0
        %2068 = vmatmul.mubr.bf16.gmra.mrb[0].mxu0 %v1963
        %v2069 = vpop.f32.mrb[0].mxu0
        %v2070 = vadd.f32 %v2009, %v2069
        %v2071 = vpop.f32.mrb[0].mxu0
        %v2072 = vpop.f32.mrb[0].mxu0
        %v2073 = vadd.f32 %v2009, %v2072
        %v2074 = vpop.f32.mrb[0].mxu0
        %2075 = vmatprep.mubr.bf16.mxu0 0
        %2076 = vmatmul.mubr.bf16.gmra.mrb[0].mxu0 %v1965
        %v2077 = vpop.f32.mrb[0].mxu0
        %v2078 = vadd.f32 %v2009, %v2077
        %v2079 = vpop.f32.mrb[0].mxu0
        %v2080 = vpop.f32.mrb[0].mxu0
        %v2081 = vadd.f32 %v2009, %v2080
        %v2082 = vpop.f32.mrb[0].mxu0
        %2083 = vmatprep.mubr.bf16.mxu0 0
        %2084 = vmatmul.mubr.bf16.gmra.mrb[0].mxu0 %v1967
        %v2085 = vpop.f32.mrb[0].mxu0
        %v2086 = vadd.f32 %v2009, %v2085
        %v2087 = vpop.f32.mrb[0].mxu0
        %v2088 = vpop.f32.mrb[0].mxu0
        %v2089 = vadd.f32 %v2009, %v2088
        %v2090 = vpop.f32.mrb[0].mxu0
        %2091 = vmatprep.mubr.bf16.mxu0 0
        %2092 = vmatmul.mubr.bf16.gmra.mrb[0].mxu0 %v1969
        %v2093 = vpop.f32.mrb[0].mxu0
        %v2094 = vadd.f32 %v2009, %v2093
        %v2095 = vpop.f32.mrb[0].mxu0
        %v2096 = vpop.f32.mrb[0].mxu0
        %v2097 = vadd.f32 %v2009, %v2096
        %v2098 = vpop.f32.mrb[0].mxu0
        %2099 = vmatprep.mubr.bf16.mxu0 0
        %2100 = vmatmul.mubr.bf16.gmra.mrb[0].mxu0 %v1971
        %v2101 = vpop.f32.mrb[0].mxu0
        %v2102 = vadd.f32 %v2009, %v2101
        %v2103 = vpop.f32.mrb[0].mxu0
        %v2104 = vpop.f32.mrb[0].mxu0
        %v2105 = vadd.f32 %v2009, %v2104
        %v2106 = vpop.f32.mrb[0].mxu0
        %2107 = vdwg.mxu0
        %2108 = vmax.xlane.f32.xlu0 %v2046
        %v2109 = vpop.xlane.xlu0 %2108
        %2110 = vmax.xlane.f32.xlu0 %v2049
        %v2111 = vpop.xlane.xlu0 %2110
        %2112 = vmax.xlane.f32.xlu0 %v2054
        %v2113 = vpop.xlane.xlu0 %2112
        %2114 = vmax.xlane.f32.xlu0 %v2057
        %v2115 = vpop.xlane.xlu0 %2114
        %2116 = vmax.xlane.f32.xlu0 %v2062
        %v2117 = vpop.xlane.xlu0 %2116
        %2118 = vmax.xlane.f32.xlu0 %v2065
        %v2119 = vpop.xlane.xlu0 %2118
        %2120 = vmax.xlane.f32.xlu0 %v2070
        %v2121 = vpop.xlane.xlu0 %2120
        %2122 = vmax.xlane.f32.xlu0 %v2073
        %v2123 = vpop.xlane.xlu0 %2122
        %2124 = vmax.xlane.f32.xlu0 %v2078
        %v2125 = vpop.xlane.xlu0 %2124
        %2126 = vmax.xlane.f32.xlu0 %v2081
        %v2127 = vpop.xlane.xlu0 %2126
        %2128 = vmax.xlane.f32.xlu0 %v2086
        %v2129 = vpop.xlane.xlu0 %2128
        %2130 = vmax.xlane.f32.xlu0 %v2089
        %v2131 = vpop.xlane.xlu0 %2130
        %2132 = vmax.xlane.f32.xlu0 %v2094
        %v2133 = vpop.xlane.xlu0 %2132
        %2134 = vmax.xlane.f32.xlu0 %v2097
        %v2135 = vpop.xlane.xlu0 %2134
        %2136 = vmax.xlane.f32.xlu0 %v2102
        %v2137 = vpop.xlane.xlu0 %2136
        %2138 = vmax.xlane.f32.xlu0 %v2105
        %v2139 = vpop.xlane.xlu0 %2138
        %v2140 = vsub.f32 %v2046, %v2109
        %v2141 = vsub.f32 %v2049, %v2111
        %v2142 = vsub.f32 %v2054, %v2113
        %v2143 = vsub.f32 %v2057, %v2115
        %v2144 = vsub.f32 %v2062, %v2117
        %v2145 = vsub.f32 %v2065, %v2119
        %v2146 = vsub.f32 %v2070, %v2121
        %v2147 = vsub.f32 %v2073, %v2123
        %v2148 = vsub.f32 %v2078, %v2125
        %v2149 = vsub.f32 %v2081, %v2127
        %v2150 = vsub.f32 %v2086, %v2129
        %v2151 = vsub.f32 %v2089, %v2131
        %v2152 = vsub.f32 %v2094, %v2133
        %v2153 = vsub.f32 %v2097, %v2135
        %v2154 = vsub.f32 %v2102, %v2137
        %v2155 = vsub.f32 %v2105, %v2139
        %v2156 = vmul.f32 %v2140, 1.442695
        %v2157 = vpow.pop %v2156
        %v2158 = vmul.f32 %v2141, 1.442695
        %v2159 = vpow.pop %v2158
        %v2160 = vmul.f32 %v2142, 1.442695
        %v2161 = vpow.pop %v2160
        %v2162 = vmul.f32 %v2143, 1.442695
        %v2163 = vpow.pop %v2162
        %v2164 = vmul.f32 %v2144, 1.442695
        %v2165 = vpow.pop %v2164
        %v2166 = vmul.f32 %v2145, 1.442695
        %v2167 = vpow.pop %v2166
        %v2168 = vmul.f32 %v2146, 1.442695
        %v2169 = vpow.pop %v2168
        %v2170 = vmul.f32 %v2147, 1.442695
        %v2171 = vpow.pop %v2170
        %v2172 = vmul.f32 %v2148, 1.442695
        %v2173 = vpow.pop %v2172
        %v2174 = vmul.f32 %v2149, 1.442695
        %v2175 = vpow.pop %v2174
        %v2176 = vmul.f32 %v2150, 1.442695
        %v2177 = vpow.pop %v2176
        %v2178 = vmul.f32 %v2151, 1.442695
        %v2179 = vpow.pop %v2178
        %v2180 = vmul.f32 %v2152, 1.442695
        %v2181 = vpow.pop %v2180
        %v2182 = vmul.f32 %v2153, 1.442695
        %v2183 = vpow.pop %v2182
        %v2184 = vmul.f32 %v2154, 1.442695
        %v2185 = vpow.pop %v2184
        %v2186 = vmul.f32 %v2155, 1.442695
        %v2187 = vpow.pop %v2186
        %2188 = vadd.xlane.f32.xlu0 %v2157
        %v2189 = vpop.xlane.xlu0 %2188
        %2190 = vadd.xlane.f32.xlu0 %v2159
        %v2191 = vpop.xlane.xlu0 %2190
        %2192 = vadd.xlane.f32.xlu0 %v2161
        %v2193 = vpop.xlane.xlu0 %2192
        %2194 = vadd.xlane.f32.xlu0 %v2163
        %v2195 = vpop.xlane.xlu0 %2194
        %2196 = vadd.xlane.f32.xlu0 %v2165
        %v2197 = vpop.xlane.xlu0 %2196
        %2198 = vadd.xlane.f32.xlu0 %v2167
        %v2199 = vpop.xlane.xlu0 %2198
        %2200 = vadd.xlane.f32.xlu0 %v2169
        %v2201 = vpop.xlane.xlu0 %2200
        %2202 = vadd.xlane.f32.xlu0 %v2171
        %v2203 = vpop.xlane.xlu0 %2202
        %2204 = vadd.xlane.f32.xlu0 %v2173
        %v2205 = vpop.xlane.xlu0 %2204
        %2206 = vadd.xlane.f32.xlu0 %v2175
        %v2207 = vpop.xlane.xlu0 %2206
        %2208 = vadd.xlane.f32.xlu0 %v2177
        %v2209 = vpop.xlane.xlu0 %2208
        %2210 = vadd.xlane.f32.xlu0 %v2179
        %v2211 = vpop.xlane.xlu0 %2210
        %2212 = vadd.xlane.f32.xlu0 %v2181
        %v2213 = vpop.xlane.xlu0 %2212
        %2214 = vadd.xlane.f32.xlu0 %v2183
        %v2215 = vpop.xlane.xlu0 %2214
        %2216 = vadd.xlane.f32.xlu0 %v2185
        %v2217 = vpop.xlane.xlu0 %2216
        %2218 = vadd.xlane.f32.xlu0 %v2187
        %v2219 = vpop.xlane.xlu0 %2218
        %v2220 = vpack.c.bf16 %v2159, %v2157
        %v2221 = vpack.c.bf16 %v2163, %v2161
        %v2222 = vpack.c.bf16 %v2167, %v2165
        %v2223 = vpack.c.bf16 %v2171, %v2169
        %v2224 = vpack.c.bf16 %v2175, %v2173
        %v2225 = vpack.c.bf16 %v2179, %v2177
        %v2226 = vpack.c.bf16 %v2183, %v2181
        %v2227 = vpack.c.bf16 %v2187, %v2185
        %2228 = vmatprep.subr.bf16.mxu0 0
        %2229 = vmatpush1.bf16.msra.mxu0 %v1989
        %2230 = vmatprep.subr.bf16.mxu0 0
        %2231 = vmatpush1.bf16.msra.mxu0 %v1991
        %2232 = vmatprep.subr.bf16.mxu0 0
        %2233 = vmatpush1.bf16.msra.mxu0 %v1993
        %2234 = vmatprep.subr.bf16.mxu0 0
        %2235 = vmatpush1.bf16.msra.mxu0 %v1995
        %2236 = vmatprep.subr.bf16.mxu0 0
        %2237 = vmatpush1.bf16.msra.mxu0 %v1997
        %2238 = vmatprep.subr.bf16.mxu0 0
        %2239 = vmatpush1.bf16.msra.mxu0 %v1999
        %2240 = vmatprep.subr.bf16.mxu0 0
        %2241 = vmatpush1.bf16.msra.mxu0 %v2001
        %2242 = vmatprep.subr.bf16.mxu0 0
        %2243 = vmatpush1.bf16.msra.mxu0 %v2003
        %2244 = vmatprep.subr.bf16.mxu0 0
        %2245 = vmatpush1.bf16.msra.mxu0 0
        %2246 = vmatprep.subr.bf16.mxu0 0
        %2247 = vmatpush1.bf16.msra.mxu0 0
        %2248 = vmatprep.subr.bf16.mxu0 0
        %2249 = vmatpush1.bf16.msra.mxu0 0
        %2250 = vmatprep.subr.bf16.mxu0 0
        %2251 = vmatpush1.bf16.msra.mxu0 0
        %2252 = vmatprep.subr.bf16.mxu0 0
        %2253 = vmatpush1.bf16.msra.mxu0 0
        %2254 = vmatprep.subr.bf16.mxu0 0
        %2255 = vmatpush1.bf16.msra.mxu0 0
        %2256 = vmatprep.subr.bf16.mxu0 0
        %2257 = vmatpush1.bf16.msra.mxu0 0
        %2258 = vmatprep.subr.bf16.mxu0 0
        %2259 = vmatpush1.bf16.msra.mxu0 0
        %2260 = vmatprep.mubr.bf16.mxu0 0
        %2261 = vmatmul.mubr.bf16.gmra.mrb[0].mxu0 %v2220
        %v2262 = vpop.f32.mrb[0].mxu0
        %v2263 = vadd.f32 0.0, %v2262
        %v2264 = vpop.f32.mrb[0].mxu0
        %v2265 = vpop.f32.mrb[0].mxu0
        %v2266 = vadd.f32 0.0, %v2265
        %v2267 = vpop.f32.mrb[0].mxu0
        %2268 = vmatprep.mubr.bf16.mxu0 0
        %2269 = vmatmul.mubr.bf16.gmra.mrb[0].mxu0 %v2221
        %v2270 = vpop.f32.mrb[0].mxu0
        %v2271 = vadd.f32 0.0, %v2270
        %v2272 = vpop.f32.mrb[0].mxu0
        %v2273 = vpop.f32.mrb[0].mxu0
        %v2274 = vadd.f32 0.0, %v2273
        %v2275 = vpop.f32.mrb[0].mxu0
        %2276 = vmatprep.mubr.bf16.mxu0 0
        %2277 = vmatmul.mubr.bf16.gmra.mrb[0].mxu0 %v2222
        %v2278 = vpop.f32.mrb[0].mxu0
        %v2279 = vadd.f32 0.0, %v2278
        %v2280 = vpop.f32.mrb[0].mxu0
        %v2281 = vpop.f32.mrb[0].mxu0
        %v2282 = vadd.f32 0.0, %v2281
        %v2283 = vpop.f32.mrb[0].mxu0
        %2284 = vmatprep.mubr.bf16.mxu0 0
        %2285 = vmatmul.mubr.bf16.gmra.mrb[0].mxu0 %v2223
        %v2286 = vpop.f32.mrb[0].mxu0
        %v2287 = vadd.f32 0.0, %v2286
        %v2288 = vpop.f32.mrb[0].mxu0
        %v2289 = vpop.f32.mrb[0].mxu0
        %v2290 = vadd.f32 0.0, %v2289
        %v2291 = vpop.f32.mrb[0].mxu0
        %2292 = vmatprep.mubr.bf16.mxu0 0
        %2293 = vmatmul.mubr.bf16.gmra.mrb[0].mxu0 %v2224
        %v2294 = vpop.f32.mrb[0].mxu0
        %v2295 = vadd.f32 0.0, %v2294
        %v2296 = vpop.f32.mrb[0].mxu0
        %v2297 = vpop.f32.mrb[0].mxu0
        %v2298 = vadd.f32 0.0, %v2297
        %v2299 = vpop.f32.mrb[0].mxu0
        %2300 = vmatprep.mubr.bf16.mxu0 0
        %2301 = vmatmul.mubr.bf16.gmra.mrb[0].mxu0 %v2225
        %v2302 = vpop.f32.mrb[0].mxu0
        %v2303 = vadd.f32 0.0, %v2302
        %v2304 = vpop.f32.mrb[0].mxu0
        %v2305 = vpop.f32.mrb[0].mxu0
        %v2306 = vadd.f32 0.0, %v2305
        %v2307 = vpop.f32.mrb[0].mxu0
        %2308 = vmatprep.mubr.bf16.mxu0 0
        %2309 = vmatmul.mubr.bf16.gmra.mrb[0].mxu0 %v2226
        %v2310 = vpop.f32.mrb[0].mxu0
        %v2311 = vadd.f32 0.0, %v2310
        %v2312 = vpop.f32.mrb[0].mxu0
        %v2313 = vpop.f32.mrb[0].mxu0
        %v2314 = vadd.f32 0.0, %v2313
        %v2315 = vpop.f32.mrb[0].mxu0
        %2316 = vmatprep.mubr.bf16.mxu0 0
        %2317 = vmatmul.mubr.bf16.gmra.mrb[0].mxu0 %v2227
        %v2318 = vpop.f32.mrb[0].mxu0
        %v2319 = vadd.f32 0.0, %v2318
        %v2320 = vpop.f32.mrb[0].mxu0
        %v2321 = vpop.f32.mrb[0].mxu0
        %v2322 = vadd.f32 0.0, %v2321
        %v2323 = vpop.f32.mrb[0].mxu0
        %2324 = vdwg.mxu0
        %v2325 = vrcp.pop %v2189
        %v2326 = vrcp.pop %v2191
        %v2327 = vrcp.pop %v2193
        %v2328 = vrcp.pop %v2195
        %v2329 = vrcp.pop %v2197
        %v2330 = vrcp.pop %v2199
        %v2331 = vrcp.pop %v2201
        %v2332 = vrcp.pop %v2203
        %v2333 = vrcp.pop %v2205
        %v2334 = vrcp.pop %v2207
        %v2335 = vrcp.pop %v2209
        %v2336 = vrcp.pop %v2211
        %v2337 = vrcp.pop %v2213
        %v2338 = vrcp.pop %v2215
        %v2339 = vrcp.pop %v2217
        %v2340 = vrcp.pop %v2219
        %v2341 = vmul.f32 %v2263, %v2325
        %v2342 = vmul.f32 %v2266, %v2326
        %v2343 = vmul.f32 %v2271, %v2327
        %v2344 = vmul.f32 %v2274, %v2328
        %v2345 = vmul.f32 %v2279, %v2329
        %v2346 = vmul.f32 %v2282, %v2330
        %v2347 = vmul.f32 %v2287, %v2331
        %v2348 = vmul.f32 %v2290, %v2332
        %v2349 = vmul.f32 %v2295, %v2333
        %v2350 = vmul.f32 %v2298, %v2334
        %v2351 = vmul.f32 %v2303, %v2335
        %v2352 = vmul.f32 %v2306, %v2336
        %v2353 = vmul.f32 %v2311, %v2337
        %v2354 = vmul.f32 %v2314, %v2338
        %v2355 = vmul.f32 %v2319, %v2339
        %v2356 = vmul.f32 %v2322, %v2340
        %v2357 = vpack.c.bf16 %v2342, %v2341
        %v2358 = vpack.c.bf16 %v2344, %v2343
        %v2359 = vpack.c.bf16 %v2346, %v2345
        %v2360 = vpack.c.bf16 %v2348, %v2347
        %v2361 = vpack.c.bf16 %v2350, %v2349
        %v2362 = vpack.c.bf16 %v2352, %v2351
        %v2363 = vpack.c.bf16 %v2354, %v2353
        %v2364 = vpack.c.bf16 %v2356, %v2355
        %2365 = vmatprep.subr.bf16.mxu0 0
        %2366 = vmatpush1.bf16.xpose.msra.mxu0 %v1974
        %2367 = vmatprep.subr.bf16.mxu0 0
        %2368 = vmatpush1.bf16.xpose.msra.mxu0 %v1976
        %2369 = vmatprep.subr.bf16.mxu0 0
        %2370 = vmatpush1.bf16.xpose.msra.mxu0 %v1978
        %2371 = vmatprep.subr.bf16.mxu0 0
        %2372 = vmatpush1.bf16.xpose.msra.mxu0 %v1980
        %2373 = vmatprep.subr.bf16.mxu0 0
        %2374 = vmatpush1.bf16.xpose.msra.mxu0 %v1982
        %2375 = vmatprep.subr.bf16.mxu0 0
        %2376 = vmatpush1.bf16.xpose.msra.mxu0 %v1984
        %2377 = vmatprep.subr.bf16.mxu0 0
        %2378 = vmatpush1.bf16.xpose.msra.mxu0 %v1986
        %2379 = vmatprep.subr.bf16.mxu0 0
        %2380 = vmatpush1.bf16.xpose.msra.mxu0 %v1988
        %2381 = vmatprep.subr.bf16.mxu0 0
        %2382 = vmatpush1.bf16.xpose.msra.mxu0 0
        %2383 = vmatprep.subr.bf16.mxu0 0
        %2384 = vmatpush1.bf16.xpose.msra.mxu0 0
        %2385 = vmatprep.subr.bf16.mxu0 0
        %2386 = vmatpush1.bf16.xpose.msra.mxu0 0
        %2387 = vmatprep.subr.bf16.mxu0 0
        %2388 = vmatpush1.bf16.xpose.msra.mxu0 0
        %2389 = vmatprep.subr.bf16.mxu0 0
        %2390 = vmatpush1.bf16.xpose.msra.mxu0 0
        %2391 = vmatprep.subr.bf16.mxu0 0
        %2392 = vmatpush1.bf16.xpose.msra.mxu0 0
        %2393 = vmatprep.subr.bf16.mxu0 0
        %2394 = vmatpush1.bf16.xpose.msra.mxu0 0
        %2395 = vmatprep.subr.bf16.mxu0 0
        %2396 = vmatpush1.bf16.xpose.msra.mxu0 0
        %2397 = vmatprep.mubr.bf16.mxu0 0
        %2398 = vmatmul.mubr.bf16.gmra.mrb[0].mxu0 %v1958
        %v2399 = vpop.f32.mrb[0].mxu0
        %v2400 = vadd.f32 %v2009, %v2399
        %v2401 = vpop.f32.mrb[0].mxu0
        %v2402 = vpop.f32.mrb[0].mxu0
        %v2403 = vadd.f32 %v2009, %v2402
        %v2404 = vpop.f32.mrb[0].mxu0
        %2405 = vmatprep.mubr.bf16.mxu0 0
        %2406 = vmatmul.mubr.bf16.gmra.mrb[0].mxu0 %v1960
        %v2407 = vpop.f32.mrb[0].mxu0
        %v2408 = vadd.f32 %v2009, %v2407
        %v2409 = vpop.f32.mrb[0].mxu0
        %v2410 = vpop.f32.mrb[0].mxu0
        %v2411 = vadd.f32 %v2009, %v2410
        %v2412 = vpop.f32.mrb[0].mxu0
        %2413 = vmatprep.mubr.bf16.mxu0 0
        %2414 = vmatmul.mubr.bf16.gmra.mrb[0].mxu0 %v1962
        %v2415 = vpop.f32.mrb[0].mxu0
        %v2416 = vadd.f32 %v2009, %v2415
        %v2417 = vpop.f32.mrb[0].mxu0
        %v2418 = vpop.f32.mrb[0].mxu0
        %v2419 = vadd.f32 %v2009, %v2418
        %v2420 = vpop.f32.mrb[0].mxu0
        %2421 = vmatprep.mubr.bf16.mxu0 0
        %2422 = vmatmul.mubr.bf16.gmra.mrb[0].mxu0 %v1964
        %v2423 = vpop.f32.mrb[0].mxu0
        %v2424 = vadd.f32 %v2009, %v2423
        %v2425 = vpop.f32.mrb[0].mxu0
        %v2426 = vpop.f32.mrb[0].mxu0
        %v2427 = vadd.f32 %v2009, %v2426
        %v2428 = vpop.f32.mrb[0].mxu0
        %2429 = vmatprep.mubr.bf16.mxu0 0
        %2430 = vmatmul.mubr.bf16.gmra.mrb[0].mxu0 %v1966
        %v2431 = vpop.f32.mrb[0].mxu0
        %v2432 = vadd.f32 %v2009, %v2431
        %v2433 = vpop.f32.mrb[0].mxu0
        %v2434 = vpop.f32.mrb[0].mxu0
        %v2435 = vadd.f32 %v2009, %v2434
        %v2436 = vpop.f32.mrb[0].mxu0
        %2437 = vmatprep.mubr.bf16.mxu0 0
        %2438 = vmatmul.mubr.bf16.gmra.mrb[0].mxu0 %v1968
        %v2439 = vpop.f32.mrb[0].mxu0
        %v2440 = vadd.f32 %v2009, %v2439
        %v2441 = vpop.f32.mrb[0].mxu0
        %v2442 = vpop.f32.mrb[0].mxu0
        %v2443 = vadd.f32 %v2009, %v2442
        %v2444 = vpop.f32.mrb[0].mxu0
        %2445 = vmatprep.mubr.bf16.mxu0 0
        %2446 = vmatmul.mubr.bf16.gmra.mrb[0].mxu0 %v1970
        %v2447 = vpop.f32.mrb[0].mxu0
        %v2448 = vadd.f32 %v2009, %v2447
        %v2449 = vpop.f32.mrb[0].mxu0
        %v2450 = vpop.f32.mrb[0].mxu0
        %v2451 = vadd.f32 %v2009, %v2450
        %v2452 = vpop.f32.mrb[0].mxu0
        %2453 = vmatprep.mubr.bf16.mxu0 0
        %2454 = vmatmul.mubr.bf16.gmra.mrb[0].mxu0 %v1972
        %v2455 = vpop.f32.mrb[0].mxu0
        %v2456 = vadd.f32 %v2009, %v2455
        %v2457 = vpop.f32.mrb[0].mxu0
        %v2458 = vpop.f32.mrb[0].mxu0
        %v2459 = vadd.f32 %v2009, %v2458
        %v2460 = vpop.f32.mrb[0].mxu0
        %2461 = vdwg.mxu0
        %2462 = vmax.xlane.f32.xlu0 %v2400
        %v2463 = vpop.xlane.xlu0 %2462
        %2464 = vmax.xlane.f32.xlu0 %v2403
        %v2465 = vpop.xlane.xlu0 %2464
        %2466 = vmax.xlane.f32.xlu0 %v2408
        %v2467 = vpop.xlane.xlu0 %2466
        %2468 = vmax.xlane.f32.xlu0 %v2411
        %v2469 = vpop.xlane.xlu0 %2468
        %2470 = vmax.xlane.f32.xlu0 %v2416
        %v2471 = vpop.xlane.xlu0 %2470
        %2472 = vmax.xlane.f32.xlu0 %v2419
        %v2473 = vpop.xlane.xlu0 %2472
        %2474 = vmax.xlane.f32.xlu0 %v2424
        %v2475 = vpop.xlane.xlu0 %2474
        %2476 = vmax.xlane.f32.xlu0 %v2427
        %v2477 = vpop.xlane.xlu0 %2476
        %2478 = vmax.xlane.f32.xlu0 %v2432
        %v2479 = vpop.xlane.xlu0 %2478
        %2480 = vmax.xlane.f32.xlu0 %v2435
        %v2481 = vpop.xlane.xlu0 %2480
        %2482 = vmax.xlane.f32.xlu0 %v2440
        %v2483 = vpop.xlane.xlu0 %2482
        %2484 = vmax.xlane.f32.xlu0 %v2443
        %v2485 = vpop.xlane.xlu0 %2484
        %2486 = vmax.xlane.f32.xlu0 %v2448
        %v2487 = vpop.xlane.xlu0 %2486
        %2488 = vmax.xlane.f32.xlu0 %v2451
        %v2489 = vpop.xlane.xlu0 %2488
        %2490 = vmax.xlane.f32.xlu0 %v2456
        %v2491 = vpop.xlane.xlu0 %2490
        %2492 = vmax.xlane.f32.xlu0 %v2459
        %v2493 = vpop.xlane.xlu0 %2492
        %v2494 = vsub.f32 %v2400, %v2463
        %v2495 = vsub.f32 %v2403, %v2465
        %v2496 = vsub.f32 %v2408, %v2467
        %v2497 = vsub.f32 %v2411, %v2469
        %v2498 = vsub.f32 %v2416, %v2471
        %v2499 = vsub.f32 %v2419, %v2473
        %v2500 = vsub.f32 %v2424, %v2475
        %v2501 = vsub.f32 %v2427, %v2477
        %v2502 = vsub.f32 %v2432, %v2479
        %v2503 = vsub.f32 %v2435, %v2481
        %v2504 = vsub.f32 %v2440, %v2483
        %v2505 = vsub.f32 %v2443, %v2485
        %v2506 = vsub.f32 %v2448, %v2487
        %v2507 = vsub.f32 %v2451, %v2489
        %v2508 = vsub.f32 %v2456, %v2491
        %v2509 = vsub.f32 %v2459, %v2493
        %v2510 = vmul.f32 %v2494, 1.442695
        %v2511 = vpow.pop %v2510
        %v2512 = vmul.f32 %v2495, 1.442695
        %v2513 = vpow.pop %v2512
        %v2514 = vmul.f32 %v2496, 1.442695
        %v2515 = vpow.pop %v2514
        %v2516 = vmul.f32 %v2497, 1.442695
        %v2517 = vpow.pop %v2516
        %v2518 = vmul.f32 %v2498, 1.442695
        %v2519 = vpow.pop %v2518
        %v2520 = vmul.f32 %v2499, 1.442695
        %v2521 = vpow.pop %v2520
        %v2522 = vmul.f32 %v2500, 1.442695
        %v2523 = vpow.pop %v2522
        %v2524 = vmul.f32 %v2501, 1.442695
        %v2525 = vpow.pop %v2524
        %v2526 = vmul.f32 %v2502, 1.442695
        %v2527 = vpow.pop %v2526
        %v2528 = vmul.f32 %v2503, 1.442695
        %v2529 = vpow.pop %v2528
        %v2530 = vmul.f32 %v2504, 1.442695
        %v2531 = vpow.pop %v2530
        %v2532 = vmul.f32 %v2505, 1.442695
        %v2533 = vpow.pop %v2532
        %v2534 = vmul.f32 %v2506, 1.442695
        %v2535 = vpow.pop %v2534
        %v2536 = vmul.f32 %v2507, 1.442695
        %v2537 = vpow.pop %v2536
        %v2538 = vmul.f32 %v2508, 1.442695
        %v2539 = vpow.pop %v2538
        %v2540 = vmul.f32 %v2509, 1.442695
        %v2541 = vpow.pop %v2540
        %2542 = vadd.xlane.f32.xlu0 %v2511
        %v2543 = vpop.xlane.xlu0 %2542
        %2544 = vadd.xlane.f32.xlu0 %v2513
        %v2545 = vpop.xlane.xlu0 %2544
        %2546 = vadd.xlane.f32.xlu0 %v2515
        %v2547 = vpop.xlane.xlu0 %2546
        %2548 = vadd.xlane.f32.xlu0 %v2517
        %v2549 = vpop.xlane.xlu0 %2548
        %2550 = vadd.xlane.f32.xlu0 %v2519
        %v2551 = vpop.xlane.xlu0 %2550
        %2552 = vadd.xlane.f32.xlu0 %v2521
        %v2553 = vpop.xlane.xlu0 %2552
        %2554 = vadd.xlane.f32.xlu0 %v2523
        %v2555 = vpop.xlane.xlu0 %2554
        %2556 = vadd.xlane.f32.xlu0 %v2525
        %v2557 = vpop.xlane.xlu0 %2556
        %2558 = vadd.xlane.f32.xlu0 %v2527
        %v2559 = vpop.xlane.xlu0 %2558
        %2560 = vadd.xlane.f32.xlu0 %v2529
        %v2561 = vpop.xlane.xlu0 %2560
        %2562 = vadd.xlane.f32.xlu0 %v2531
        %v2563 = vpop.xlane.xlu0 %2562
        %2564 = vadd.xlane.f32.xlu0 %v2533
        %v2565 = vpop.xlane.xlu0 %2564
        %2566 = vadd.xlane.f32.xlu0 %v2535
        %v2567 = vpop.xlane.xlu0 %2566
        %2568 = vadd.xlane.f32.xlu0 %v2537
        %v2569 = vpop.xlane.xlu0 %2568
        %2570 = vadd.xlane.f32.xlu0 %v2539
        %v2571 = vpop.xlane.xlu0 %2570
        %2572 = vadd.xlane.f32.xlu0 %v2541
        %v2573 = vpop.xlane.xlu0 %2572
        %v2574 = vpack.c.bf16 %v2513, %v2511
        %v2575 = vpack.c.bf16 %v2517, %v2515
        %v2576 = vpack.c.bf16 %v2521, %v2519
        %v2577 = vpack.c.bf16 %v2525, %v2523
        %v2578 = vpack.c.bf16 %v2529, %v2527
        %v2579 = vpack.c.bf16 %v2533, %v2531
        %v2580 = vpack.c.bf16 %v2537, %v2535
        %v2581 = vpack.c.bf16 %v2541, %v2539
        %2582 = vmatprep.subr.bf16.mxu0 0
        %2583 = vmatpush1.bf16.msra.mxu0 %v1990
        %2584 = vmatprep.subr.bf16.mxu0 0
        %2585 = vmatpush1.bf16.msra.mxu0 %v1992
        %2586 = vmatprep.subr.bf16.mxu0 0
        %2587 = vmatpush1.bf16.msra.mxu0 %v1994
        %2588 = vmatprep.subr.bf16.mxu0 0
        %2589 = vmatpush1.bf16.msra.mxu0 %v1996
        %2590 = vmatprep.subr.bf16.mxu0 0
        %2591 = vmatpush1.bf16.msra.mxu0 %v1998
        %2592 = vmatprep.subr.bf16.mxu0 0
        %2593 = vmatpush1.bf16.msra.mxu0 %v2000
        %2594 = vmatprep.subr.bf16.mxu0 0
        %2595 = vmatpush1.bf16.msra.mxu0 %v2002
        %2596 = vmatprep.subr.bf16.mxu0 0
        %2597 = vmatpush1.bf16.msra.mxu0 %v2004
        %2598 = vmatprep.subr.bf16.mxu0 0
        %2599 = vmatpush1.bf16.msra.mxu0 0
        %2600 = vmatprep.subr.bf16.mxu0 0
        %2601 = vmatpush1.bf16.msra.mxu0 0
        %2602 = vmatprep.subr.bf16.mxu0 0
        %2603 = vmatpush1.bf16.msra.mxu0 0
        %2604 = vmatprep.subr.bf16.mxu0 0
        %2605 = vmatpush1.bf16.msra.mxu0 0
        %2606 = vmatprep.subr.bf16.mxu0 0
        %2607 = vmatpush1.bf16.msra.mxu0 0
        %2608 = vmatprep.subr.bf16.mxu0 0
        %2609 = vmatpush1.bf16.msra.mxu0 0
        %2610 = vmatprep.subr.bf16.mxu0 0
        %2611 = vmatpush1.bf16.msra.mxu0 0
        %2612 = vmatprep.subr.bf16.mxu0 0
        %2613 = vmatpush1.bf16.msra.mxu0 0
        %2614 = vmatprep.mubr.bf16.mxu0 0
        %2615 = vmatmul.mubr.bf16.gmra.mrb[0].mxu0 %v2574
        %v2616 = vpop.f32.mrb[0].mxu0
        %v2617 = vadd.f32 0.0, %v2616
        %v2618 = vpop.f32.mrb[0].mxu0
        %v2619 = vpop.f32.mrb[0].mxu0
        %v2620 = vadd.f32 0.0, %v2619
        %v2621 = vpop.f32.mrb[0].mxu0
        %2622 = vmatprep.mubr.bf16.mxu0 0
        %2623 = vmatmul.mubr.bf16.gmra.mrb[0].mxu0 %v2575
        %v2624 = vpop.f32.mrb[0].mxu0
        %v2625 = vadd.f32 0.0, %v2624
        %v2626 = vpop.f32.mrb[0].mxu0
        %v2627 = vpop.f32.mrb[0].mxu0
        %v2628 = vadd.f32 0.0, %v2627
        %v2629 = vpop.f32.mrb[0].mxu0
        %2630 = vmatprep.mubr.bf16.mxu0 0
        %2631 = vmatmul.mubr.bf16.gmra.mrb[0].mxu0 %v2576
        %v2632 = vpop.f32.mrb[0].mxu0
        %v2633 = vadd.f32 0.0, %v2632
        %v2634 = vpop.f32.mrb[0].mxu0
        %v2635 = vpop.f32.mrb[0].mxu0
        %v2636 = vadd.f32 0.0, %v2635
        %v2637 = vpop.f32.mrb[0].mxu0
        %2638 = vmatprep.mubr.bf16.mxu0 0
        %2639 = vmatmul.mubr.bf16.gmra.mrb[0].mxu0 %v2577
        %v2640 = vpop.f32.mrb[0].mxu0
        %v2641 = vadd.f32 0.0, %v2640
        %v2642 = vpop.f32.mrb[0].mxu0
        %v2643 = vpop.f32.mrb[0].mxu0
        %v2644 = vadd.f32 0.0, %v2643
        %v2645 = vpop.f32.mrb[0].mxu0
        %2646 = vmatprep.mubr.bf16.mxu0 0
        %2647 = vmatmul.mubr.bf16.gmra.mrb[0].mxu0 %v2578
        %v2648 = vpop.f32.mrb[0].mxu0
        %v2649 = vadd.f32 0.0, %v2648
        %v2650 = vpop.f32.mrb[0].mxu0
        %v2651 = vpop.f32.mrb[0].mxu0
        %v2652 = vadd.f32 0.0, %v2651
        %v2653 = vpop.f32.mrb[0].mxu0
        %2654 = vmatprep.mubr.bf16.mxu0 0
        %2655 = vmatmul.mubr.bf16.gmra.mrb[0].mxu0 %v2579
        %v2656 = vpop.f32.mrb[0].mxu0
        %v2657 = vadd.f32 0.0, %v2656
        %v2658 = vpop.f32.mrb[0].mxu0
        %v2659 = vpop.f32.mrb[0].mxu0
        %v2660 = vadd.f32 0.0, %v2659
        %v2661 = vpop.f32.mrb[0].mxu0
        %2662 = vmatprep.mubr.bf16.mxu0 0
        %2663 = vmatmul.mubr.bf16.gmra.mrb[0].mxu0 %v2580
        %v2664 = vpop.f32.mrb[0].mxu0
        %v2665 = vadd.f32 0.0, %v2664
        %v2666 = vpop.f32.mrb[0].mxu0
        %v2667 = vpop.f32.mrb[0].mxu0
        %v2668 = vadd.f32 0.0, %v2667
        %v2669 = vpop.f32.mrb[0].mxu0
        %2670 = vmatprep.mubr.bf16.mxu0 0
        %2671 = vmatmul.mubr.bf16.gmra.mrb[0].mxu0 %v2581
        %v2672 = vpop.f32.mrb[0].mxu0
        %v2673 = vadd.f32 0.0, %v2672
        %v2674 = vpop.f32.mrb[0].mxu0
        %v2675 = vpop.f32.mrb[0].mxu0
        %v2676 = vadd.f32 0.0, %v2675
        %v2677 = vpop.f32.mrb[0].mxu0
        %2678 = vdwg.mxu0
        %v2679 = vrcp.pop %v2543
        %v2680 = vrcp.pop %v2545
        %v2681 = vrcp.pop %v2547
        %v2682 = vrcp.pop %v2549
        %v2683 = vrcp.pop %v2551
        %v2684 = vrcp.pop %v2553
        %v2685 = vrcp.pop %v2555
        %v2686 = vrcp.pop %v2557
        %v2687 = vrcp.pop %v2559
        %v2688 = vrcp.pop %v2561
        %v2689 = vrcp.pop %v2563
        %v2690 = vrcp.pop %v2565
        %v2691 = vrcp.pop %v2567
        %v2692 = vrcp.pop %v2569
        %v2693 = vrcp.pop %v2571
        %v2694 = vrcp.pop %v2573
        %v2695 = vmul.f32 %v2617, %v2679
        %v2696 = vmul.f32 %v2620, %v2680
        %v2697 = vmul.f32 %v2625, %v2681
        %v2698 = vmul.f32 %v2628, %v2682
        %v2699 = vmul.f32 %v2633, %v2683
        %v2700 = vmul.f32 %v2636, %v2684
        %v2701 = vmul.f32 %v2641, %v2685
        %v2702 = vmul.f32 %v2644, %v2686
        %v2703 = vmul.f32 %v2649, %v2687
        %v2704 = vmul.f32 %v2652, %v2688
        %v2705 = vmul.f32 %v2657, %v2689
        %v2706 = vmul.f32 %v2660, %v2690
        %v2707 = vmul.f32 %v2665, %v2691
        %v2708 = vmul.f32 %v2668, %v2692
        %v2709 = vmul.f32 %v2673, %v2693
        %v2710 = vmul.f32 %v2676, %v2694
        %v2711 = vpack.c.bf16 %v2696, %v2695
        %v2712 = vpack.c.bf16 %v2698, %v2697
        %v2713 = vpack.c.bf16 %v2700, %v2699
        %v2714 = vpack.c.bf16 %v2702, %v2701
        %v2715 = vpack.c.bf16 %v2704, %v2703
        %v2716 = vpack.c.bf16 %v2706, %v2705
        %v2717 = vpack.c.bf16 %v2708, %v2707
        %v2718 = vpack.c.bf16 %v2710, %v2709
        %v2719 = vld [vmem:[#allocation11] sm:$0xf]
        %v2720 = vld [vmem:[#allocation11 + $0x4] sm:$0xf]
        %v2721 = vld [vmem:[#allocation11 + $0x8] sm:$0xf]
        %v2722 = vld [vmem:[#allocation11 + $0xc] sm:$0xf]
        %v2723 = vld [vmem:[#allocation11 + $0x10] sm:$0xf]
        %v2724 = vld [vmem:[#allocation11 + $0x14] sm:$0xf]
        %v2725 = vld [vmem:[#allocation11 + $0x18] sm:$0xf]
        %v2726 = vld [vmem:[#allocation11 + $0x1c] sm:$0xf]
        %v2727 = vld [vmem:[#allocation11 + $0x20] sm:$0xf]
        %v2728 = vld [vmem:[#allocation11 + $0x24] sm:$0xf]
        %v2729 = vld [vmem:[#allocation11 + $0x28] sm:$0xf]
        %v2730 = vld [vmem:[#allocation11 + $0x2c] sm:$0xf]
        %v2731 = vld [vmem:[#allocation11 + $0x30] sm:$0xf]
        %v2732 = vld [vmem:[#allocation11 + $0x34] sm:$0xf]
        %v2733 = vld [vmem:[#allocation11 + $0x38] sm:$0xf]
        %v2734 = vld [vmem:[#allocation11 + $0x3c] sm:$0xf]
        %v2735 = vld [vmem:[#allocation11 + $0x40] sm:$0xf]
        %v2736 = vld [vmem:[#allocation11 + $0x44] sm:$0xf]
        %v2737 = vld [vmem:[#allocation11 + $0x48] sm:$0xf]
        %v2738 = vld [vmem:[#allocation11 + $0x4c] sm:$0xf]
        %v2739 = vld [vmem:[#allocation11 + $0x50] sm:$0xf]
        %v2740 = vld [vmem:[#allocation11 + $0x54] sm:$0xf]
        %v2741 = vld [vmem:[#allocation11 + $0x58] sm:$0xf]
        %v2742 = vld [vmem:[#allocation11 + $0x5c] sm:$0xf]
        %v2743 = vld [vmem:[#allocation11 + $0x60] sm:$0xf]
        %v2744 = vld [vmem:[#allocation11 + $0x64] sm:$0xf]
        %v2745 = vld [vmem:[#allocation11 + $0x68] sm:$0xf]
        %v2746 = vld [vmem:[#allocation11 + $0x6c] sm:$0xf]
        %v2747 = vld [vmem:[#allocation11 + $0x70] sm:$0xf]
        %v2748 = vld [vmem:[#allocation11 + $0x74] sm:$0xf]
        %v2749 = vld [vmem:[#allocation11 + $0x78] sm:$0xf]
        %v2750 = vld [vmem:[#allocation11 + $0x7c] sm:$0xf]
        %v2751 = vld [vmem:[%s13] sm:$0x1]
        %v2753 = vlaneseq
        %v2754 = vshrl.u32 %v2753, 7
        %v2755 = vsub.s32 0, %v2754
        %v2756 = vrot.slane %v2751, %v2755
        %v2790 = vunpack.c.l.b16 %v2719
        %v2791 = vunpack.c.l.b16 %v2720
        %v2792 = vunpack.c.l.b16 %v2721
        %v2793 = vunpack.c.l.b16 %v2722
        %v2794 = vunpack.c.l.b16 %v2723
        %v2795 = vunpack.c.l.b16 %v2724
        %v2796 = vunpack.c.l.b16 %v2725
        %v2797 = vunpack.c.l.b16 %v2726
        %v2798 = vunpack.c.l.b16 %v2727
        %v2799 = vunpack.c.l.b16 %v2728
        %v2800 = vunpack.c.l.b16 %v2729
        %v2801 = vunpack.c.l.b16 %v2730
        %v2802 = vunpack.c.l.b16 %v2731
        %v2803 = vunpack.c.l.b16 %v2732
        %v2804 = vunpack.c.l.b16 %v2733
        %v2805 = vunpack.c.l.b16 %v2734
        %v2806 = vunpack.c.l.b16 %v2735
        %v2807 = vunpack.c.l.b16 %v2736
        %v2808 = vunpack.c.l.b16 %v2737
        %v2809 = vunpack.c.l.b16 %v2738
        %v2810 = vunpack.c.l.b16 %v2739
        %v2811 = vunpack.c.l.b16 %v2740
        %v2812 = vunpack.c.l.b16 %v2741
        %v2813 = vunpack.c.l.b16 %v2742
        %v2814 = vunpack.c.l.b16 %v2743
        %v2815 = vunpack.c.l.b16 %v2744
        %v2816 = vunpack.c.l.b16 %v2745
        %v2817 = vunpack.c.l.b16 %v2746
        %v2818 = vunpack.c.l.b16 %v2747
        %v2819 = vunpack.c.l.b16 %v2748
        %v2820 = vunpack.c.l.b16 %v2749
        %v2821 = vunpack.c.l.b16 %v2750
        %v2822 = vpack.c.b16 %v2791, %v2790
        %v2823 = vpack.c.b16 %v2793, %v2792
        %v2824 = vpack.c.b16 %v2795, %v2794
        %v2825 = vpack.c.b16 %v2797, %v2796
        %v2826 = vpack.c.b16 %v2799, %v2798
        %v2827 = vpack.c.b16 %v2801, %v2800
        %v2828 = vpack.c.b16 %v2803, %v2802
        %v2829 = vpack.c.b16 %v2805, %v2804
        %v2830 = vpack.c.b16 %v2807, %v2806
        %v2831 = vpack.c.b16 %v2809, %v2808
        %v2832 = vpack.c.b16 %v2811, %v2810
        %v2833 = vpack.c.b16 %v2813, %v2812
        %v2834 = vpack.c.b16 %v2815, %v2814
        %v2835 = vpack.c.b16 %v2817, %v2816
        %v2836 = vpack.c.b16 %v2819, %v2818
        %v2837 = vpack.c.b16 %v2821, %v2820
        %2854 = vmatprep.subr.bf16.mxu0 0
        %2855 = vmatpush1.bf16.msra.mxu0 %v2822
        %2856 = vmatprep.subr.bf16.mxu0 0
        %2857 = vmatpush1.bf16.msra.mxu0 %v2823
        %2858 = vmatprep.subr.bf16.mxu0 0
        %2859 = vmatpush1.bf16.msra.mxu0 %v2824
        %2860 = vmatprep.subr.bf16.mxu0 0
        %2861 = vmatpush1.bf16.msra.mxu0 %v2825
        %2862 = vmatprep.subr.bf16.mxu0 0
        %2863 = vmatpush1.bf16.msra.mxu0 %v2826
        %2864 = vmatprep.subr.bf16.mxu0 0
        %2865 = vmatpush1.bf16.msra.mxu0 %v2827
        %2866 = vmatprep.subr.bf16.mxu0 0
        %2867 = vmatpush1.bf16.msra.mxu0 %v2828
        %2868 = vmatprep.subr.bf16.mxu0 0
        %2869 = vmatpush1.bf16.msra.mxu0 %v2829
        %2870 = vmatprep.subr.bf16.mxu0 0
        %2871 = vmatpush1.bf16.msra.mxu0 %v2830
        %2872 = vmatprep.subr.bf16.mxu0 0
        %2873 = vmatpush1.bf16.msra.mxu0 %v2831
        %2874 = vmatprep.subr.bf16.mxu0 0
        %2875 = vmatpush1.bf16.msra.mxu0 %v2832
        %2876 = vmatprep.subr.bf16.mxu0 0
        %2877 = vmatpush1.bf16.msra.mxu0 %v2833
        %2878 = vmatprep.subr.bf16.mxu0 0
        %2879 = vmatpush1.bf16.msra.mxu0 %v2834
        %2880 = vmatprep.subr.bf16.mxu0 0
        %2881 = vmatpush1.bf16.msra.mxu0 %v2835
        %2882 = vmatprep.subr.bf16.mxu0 0
        %2883 = vmatpush1.bf16.msra.mxu0 %v2836
        %2884 = vmatprep.subr.bf16.mxu0 0
        %2885 = vmatpush1.bf16.msra.mxu0 %v2837
        %2886 = vmatprep.mubr.bf16.mxu0 %v2711
        %2887 = vmatmul.mubr.bf16.gmra.mrb[0].mxu0 %v2357
        %v2888 = vpop.f32.mrb[0].mxu0
        %v2889 = vadd.f32 %v2756, %v2888
        %v2890 = vpop.f32.mrb[0].mxu0
        %v2891 = vpop.f32.mrb[0].mxu0
        %v2892 = vadd.f32 %v2756, %v2891
        %v2893 = vpop.f32.mrb[0].mxu0
        %2894 = vmatprep.mubr.bf16.mxu0 %v2712
        %2895 = vmatmul.mubr.bf16.gmra.mrb[0].mxu0 %v2358
        %v2896 = vpop.f32.mrb[0].mxu0
        %v2897 = vadd.f32 %v2756, %v2896
        %v2898 = vpop.f32.mrb[0].mxu0
        %v2899 = vpop.f32.mrb[0].mxu0
        %v2900 = vadd.f32 %v2756, %v2899
        %v2901 = vpop.f32.mrb[0].mxu0
        %2902 = vmatprep.mubr.bf16.mxu0 %v2713
        %2903 = vmatmul.mubr.bf16.gmra.mrb[0].mxu0 %v2359
        %v2904 = vpop.f32.mrb[0].mxu0
        %v2905 = vadd.f32 %v2756, %v2904
        %v2906 = vpop.f32.mrb[0].mxu0
        %v2907 = vpop.f32.mrb[0].mxu0
        %v2908 = vadd.f32 %v2756, %v2907
        %v2909 = vpop.f32.mrb[0].mxu0
        %2910 = vmatprep.mubr.bf16.mxu0 %v2714
        %2911 = vmatmul.mubr.bf16.gmra.mrb[0].mxu0 %v2360
        %v2912 = vpop.f32.mrb[0].mxu0
        %v2913 = vadd.f32 %v2756, %v2912
        %v2914 = vpop.f32.mrb[0].mxu0
        %v2915 = vpop.f32.mrb[0].mxu0
        %v2916 = vadd.f32 %v2756, %v2915
        %v2917 = vpop.f32.mrb[0].mxu0
        %2918 = vmatprep.mubr.bf16.mxu0 %v2715
        %2919 = vmatmul.mubr.bf16.gmra.mrb[0].mxu0 %v2361
        %v2920 = vpop.f32.mrb[0].mxu0
        %v2921 = vadd.f32 %v2756, %v2920
        %v2922 = vpop.f32.mrb[0].mxu0
        %v2923 = vpop.f32.mrb[0].mxu0
        %v2924 = vadd.f32 %v2756, %v2923
        %v2925 = vpop.f32.mrb[0].mxu0
        %2926 = vmatprep.mubr.bf16.mxu0 %v2716
        %2927 = vmatmul.mubr.bf16.gmra.mrb[0].mxu0 %v2362
        %v2928 = vpop.f32.mrb[0].mxu0
        %v2929 = vadd.f32 %v2756, %v2928
        %v2930 = vpop.f32.mrb[0].mxu0
        %v2931 = vpop.f32.mrb[0].mxu0
        %v2932 = vadd.f32 %v2756, %v2931
        %v2933 = vpop.f32.mrb[0].mxu0
        %2934 = vmatprep.mubr.bf16.mxu0 %v2717
        %2935 = vmatmul.mubr.bf16.gmra.mrb[0].mxu0 %v2363
        %v2936 = vpop.f32.mrb[0].mxu0
        %v2937 = vadd.f32 %v2756, %v2936
        %v2938 = vpop.f32.mrb[0].mxu0
        %v2939 = vpop.f32.mrb[0].mxu0
        %v2940 = vadd.f32 %v2756, %v2939
        %v2941 = vpop.f32.mrb[0].mxu0
        %2942 = vmatprep.mubr.bf16.mxu0 %v2718
        %2943 = vmatmul.mubr.bf16.gmra.mrb[0].mxu0 %v2364
        %v2944 = vpop.f32.mrb[0].mxu0
        %v2945 = vadd.f32 %v2756, %v2944
        %v2946 = vpop.f32.mrb[0].mxu0
        %v2947 = vpop.f32.mrb[0].mxu0
        %v2948 = vadd.f32 %v2756, %v2947
        %v2949 = vpop.f32.mrb[0].mxu0
        %2950 = vdwg.mxu0
        %v2951 = vadd.f32 %v1270, %v2889
        %v2952 = vadd.f32 %v1271, %v2892
        %v2953 = vadd.f32 %v1272, %v2897
        %v2954 = vadd.f32 %v1273, %v2900
        %v2955 = vadd.f32 %v1274, %v2905
        %v2956 = vadd.f32 %v1275, %v2908
        %v2957 = vadd.f32 %v1276, %v2913
        %v2958 = vadd.f32 %v1277, %v2916
        %v2959 = vadd.f32 %v1278, %v2921
        %v2960 = vadd.f32 %v1279, %v2924
        %v2961 = vadd.f32 %v1280, %v2929
        %v2962 = vadd.f32 %v1281, %v2932
        %v2963 = vadd.f32 %v1282, %v2937
        %v2964 = vadd.f32 %v1283, %v2940
        %v2965 = vadd.f32 %v1284, %v2945
        %v2966 = vadd.f32 %v1285, %v2948
        %v2967 = vld [vmem:[%s14] sm:$0x1]
        %v2968 = vld [vmem:[%s15] sm:$0x1]
        %2969 = vadd.xlane.f32.xlu0 %v2951
        %v2970 = vpop.xlane.xlu0 %2969
        %2971 = vadd.xlane.f32.xlu0 %v2952
        %v2972 = vpop.xlane.xlu0 %2971
        %2973 = vadd.xlane.f32.xlu0 %v2953
        %v2974 = vpop.xlane.xlu0 %2973
        %2975 = vadd.xlane.f32.xlu0 %v2954
        %v2976 = vpop.xlane.xlu0 %2975
        %2977 = vadd.xlane.f32.xlu0 %v2955
        %v2978 = vpop.xlane.xlu0 %2977
        %2979 = vadd.xlane.f32.xlu0 %v2956
        %v2980 = vpop.xlane.xlu0 %2979
        %2981 = vadd.xlane.f32.xlu0 %v2957
        %v2982 = vpop.xlane.xlu0 %2981
        %2983 = vadd.xlane.f32.xlu0 %v2958
        %v2984 = vpop.xlane.xlu0 %2983
        %2985 = vadd.xlane.f32.xlu0 %v2959
        %v2986 = vpop.xlane.xlu0 %2985
        %2987 = vadd.xlane.f32.xlu0 %v2960
        %v2988 = vpop.xlane.xlu0 %2987
        %2989 = vadd.xlane.f32.xlu0 %v2961
        %v2990 = vpop.xlane.xlu0 %2989
        %2991 = vadd.xlane.f32.xlu0 %v2962
        %v2992 = vpop.xlane.xlu0 %2991
        %2993 = vadd.xlane.f32.xlu0 %v2963
        %v2994 = vpop.xlane.xlu0 %2993
        %2995 = vadd.xlane.f32.xlu0 %v2964
        %v2996 = vpop.xlane.xlu0 %2995
        %2997 = vadd.xlane.f32.xlu0 %v2965
        %v2998 = vpop.xlane.xlu0 %2997
        %2999 = vadd.xlane.f32.xlu0 %v2966
        %v3000 = vpop.xlane.xlu0 %2999
        %v3001 = vmul.f32 %v2970, 0.03125
        %v3002 = vmul.f32 %v2972, 0.03125
        %v3003 = vmul.f32 %v2974, 0.03125
        %v3004 = vmul.f32 %v2976, 0.03125
        %v3005 = vmul.f32 %v2978, 0.03125
        %v3006 = vmul.f32 %v2980, 0.03125
        %v3007 = vmul.f32 %v2982, 0.03125
        %v3008 = vmul.f32 %v2984, 0.03125
        %v3009 = vmul.f32 %v2986, 0.03125
        %v3010 = vmul.f32 %v2988, 0.03125
        %v3011 = vmul.f32 %v2990, 0.03125
        %v3012 = vmul.f32 %v2992, 0.03125
        %v3013 = vmul.f32 %v2994, 0.03125
        %v3014 = vmul.f32 %v2996, 0.03125
        %v3015 = vmul.f32 %v2998, 0.03125
        %v3016 = vmul.f32 %v3000, 0.03125
        %v3017 = vmul.f32 %v2951, %v2951
        %v3018 = vmul.f32 %v2952, %v2952
        %v3019 = vmul.f32 %v2953, %v2953
        %v3020 = vmul.f32 %v2954, %v2954
        %v3021 = vmul.f32 %v2955, %v2955
        %v3022 = vmul.f32 %v2956, %v2956
        %v3023 = vmul.f32 %v2957, %v2957
        %v3024 = vmul.f32 %v2958, %v2958
        %v3025 = vmul.f32 %v2959, %v2959
        %v3026 = vmul.f32 %v2960, %v2960
        %v3027 = vmul.f32 %v2961, %v2961
        %v3028 = vmul.f32 %v2962, %v2962
        %v3029 = vmul.f32 %v2963, %v2963
        %v3030 = vmul.f32 %v2964, %v2964
        %v3031 = vmul.f32 %v2965, %v2965
        %v3032 = vmul.f32 %v2966, %v2966
        %3033 = vadd.xlane.f32.xlu0 %v3017
        %v3034 = vpop.xlane.xlu0 %3033
        %3035 = vadd.xlane.f32.xlu0 %v3018
        %v3036 = vpop.xlane.xlu0 %3035
        %3037 = vadd.xlane.f32.xlu0 %v3019
        %v3038 = vpop.xlane.xlu0 %3037
        %3039 = vadd.xlane.f32.xlu0 %v3020
        %v3040 = vpop.xlane.xlu0 %3039
        %3041 = vadd.xlane.f32.xlu0 %v3021
        %v3042 = vpop.xlane.xlu0 %3041
        %3043 = vadd.xlane.f32.xlu0 %v3022
        %v3044 = vpop.xlane.xlu0 %3043
        %3045 = vadd.xlane.f32.xlu0 %v3023
        %v3046 = vpop.xlane.xlu0 %3045
        %3047 = vadd.xlane.f32.xlu0 %v3024
        %v3048 = vpop.xlane.xlu0 %3047
        %3049 = vadd.xlane.f32.xlu0 %v3025
        %v3050 = vpop.xlane.xlu0 %3049
        %3051 = vadd.xlane.f32.xlu0 %v3026
        %v3052 = vpop.xlane.xlu0 %3051
        %3053 = vadd.xlane.f32.xlu0 %v3027
        %v3054 = vpop.xlane.xlu0 %3053
        %3055 = vadd.xlane.f32.xlu0 %v3028
        %v3056 = vpop.xlane.xlu0 %3055
        %3057 = vadd.xlane.f32.xlu0 %v3029
        %v3058 = vpop.xlane.xlu0 %3057
        %3059 = vadd.xlane.f32.xlu0 %v3030
        %v3060 = vpop.xlane.xlu0 %3059
        %3061 = vadd.xlane.f32.xlu0 %v3031
        %v3062 = vpop.xlane.xlu0 %3061
        %3063 = vadd.xlane.f32.xlu0 %v3032
        %v3064 = vpop.xlane.xlu0 %3063
        %v3065 = vmul.f32 %v3034, 0.03125
        %v3066 = vmul.f32 %v3036, 0.03125
        %v3067 = vmul.f32 %v3038, 0.03125
        %v3068 = vmul.f32 %v3040, 0.03125
        %v3069 = vmul.f32 %v3042, 0.03125
        %v3070 = vmul.f32 %v3044, 0.03125
        %v3071 = vmul.f32 %v3046, 0.03125
        %v3072 = vmul.f32 %v3048, 0.03125
        %v3073 = vmul.f32 %v3050, 0.03125
        %v3074 = vmul.f32 %v3052, 0.03125
        %v3075 = vmul.f32 %v3054, 0.03125
        %v3076 = vmul.f32 %v3056, 0.03125
        %v3077 = vmul.f32 %v3058, 0.03125
        %v3078 = vmul.f32 %v3060, 0.03125
        %v3079 = vmul.f32 %v3062, 0.03125
        %v3080 = vmul.f32 %v3064, 0.03125
        %v3081 = vmul.f32 %v3001, %v3001
        %v3082 = vmul.f32 %v3002, %v3002
        %v3083 = vmul.f32 %v3003, %v3003
        %v3084 = vmul.f32 %v3004, %v3004
        %v3085 = vmul.f32 %v3005, %v3005
        %v3086 = vmul.f32 %v3006, %v3006
        %v3087 = vmul.f32 %v3007, %v3007
        %v3088 = vmul.f32 %v3008, %v3008
        %v3089 = vmul.f32 %v3009, %v3009
        %v3090 = vmul.f32 %v3010, %v3010
        %v3091 = vmul.f32 %v3011, %v3011
        %v3092 = vmul.f32 %v3012, %v3012
        %v3093 = vmul.f32 %v3013, %v3013
        %v3094 = vmul.f32 %v3014, %v3014
        %v3095 = vmul.f32 %v3015, %v3015
        %v3096 = vmul.f32 %v3016, %v3016
        %v3097 = vsub.f32 %v3065, %v3081
        %v3098 = vsub.f32 %v3066, %v3082
        %v3099 = vsub.f32 %v3067, %v3083
        %v3100 = vsub.f32 %v3068, %v3084
        %v3101 = vsub.f32 %v3069, %v3085
        %v3102 = vsub.f32 %v3070, %v3086
        %v3103 = vsub.f32 %v3071, %v3087
        %v3104 = vsub.f32 %v3072, %v3088
        %v3105 = vsub.f32 %v3073, %v3089
        %v3106 = vsub.f32 %v3074, %v3090
        %v3107 = vsub.f32 %v3075, %v3091
        %v3108 = vsub.f32 %v3076, %v3092
        %v3109 = vsub.f32 %v3077, %v3093
        %v3110 = vsub.f32 %v3078, %v3094
        %v3111 = vsub.f32 %v3079, %v3095
        %v3112 = vsub.f32 %v3080, %v3096
        %v3113 = vsub.f32 %v2951, %v3001
        %v3114 = vsub.f32 %v2952, %v3002
        %v3115 = vsub.f32 %v2953, %v3003
        %v3116 = vsub.f32 %v2954, %v3004
        %v3117 = vsub.f32 %v2955, %v3005
        %v3118 = vsub.f32 %v2956, %v3006
        %v3119 = vsub.f32 %v2957, %v3007
        %v3120 = vsub.f32 %v2958, %v3008
        %v3121 = vsub.f32 %v2959, %v3009
        %v3122 = vsub.f32 %v2960, %v3010
        %v3123 = vsub.f32 %v2961, %v3011
        %v3124 = vsub.f32 %v2962, %v3012
        %v3125 = vsub.f32 %v2963, %v3013
        %v3126 = vsub.f32 %v2964, %v3014
        %v3127 = vsub.f32 %v2965, %v3015
        %v3128 = vsub.f32 %v2966, %v3016
        %v3129 = vadd.f32 %v3097, 1e-05
        %v3130 = vadd.f32 %v3098, 1e-05
        %v3131 = vadd.f32 %v3099, 1e-05
        %v3132 = vadd.f32 %v3100, 1e-05
        %v3133 = vadd.f32 %v3101, 1e-05
        %v3134 = vadd.f32 %v3102, 1e-05
        %v3135 = vadd.f32 %v3103, 1e-05
        %v3136 = vadd.f32 %v3104, 1e-05
        %v3137 = vadd.f32 %v3105, 1e-05
        %v3138 = vadd.f32 %v3106, 1e-05
        %v3139 = vadd.f32 %v3107, 1e-05
        %v3140 = vadd.f32 %v3108, 1e-05
        %v3141 = vadd.f32 %v3109, 1e-05
        %v3142 = vadd.f32 %v3110, 1e-05
        %v3143 = vadd.f32 %v3111, 1e-05
        %v3144 = vadd.f32 %v3112, 1e-05
        %v3145 = vrsqrt.pop %v3129
        %v3146 = vrsqrt.pop %v3130
        %v3147 = vrsqrt.pop %v3131
        %v3148 = vrsqrt.pop %v3132
        %v3149 = vrsqrt.pop %v3133
        %v3150 = vrsqrt.pop %v3134
        %v3151 = vrsqrt.pop %v3135
        %v3152 = vrsqrt.pop %v3136
        %v3153 = vrsqrt.pop %v3137
        %v3154 = vrsqrt.pop %v3138
        %v3155 = vrsqrt.pop %v3139
        %v3156 = vrsqrt.pop %v3140
        %v3157 = vrsqrt.pop %v3141
        %v3158 = vrsqrt.pop %v3142
        %v3159 = vrsqrt.pop %v3143
        %v3160 = vrsqrt.pop %v3144
        %v3161 = vmul.f32 %v3113, %v3145
        %v3162 = vmul.f32 %v3114, %v3146
        %v3163 = vmul.f32 %v3115, %v3147
        %v3164 = vmul.f32 %v3116, %v3148
        %v3165 = vmul.f32 %v3117, %v3149
        %v3166 = vmul.f32 %v3118, %v3150
        %v3167 = vmul.f32 %v3119, %v3151
        %v3168 = vmul.f32 %v3120, %v3152
        %v3169 = vmul.f32 %v3121, %v3153
        %v3170 = vmul.f32 %v3122, %v3154
        %v3171 = vmul.f32 %v3123, %v3155
        %v3172 = vmul.f32 %v3124, %v3156
        %v3173 = vmul.f32 %v3125, %v3157
        %v3174 = vmul.f32 %v3126, %v3158
        %v3175 = vmul.f32 %v3127, %v3159
        %v3176 = vmul.f32 %v3128, %v3160
        %v3178 = vlaneseq
        %v3179 = vshrl.u32 %v3178, 7
        %v3180 = vsub.s32 0, %v3179
        %v3181 = vrot.slane %v2967, %v3180
        %v3183 = vmul.f32 %v3161, %v3181
        %v3184 = vmul.f32 %v3162, %v3181
        %v3185 = vmul.f32 %v3163, %v3181
        %v3186 = vmul.f32 %v3164, %v3181
        %v3187 = vmul.f32 %v3165, %v3181
        %v3188 = vmul.f32 %v3166, %v3181
        %v3189 = vmul.f32 %v3167, %v3181
        %v3190 = vmul.f32 %v3168, %v3181
        %v3191 = vmul.f32 %v3169, %v3181
        %v3192 = vmul.f32 %v3170, %v3181
        %v3193 = vmul.f32 %v3171, %v3181
        %v3194 = vmul.f32 %v3172, %v3181
        %v3195 = vmul.f32 %v3173, %v3181
        %v3196 = vmul.f32 %v3174, %v3181
        %v3197 = vmul.f32 %v3175, %v3181
        %v3198 = vmul.f32 %v3176, %v3181
        %v3200 = vlaneseq
        %v3201 = vshrl.u32 %v3200, 7
        %v3202 = vsub.s32 0, %v3201
        %v3203 = vrot.slane %v2968, %v3202
        %v3205 = vadd.f32 %v3183, %v3203
        %v3206 = vadd.f32 %v3184, %v3203
        %v3207 = vadd.f32 %v3185, %v3203
        %v3208 = vadd.f32 %v3186, %v3203
        %v3209 = vadd.f32 %v3187, %v3203
        %v3210 = vadd.f32 %v3188, %v3203
        %v3211 = vadd.f32 %v3189, %v3203
        %v3212 = vadd.f32 %v3190, %v3203
        %v3213 = vadd.f32 %v3191, %v3203
        %v3214 = vadd.f32 %v3192, %v3203
        %v3215 = vadd.f32 %v3193, %v3203
        %v3216 = vadd.f32 %v3194, %v3203
        %v3217 = vadd.f32 %v3195, %v3203
        %v3218 = vadd.f32 %v3196, %v3203
        %v3219 = vadd.f32 %v3197, %v3203
        %v3220 = vadd.f32 %v3198, %v3203
        %v3221 = vlaneseq
        %v3222 = vshrl.u32 %v3221, 7
        %v3223 = vadd.s32 %v3222, 8
        %v3224 = vadd.s32 %v3222, 16
        %v3225 = vadd.s32 %v3222, 24
        %v3226 = vadd.s32 %v3222, 32
        %v3227 = vadd.s32 %v3222, 40
        %v3228 = vadd.s32 %v3222, 48
        %v3229 = vadd.s32 %v3222, 56
        %v3230 = vadd.s32 %v3222, 64
        %v3231 = vadd.s32 %v3222, 72
        %v3232 = vadd.s32 %v3222, 80
        %v3233 = vadd.s32 %v3222, 88
        %v3234 = vadd.s32 %v3222, 96
        %v3235 = vadd.s32 %v3222, 104
        %v3236 = vadd.s32 %v3222, 112
        %v3237 = vadd.s32 %v3222, 120
        %vm3238 = vcmp.gt.s32.totalorder %v3222, 0
        %vm3239 = vcmp.gt.s32.totalorder %v3223, 0
        %vm3240 = vcmp.gt.s32.totalorder %v3224, 0
        %vm3241 = vcmp.gt.s32.totalorder %v3225, 0
        %vm3242 = vcmp.gt.s32.totalorder %v3226, 0
        %vm3243 = vcmp.gt.s32.totalorder %v3227, 0
        %vm3244 = vcmp.gt.s32.totalorder %v3228, 0
        %vm3245 = vcmp.gt.s32.totalorder %v3229, 0
        %vm3246 = vcmp.gt.s32.totalorder %v3230, 0
        %vm3247 = vcmp.gt.s32.totalorder %v3231, 0
        %vm3248 = vcmp.gt.s32.totalorder %v3232, 0
        %vm3249 = vcmp.gt.s32.totalorder %v3233, 0
        %vm3250 = vcmp.gt.s32.totalorder %v3234, 0
        %vm3251 = vcmp.gt.s32.totalorder %v3235, 0
        %vm3252 = vcmp.gt.s32.totalorder %v3236, 0
        %vm3253 = vcmp.gt.s32.totalorder %v3237, 0
        %v3254 = vsel %vm3238, 1, 0
        %v3255 = vsel %vm3239, 1, 0
        %v3256 = vsel %vm3240, 1, 0
        %v3257 = vsel %vm3241, 1, 0
        %v3258 = vsel %vm3242, 1, 0
        %v3259 = vsel %vm3243, 1, 0
        %v3260 = vsel %vm3244, 1, 0
        %v3261 = vsel %vm3245, 1, 0
        %v3262 = vsel %vm3246, 1, 0
        %v3263 = vsel %vm3247, 1, 0
        %v3264 = vsel %vm3248, 1, 0
        %v3265 = vsel %vm3249, 1, 0
        %v3266 = vsel %vm3250, 1, 0
        %v3267 = vsel %vm3251, 1, 0
        %v3268 = vsel %vm3252, 1, 0
        %v3269 = vsel %vm3253, 1, 0
        %v3270 = vcvt.s32.f32 %v3254
        %v3271 = vcvt.s32.f32 %v3255
        %v3272 = vcvt.s32.f32 %v3256
        %v3273 = vcvt.s32.f32 %v3257
        %v3274 = vcvt.s32.f32 %v3258
        %v3275 = vcvt.s32.f32 %v3259
        %v3276 = vcvt.s32.f32 %v3260
        %v3277 = vcvt.s32.f32 %v3261
        %v3278 = vcvt.s32.f32 %v3262
        %v3279 = vcvt.s32.f32 %v3263
        %v3280 = vcvt.s32.f32 %v3264
        %v3281 = vcvt.s32.f32 %v3265
        %v3282 = vcvt.s32.f32 %v3266
        %v3283 = vcvt.s32.f32 %v3267
        %v3284 = vcvt.s32.f32 %v3268
        %v3285 = vcvt.s32.f32 %v3269
        %vm3286 = vcmp.lt.s32.totalorder %v3222, 127
        %vm3287 = vcmp.lt.s32.totalorder %v3223, 127
        %vm3288 = vcmp.lt.s32.totalorder %v3224, 127
        %vm3289 = vcmp.lt.s32.totalorder %v3225, 127
        %vm3290 = vcmp.lt.s32.totalorder %v3226, 127
        %vm3291 = vcmp.lt.s32.totalorder %v3227, 127
        %vm3292 = vcmp.lt.s32.totalorder %v3228, 127
        %vm3293 = vcmp.lt.s32.totalorder %v3229, 127
        %vm3294 = vcmp.lt.s32.totalorder %v3230, 127
        %vm3295 = vcmp.lt.s32.totalorder %v3231, 127
        %vm3296 = vcmp.lt.s32.totalorder %v3232, 127
        %vm3297 = vcmp.lt.s32.totalorder %v3233, 127
        %vm3298 = vcmp.lt.s32.totalorder %v3234, 127
        %vm3299 = vcmp.lt.s32.totalorder %v3235, 127
        %vm3300 = vcmp.lt.s32.totalorder %v3236, 127
        %vm3301 = vcmp.lt.s32.totalorder %v3237, 127
        %v3302 = vsel %vm3286, 1, 0
        %v3303 = vsel %vm3287, 1, 0
        %v3304 = vsel %vm3288, 1, 0
        %v3305 = vsel %vm3289, 1, 0
        %v3306 = vsel %vm3290, 1, 0
        %v3307 = vsel %vm3291, 1, 0
        %v3308 = vsel %vm3292, 1, 0
        %v3309 = vsel %vm3293, 1, 0
        %v3310 = vsel %vm3294, 1, 0
        %v3311 = vsel %vm3295, 1, 0
        %v3312 = vsel %vm3296, 1, 0
        %v3313 = vsel %vm3297, 1, 0
        %v3314 = vsel %vm3298, 1, 0
        %v3315 = vsel %vm3299, 1, 0
        %v3316 = vsel %vm3300, 1, 0
        %v3317 = vsel %vm3301, 1, 0
        %v3318 = vcvt.s32.f32 %v3302
        %v3319 = vcvt.s32.f32 %v3303
        %v3320 = vcvt.s32.f32 %v3304
        %v3321 = vcvt.s32.f32 %v3305
        %v3322 = vcvt.s32.f32 %v3306
        %v3323 = vcvt.s32.f32 %v3307
        %v3324 = vcvt.s32.f32 %v3308
        %v3325 = vcvt.s32.f32 %v3309
        %v3326 = vcvt.s32.f32 %v3310
        %v3327 = vcvt.s32.f32 %v3311
        %v3328 = vcvt.s32.f32 %v3312
        %v3329 = vcvt.s32.f32 %v3313
        %v3330 = vcvt.s32.f32 %v3314
        %v3331 = vcvt.s32.f32 %v3315
        %v3332 = vcvt.s32.f32 %v3316
        %v3333 = vcvt.s32.f32 %v3317
        %v3334 = vmul.f32 %v3205, %v1193
        %v3335 = vmul.f32 %v3206, %v1198
        %v3336 = vmul.f32 %v3207, %v1203
        %v3337 = vmul.f32 %v3208, %v1208
        %v3338 = vmul.f32 %v3209, %v1213
        %v3339 = vmul.f32 %v3210, %v1218
        %v3340 = vmul.f32 %v3211, %v1223
        %v3341 = vmul.f32 %v3212, %v1228
        %v3342 = vmul.f32 %v3213, %v1233
        %v3343 = vmul.f32 %v3214, %v1238
        %v3344 = vmul.f32 %v3215, %v1243
        %v3345 = vmul.f32 %v3216, %v1248
        %v3346 = vmul.f32 %v3217, %v1253
        %v3347 = vmul.f32 %v3218, %v1258
        %v3348 = vmul.f32 %v3219, %v1263
        %v3349 = vmul.f32 %v3220, %v1268
        %v3350 = vrot.slane %v3334, 7
        %v3351 = vrot.slane %v3335, 7
        %v3352 = vrot.slane %v3336, 7
        %v3353 = vrot.slane %v3337, 7
        %v3354 = vrot.slane %v3338, 7
        %v3355 = vrot.slane %v3339, 7
        %v3356 = vrot.slane %v3340, 7
        %v3357 = vrot.slane %v3341, 7
        %v3358 = vrot.slane %v3342, 7
        %v3359 = vrot.slane %v3343, 7
        %v3360 = vrot.slane %v3344, 7
        %v3361 = vrot.slane %v3345, 7
        %v3362 = vrot.slane %v3346, 7
        %v3363 = vrot.slane %v3347, 7
        %v3364 = vrot.slane %v3348, 7
        %v3365 = vrot.slane %v3349, 7
        %vm3366 = vcmp.lt.s32.totalorder %v3222, 1
        %v3367 = vsel %vm3366, %v3364, %v3365
        %v3368 = vsel %vm3366, %v3363, %v3364
        %v3369 = vsel %vm3366, %v3362, %v3363
        %v3370 = vsel %vm3366, %v3361, %v3362
        %v3371 = vsel %vm3366, %v3360, %v3361
        %v3372 = vsel %vm3366, %v3359, %v3360
        %v3373 = vsel %vm3366, %v3358, %v3359
        %v3374 = vsel %vm3366, %v3357, %v3358
        %v3375 = vsel %vm3366, %v3356, %v3357
        %v3376 = vsel %vm3366, %v3355, %v3356
        %v3377 = vsel %vm3366, %v3354, %v3355
        %v3378 = vsel %vm3366, %v3353, %v3354
        %v3379 = vsel %vm3366, %v3352, %v3353
        %v3380 = vsel %vm3366, %v3351, %v3352
        %v3381 = vsel %vm3366, %v3350, %v3351
        %v3382 = vsel %vm3366, %v3365, %v3350
        %v3383 = vmul.f32 %v3382, %v3270
        %v3384 = vmul.f32 %v3381, %v3271
        %v3385 = vmul.f32 %v3380, %v3272
        %v3386 = vmul.f32 %v3379, %v3273
        %v3387 = vmul.f32 %v3378, %v3274
        %v3388 = vmul.f32 %v3377, %v3275
        %v3389 = vmul.f32 %v3376, %v3276
        %v3390 = vmul.f32 %v3375, %v3277
        %v3391 = vmul.f32 %v3374, %v3278
        %v3392 = vmul.f32 %v3373, %v3279
        %v3393 = vmul.f32 %v3372, %v3280
        %v3394 = vmul.f32 %v3371, %v3281
        %v3395 = vmul.f32 %v3370, %v3282
        %v3396 = vmul.f32 %v3369, %v3283
        %v3397 = vmul.f32 %v3368, %v3284
        %v3398 = vmul.f32 %v3367, %v3285
        %v3399 = vrot.slane %v3334, 1
        %v3400 = vrot.slane %v3335, 1
        %v3401 = vrot.slane %v3336, 1
        %v3402 = vrot.slane %v3337, 1
        %v3403 = vrot.slane %v3338, 1
        %v3404 = vrot.slane %v3339, 1
        %v3405 = vrot.slane %v3340, 1
        %v3406 = vrot.slane %v3341, 1
        %v3407 = vrot.slane %v3342, 1
        %v3408 = vrot.slane %v3343, 1
        %v3409 = vrot.slane %v3344, 1
        %v3410 = vrot.slane %v3345, 1
        %v3411 = vrot.slane %v3346, 1
        %v3412 = vrot.slane %v3347, 1
        %v3413 = vrot.slane %v3348, 1
        %v3414 = vrot.slane %v3349, 1
        %vm3415 = vcmp.lt.s32.totalorder %v3222, 7
        %v3416 = vsel %vm3415, %v3413, %v3414
        %v3417 = vsel %vm3415, %v3412, %v3413
        %v3418 = vsel %vm3415, %v3411, %v3412
        %v3419 = vsel %vm3415, %v3410, %v3411
        %v3420 = vsel %vm3415, %v3409, %v3410
        %v3421 = vsel %vm3415, %v3408, %v3409
        %v3422 = vsel %vm3415, %v3407, %v3408
        %v3423 = vsel %vm3415, %v3406, %v3407
        %v3424 = vsel %vm3415, %v3405, %v3406
        %v3425 = vsel %vm3415, %v3404, %v3405
        %v3426 = vsel %vm3415, %v3403, %v3404
        %v3427 = vsel %vm3415, %v3402, %v3403
        %v3428 = vsel %vm3415, %v3401, %v3402
        %v3429 = vsel %vm3415, %v3400, %v3401
        %v3430 = vsel %vm3415, %v3399, %v3400
        %v3431 = vsel %vm3415, %v3414, %v3399
        %v3432 = vmul.f32 %v3430, %v3318
        %v3433 = vmul.f32 %v3429, %v3319
        %v3434 = vmul.f32 %v3428, %v3320
        %v3435 = vmul.f32 %v3427, %v3321
        %v3436 = vmul.f32 %v3426, %v3322
        %v3437 = vmul.f32 %v3425, %v3323
        %v3438 = vmul.f32 %v3424, %v3324
        %v3439 = vmul.f32 %v3423, %v3325
        %v3440 = vmul.f32 %v3422, %v3326
        %v3441 = vmul.f32 %v3421, %v3327
        %v3442 = vmul.f32 %v3420, %v3328
        %v3443 = vmul.f32 %v3419, %v3329
        %v3444 = vmul.f32 %v3418, %v3330
        %v3445 = vmul.f32 %v3417, %v3331
        %v3446 = vmul.f32 %v3416, %v3332
        %v3447 = vmul.f32 %v3431, %v3333
        %v3448 = vpack.c.bf16 %v3384, %v3383
        %v3449 = vpack.c.bf16 %v3335, %v3334
        %v3450 = vpack.c.bf16 %v3433, %v3432
        %v3451 = vpack.c.bf16 %v3386, %v3385
        %v3452 = vpack.c.bf16 %v3337, %v3336
        %v3453 = vpack.c.bf16 %v3435, %v3434
        %v3454 = vpack.c.bf16 %v3388, %v3387
        %v3455 = vpack.c.bf16 %v3339, %v3338
        %v3456 = vpack.c.bf16 %v3437, %v3436
        %v3457 = vpack.c.bf16 %v3390, %v3389
        %v3458 = vpack.c.bf16 %v3341, %v3340
        %v3459 = vpack.c.bf16 %v3439, %v3438
        %v3460 = vpack.c.bf16 %v3392, %v3391
        %v3461 = vpack.c.bf16 %v3343, %v3342
        %v3462 = vpack.c.bf16 %v3441, %v3440
        %v3463 = vpack.c.bf16 %v3394, %v3393
        %v3464 = vpack.c.bf16 %v3345, %v3344
        %v3465 = vpack.c.bf16 %v3443, %v3442
        %v3466 = vpack.c.bf16 %v3396, %v3395
        %v3467 = vpack.c.bf16 %v3347, %v3346
        %v3468 = vpack.c.bf16 %v3445, %v3444
        %v3469 = vpack.c.bf16 %v3398, %v3397
        %v3470 = vpack.c.bf16 %v3349, %v3348
        %v3471 = vpack.c.bf16 %v3447, %v3446
        %v3472 = vld [vmem:[#allocation13] sm:$0xf]
        %v3473 = vld [vmem:[#allocation13 + $0x4] sm:$0xf]
        %v3474 = vld [vmem:[#allocation13 + $0x8] sm:$0xf]
        %v3475 = vld [vmem:[#allocation13 + $0xc] sm:$0xf]
        %v3476 = vld [vmem:[#allocation13 + $0x10] sm:$0xf]
        %v3477 = vld [vmem:[#allocation13 + $0x14] sm:$0xf]
        %v3478 = vld [vmem:[#allocation13 + $0x18] sm:$0xf]
        %v3479 = vld [vmem:[#allocation13 + $0x1c] sm:$0xf]
        %v3480 = vld [vmem:[#allocation13 + $0x20] sm:$0xf]
        %v3481 = vld [vmem:[#allocation13 + $0x24] sm:$0xf]
        %v3482 = vld [vmem:[#allocation13 + $0x28] sm:$0xf]
        %v3483 = vld [vmem:[#allocation13 + $0x2c] sm:$0xf]
        %v3484 = vld [vmem:[#allocation13 + $0x30] sm:$0xf]
        %v3485 = vld [vmem:[#allocation13 + $0x34] sm:$0xf]
        %v3486 = vld [vmem:[#allocation13 + $0x38] sm:$0xf]
        %v3487 = vld [vmem:[#allocation13 + $0x3c] sm:$0xf]
        %v3488 = vld [vmem:[#allocation13 + $0x40] sm:$0xf]
        %v3489 = vld [vmem:[#allocation13 + $0x44] sm:$0xf]
        %v3490 = vld [vmem:[#allocation13 + $0x48] sm:$0xf]
        %v3491 = vld [vmem:[#allocation13 + $0x4c] sm:$0xf]
        %v3492 = vld [vmem:[#allocation13 + $0x50] sm:$0xf]
        %v3493 = vld [vmem:[#allocation13 + $0x54] sm:$0xf]
        %v3494 = vld [vmem:[#allocation13 + $0x58] sm:$0xf]
        %v3495 = vld [vmem:[#allocation13 + $0x5c] sm:$0xf]
        %v3496 = vld [vmem:[#allocation13 + $0x60] sm:$0xf]
        %v3497 = vld [vmem:[#allocation13 + $0x64] sm:$0xf]
        %v3498 = vld [vmem:[#allocation13 + $0x68] sm:$0xf]
        %v3499 = vld [vmem:[#allocation13 + $0x6c] sm:$0xf]
        %v3500 = vld [vmem:[#allocation13 + $0x70] sm:$0xf]
        %v3501 = vld [vmem:[#allocation13 + $0x74] sm:$0xf]
        %v3502 = vld [vmem:[#allocation13 + $0x78] sm:$0xf]
        %v3503 = vld [vmem:[#allocation13 + $0x7c] sm:$0xf]
        %v3504 = vld [vmem:[#allocation13 + $0x80] sm:$0xf]
        %v3505 = vld [vmem:[#allocation13 + $0x84] sm:$0xf]
        %v3506 = vld [vmem:[#allocation13 + $0x88] sm:$0xf]
        %v3507 = vld [vmem:[#allocation13 + $0x8c] sm:$0xf]
        %v3508 = vld [vmem:[#allocation13 + $0x90] sm:$0xf]
        %v3509 = vld [vmem:[#allocation13 + $0x94] sm:$0xf]
        %v3510 = vld [vmem:[#allocation13 + $0x98] sm:$0xf]
        %v3511 = vld [vmem:[#allocation13 + $0x9c] sm:$0xf]
        %v3512 = vld [vmem:[#allocation13 + $0xa0] sm:$0xf]
        %v3513 = vld [vmem:[#allocation13 + $0xa4] sm:$0xf]
        %v3514 = vld [vmem:[#allocation13 + $0xa8] sm:$0xf]
        %v3515 = vld [vmem:[#allocation13 + $0xac] sm:$0xf]
        %v3516 = vld [vmem:[#allocation13 + $0xb0] sm:$0xf]
        %v3517 = vld [vmem:[#allocation13 + $0xb4] sm:$0xf]
        %v3518 = vld [vmem:[#allocation13 + $0xb8] sm:$0xf]
        %v3519 = vld [vmem:[#allocation13 + $0xbc] sm:$0xf]
        %v3520 = vld [vmem:[%s17] sm:$0x1]
        %v3522 = vlaneseq
        %v3523 = vshrl.u32 %v3522, 7
        %v3524 = vsub.s32 0, %v3523
        %v3525 = vrot.slane %v3520, %v3524
        %v3575 = vunpack.c.l.b16 %v3472
        %v3576 = vunpack.c.l.b16 %v3473
        %v3577 = vunpack.c.l.b16 %v3474
        %v3578 = vunpack.c.l.b16 %v3475
        %v3579 = vunpack.c.l.b16 %v3476
        %v3580 = vunpack.c.l.b16 %v3477
        %v3581 = vunpack.c.l.b16 %v3478
        %v3582 = vunpack.c.l.b16 %v3479
        %v3583 = vunpack.c.l.b16 %v3480
        %v3584 = vunpack.c.l.b16 %v3481
        %v3585 = vunpack.c.l.b16 %v3482
        %v3586 = vunpack.c.l.b16 %v3483
        %v3587 = vunpack.c.l.b16 %v3484
        %v3588 = vunpack.c.l.b16 %v3485
        %v3589 = vunpack.c.l.b16 %v3486
        %v3590 = vunpack.c.l.b16 %v3487
        %v3591 = vunpack.c.l.b16 %v3488
        %v3592 = vunpack.c.l.b16 %v3489
        %v3593 = vunpack.c.l.b16 %v3490
        %v3594 = vunpack.c.l.b16 %v3491
        %v3595 = vunpack.c.l.b16 %v3492
        %v3596 = vunpack.c.l.b16 %v3493
        %v3597 = vunpack.c.l.b16 %v3494
        %v3598 = vunpack.c.l.b16 %v3495
        %v3599 = vunpack.c.l.b16 %v3496
        %v3600 = vunpack.c.l.b16 %v3497
        %v3601 = vunpack.c.l.b16 %v3498
        %v3602 = vunpack.c.l.b16 %v3499
        %v3603 = vunpack.c.l.b16 %v3500
        %v3604 = vunpack.c.l.b16 %v3501
        %v3605 = vunpack.c.l.b16 %v3502
        %v3606 = vunpack.c.l.b16 %v3503
        %v3607 = vunpack.c.l.b16 %v3504
        %v3608 = vunpack.c.l.b16 %v3505
        %v3609 = vunpack.c.l.b16 %v3506
        %v3610 = vunpack.c.l.b16 %v3507
        %v3611 = vunpack.c.l.b16 %v3508
        %v3612 = vunpack.c.l.b16 %v3509
        %v3613 = vunpack.c.l.b16 %v3510
        %v3614 = vunpack.c.l.b16 %v3511
        %v3615 = vunpack.c.l.b16 %v3512
        %v3616 = vunpack.c.l.b16 %v3513
        %v3617 = vunpack.c.l.b16 %v3514
        %v3618 = vunpack.c.l.b16 %v3515
        %v3619 = vunpack.c.l.b16 %v3516
        %v3620 = vunpack.c.l.b16 %v3517
        %v3621 = vunpack.c.l.b16 %v3518
        %v3622 = vunpack.c.l.b16 %v3519
        %v3623 = vpack.c.b16 %v3576, %v3575
        %v3624 = vpack.c.b16 %v3578, %v3577
        %v3625 = vpack.c.b16 %v3580, %v3579
        %v3626 = vpack.c.b16 %v3582, %v3581
        %v3627 = vpack.c.b16 %v3584, %v3583
        %v3628 = vpack.c.b16 %v3586, %v3585
        %v3629 = vpack.c.b16 %v3588, %v3587
        %v3630 = vpack.c.b16 %v3590, %v3589
        %v3631 = vpack.c.b16 %v3592, %v3591
        %v3632 = vpack.c.b16 %v3594, %v3593
        %v3633 = vpack.c.b16 %v3596, %v3595
        %v3634 = vpack.c.b16 %v3598, %v3597
        %v3635 = vpack.c.b16 %v3600, %v3599
        %v3636 = vpack.c.b16 %v3602, %v3601
        %v3637 = vpack.c.b16 %v3604, %v3603
        %v3638 = vpack.c.b16 %v3606, %v3605
        %v3639 = vpack.c.b16 %v3608, %v3607
        %v3640 = vpack.c.b16 %v3610, %v3609
        %v3641 = vpack.c.b16 %v3612, %v3611
        %v3642 = vpack.c.b16 %v3614, %v3613
        %v3643 = vpack.c.b16 %v3616, %v3615
        %v3644 = vpack.c.b16 %v3618, %v3617
        %v3645 = vpack.c.b16 %v3620, %v3619
        %v3646 = vpack.c.b16 %v3622, %v3621
        %3671 = vmatprep.subr.bf16.mxu0 0
        %3672 = vmatpush1.bf16.msra.mxu0 %v3623
        %3673 = vmatprep.subr.bf16.mxu0 0
        %3674 = vmatpush1.bf16.msra.mxu0 %v3624
        %3675 = vmatprep.subr.bf16.mxu0 0
        %3676 = vmatpush1.bf16.msra.mxu0 %v3625
        %3677 = vmatprep.subr.bf16.mxu0 0
        %3678 = vmatpush1.bf16.msra.mxu0 %v3626
        %3679 = vmatprep.subr.bf16.mxu0 0
        %3680 = vmatpush1.bf16.msra.mxu0 %v3627
        %3681 = vmatprep.subr.bf16.mxu0 0
        %3682 = vmatpush1.bf16.msra.mxu0 %v3628
        %3683 = vmatprep.subr.bf16.mxu0 0
        %3684 = vmatpush1.bf16.msra.mxu0 %v3629
        %3685 = vmatprep.subr.bf16.mxu0 0
        %3686 = vmatpush1.bf16.msra.mxu0 %v3630
        %3687 = vmatprep.subr.bf16.mxu0 0
        %3688 = vmatpush1.bf16.msra.mxu0 %v3631
        %3689 = vmatprep.subr.bf16.mxu0 0
        %3690 = vmatpush1.bf16.msra.mxu0 %v3632
        %3691 = vmatprep.subr.bf16.mxu0 0
        %3692 = vmatpush1.bf16.msra.mxu0 %v3633
        %3693 = vmatprep.subr.bf16.mxu0 0
        %3694 = vmatpush1.bf16.msra.mxu0 %v3634
        %3695 = vmatprep.subr.bf16.mxu0 0
        %3696 = vmatpush1.bf16.msra.mxu0 %v3635
        %3697 = vmatprep.subr.bf16.mxu0 0
        %3698 = vmatpush1.bf16.msra.mxu0 %v3636
        %3699 = vmatprep.subr.bf16.mxu0 0
        %3700 = vmatpush1.bf16.msra.mxu0 %v3637
        %3701 = vmatprep.subr.bf16.mxu0 0
        %3702 = vmatpush1.bf16.msra.mxu0 %v3638
        %3703 = vmatprep.mubr.bf16.mxu0 %v3449
        %3704 = vmatmul.mubr.bf16.gmra.mrb[0].mxu0 %v3448
        %v3705 = vpop.f32.mrb[0].mxu0
        %v3706 = vadd.f32 %v3525, %v3705
        %v3707 = vpop.f32.mrb[0].mxu0
        %v3708 = vpop.f32.mrb[0].mxu0
        %v3709 = vadd.f32 %v3525, %v3708
        %v3710 = vpop.f32.mrb[0].mxu0
        %3711 = vmatprep.mubr.bf16.mxu0 %v3452
        %3712 = vmatmul.mubr.bf16.gmra.mrb[0].mxu0 %v3451
        %v3713 = vpop.f32.mrb[0].mxu0
        %v3714 = vadd.f32 %v3525, %v3713
        %v3715 = vpop.f32.mrb[0].mxu0
        %v3716 = vpop.f32.mrb[0].mxu0
        %v3717 = vadd.f32 %v3525, %v3716
        %v3718 = vpop.f32.mrb[0].mxu0
        %3719 = vmatprep.mubr.bf16.mxu0 %v3455
        %3720 = vmatmul.mubr.bf16.gmra.mrb[0].mxu0 %v3454
        %v3721 = vpop.f32.mrb[0].mxu0
        %v3722 = vadd.f32 %v3525, %v3721
        %v3723 = vpop.f32.mrb[0].mxu0
        %v3724 = vpop.f32.mrb[0].mxu0
        %v3725 = vadd.f32 %v3525, %v3724
        %v3726 = vpop.f32.mrb[0].mxu0
        %3727 = vmatprep.mubr.bf16.mxu0 %v3458
        %3728 = vmatmul.mubr.bf16.gmra.mrb[0].mxu0 %v3457
        %v3729 = vpop.f32.mrb[0].mxu0
        %v3730 = vadd.f32 %v3525, %v3729
        %v3731 = vpop.f32.mrb[0].mxu0
        %v3732 = vpop.f32.mrb[0].mxu0
        %v3733 = vadd.f32 %v3525, %v3732
        %v3734 = vpop.f32.mrb[0].mxu0
        %3735 = vmatprep.mubr.bf16.mxu0 %v3461
        %3736 = vmatmul.mubr.bf16.gmra.mrb[0].mxu0 %v3460
        %v3737 = vpop.f32.mrb[0].mxu0
        %v3738 = vadd.f32 %v3525, %v3737
        %v3739 = vpop.f32.mrb[0].mxu0
        %v3740 = vpop.f32.mrb[0].mxu0
        %v3741 = vadd.f32 %v3525, %v3740
        %v3742 = vpop.f32.mrb[0].mxu0
        %3743 = vmatprep.mubr.bf16.mxu0 %v3464
        %3744 = vmatmul.mubr.bf16.gmra.mrb[0].mxu0 %v3463
        %v3745 = vpop.f32.mrb[0].mxu0
        %v3746 = vadd.f32 %v3525, %v3745
        %v3747 = vpop.f32.mrb[0].mxu0
        %v3748 = vpop.f32.mrb[0].mxu0
        %v3749 = vadd.f32 %v3525, %v3748
        %v3750 = vpop.f32.mrb[0].mxu0
        %3751 = vmatprep.mubr.bf16.mxu0 %v3467
        %3752 = vmatmul.mubr.bf16.gmra.mrb[0].mxu0 %v3466
        %v3753 = vpop.f32.mrb[0].mxu0
        %v3754 = vadd.f32 %v3525, %v3753
        %v3755 = vpop.f32.mrb[0].mxu0
        %v3756 = vpop.f32.mrb[0].mxu0
        %v3757 = vadd.f32 %v3525, %v3756
        %v3758 = vpop.f32.mrb[0].mxu0
        %3759 = vmatprep.mubr.bf16.mxu0 %v3470
        %3760 = vmatmul.mubr.bf16.gmra.mrb[0].mxu0 %v3469
        %v3761 = vpop.f32.mrb[0].mxu0
        %v3762 = vadd.f32 %v3525, %v3761
        %v3763 = vpop.f32.mrb[0].mxu0
        %v3764 = vpop.f32.mrb[0].mxu0
        %v3765 = vadd.f32 %v3525, %v3764
        %v3766 = vpop.f32.mrb[0].mxu0
        %3767 = vdwg.mxu0
        %3768 = vmatprep.subr.bf16.mxu0 0
        %3769 = vmatpush1.bf16.msra.mxu0 %v3639
        %3770 = vmatprep.subr.bf16.mxu0 0
        %3771 = vmatpush1.bf16.msra.mxu0 %v3640
        %3772 = vmatprep.subr.bf16.mxu0 0
        %3773 = vmatpush1.bf16.msra.mxu0 %v3641
        %3774 = vmatprep.subr.bf16.mxu0 0
        %3775 = vmatpush1.bf16.msra.mxu0 %v3642
        %3776 = vmatprep.subr.bf16.mxu0 0
        %3777 = vmatpush1.bf16.msra.mxu0 %v3643
        %3778 = vmatprep.subr.bf16.mxu0 0
        %3779 = vmatpush1.bf16.msra.mxu0 %v3644
        %3780 = vmatprep.subr.bf16.mxu0 0
        %3781 = vmatpush1.bf16.msra.mxu0 %v3645
        %3782 = vmatprep.subr.bf16.mxu0 0
        %3783 = vmatpush1.bf16.msra.mxu0 %v3646
        %3784 = vmatprep.subr.bf16.mxu0 0
        %3785 = vmatpush1.bf16.msra.mxu0 0
        %3786 = vmatprep.subr.bf16.mxu0 0
        %3787 = vmatpush1.bf16.msra.mxu0 0
        %3788 = vmatprep.subr.bf16.mxu0 0
        %3789 = vmatpush1.bf16.msra.mxu0 0
        %3790 = vmatprep.subr.bf16.mxu0 0
        %3791 = vmatpush1.bf16.msra.mxu0 0
        %3792 = vmatprep.subr.bf16.mxu0 0
        %3793 = vmatpush1.bf16.msra.mxu0 0
        %3794 = vmatprep.subr.bf16.mxu0 0
        %3795 = vmatpush1.bf16.msra.mxu0 0
        %3796 = vmatprep.subr.bf16.mxu0 0
        %3797 = vmatpush1.bf16.msra.mxu0 0
        %3798 = vmatprep.subr.bf16.mxu0 0
        %3799 = vmatpush1.bf16.msra.mxu0 0
        %3800 = vmatprep.mubr.bf16.mxu0 0
        %3801 = vmatmul.mubr.bf16.gmra.mrb[0].mxu0 %v3450
        %v3802 = vpop.f32.mrb[0].mxu0
        %v3803 = vadd.f32 %v3706, %v3802
        %v3804 = vpop.f32.mrb[0].mxu0
        %v3805 = vpop.f32.mrb[0].mxu0
        %v3806 = vadd.f32 %v3709, %v3805
        %v3807 = vpop.f32.mrb[0].mxu0
        %3808 = vmatprep.mubr.bf16.mxu0 0
        %3809 = vmatmul.mubr.bf16.gmra.mrb[0].mxu0 %v3453
        %v3810 = vpop.f32.mrb[0].mxu0
        %v3811 = vadd.f32 %v3714, %v3810
        %v3812 = vpop.f32.mrb[0].mxu0
        %v3813 = vpop.f32.mrb[0].mxu0
        %v3814 = vadd.f32 %v3717, %v3813
        %v3815 = vpop.f32.mrb[0].mxu0
        %3816 = vmatprep.mubr.bf16.mxu0 0
        %3817 = vmatmul.mubr.bf16.gmra.mrb[0].mxu0 %v3456
        %v3818 = vpop.f32.mrb[0].mxu0
        %v3819 = vadd.f32 %v3722, %v3818
        %v3820 = vpop.f32.mrb[0].mxu0
        %v3821 = vpop.f32.mrb[0].mxu0
        %v3822 = vadd.f32 %v3725, %v3821
        %v3823 = vpop.f32.mrb[0].mxu0
        %3824 = vmatprep.mubr.bf16.mxu0 0
        %3825 = vmatmul.mubr.bf16.gmra.mrb[0].mxu0 %v3459
        %v3826 = vpop.f32.mrb[0].mxu0
        %v3827 = vadd.f32 %v3730, %v3826
        %v3828 = vpop.f32.mrb[0].mxu0
        %v3829 = vpop.f32.mrb[0].mxu0
        %v3830 = vadd.f32 %v3733, %v3829
        %v3831 = vpop.f32.mrb[0].mxu0
        %3832 = vmatprep.mubr.bf16.mxu0 0
        %3833 = vmatmul.mubr.bf16.gmra.mrb[0].mxu0 %v3462
        %v3834 = vpop.f32.mrb[0].mxu0
        %v3835 = vadd.f32 %v3738, %v3834
        %v3836 = vpop.f32.mrb[0].mxu0
        %v3837 = vpop.f32.mrb[0].mxu0
        %v3838 = vadd.f32 %v3741, %v3837
        %v3839 = vpop.f32.mrb[0].mxu0
        %3840 = vmatprep.mubr.bf16.mxu0 0
        %3841 = vmatmul.mubr.bf16.gmra.mrb[0].mxu0 %v3465
        %v3842 = vpop.f32.mrb[0].mxu0
        %v3843 = vadd.f32 %v3746, %v3842
        %v3844 = vpop.f32.mrb[0].mxu0
        %v3845 = vpop.f32.mrb[0].mxu0
        %v3846 = vadd.f32 %v3749, %v3845
        %v3847 = vpop.f32.mrb[0].mxu0
        %3848 = vmatprep.mubr.bf16.mxu0 0
        %3849 = vmatmul.mubr.bf16.gmra.mrb[0].mxu0 %v3468
        %v3850 = vpop.f32.mrb[0].mxu0
        %v3851 = vadd.f32 %v3754, %v3850
        %v3852 = vpop.f32.mrb[0].mxu0
        %v3853 = vpop.f32.mrb[0].mxu0
        %v3854 = vadd.f32 %v3757, %v3853
        %v3855 = vpop.f32.mrb[0].mxu0
        %3856 = vmatprep.mubr.bf16.mxu0 0
        %3857 = vmatmul.mubr.bf16.gmra.mrb[0].mxu0 %v3471
        %v3858 = vpop.f32.mrb[0].mxu0
        %v3859 = vadd.f32 %v3762, %v3858
        %v3860 = vpop.f32.mrb[0].mxu0
        %v3861 = vpop.f32.mrb[0].mxu0
        %v3862 = vadd.f32 %v3765, %v3861
        %v3863 = vpop.f32.mrb[0].mxu0
        %3864 = vdwg.mxu0
        %v3865 = vmax.f32 %v3803, 0.0
        %v3866 = vmax.f32 %v3806, 0.0
        %v3867 = vmax.f32 %v3811, 0.0
        %v3868 = vmax.f32 %v3814, 0.0
        %v3869 = vmax.f32 %v3819, 0.0
        %v3870 = vmax.f32 %v3822, 0.0
        %v3871 = vmax.f32 %v3827, 0.0
        %v3872 = vmax.f32 %v3830, 0.0
        %v3873 = vmax.f32 %v3835, 0.0
        %v3874 = vmax.f32 %v3838, 0.0
        %v3875 = vmax.f32 %v3843, 0.0
        %v3876 = vmax.f32 %v3846, 0.0
        %v3877 = vmax.f32 %v3851, 0.0
        %v3878 = vmax.f32 %v3854, 0.0
        %v3879 = vmax.f32 %v3859, 0.0
        %v3880 = vmax.f32 %v3862, 0.0
        %v3881 = vmul.f32 %v3865, %v1193
        %v3882 = vmul.f32 %v3866, %v1198
        %v3883 = vmul.f32 %v3867, %v1203
        %v3884 = vmul.f32 %v3868, %v1208
        %v3885 = vmul.f32 %v3869, %v1213
        %v3886 = vmul.f32 %v3870, %v1218
        %v3887 = vmul.f32 %v3871, %v1223
        %v3888 = vmul.f32 %v3872, %v1228
        %v3889 = vmul.f32 %v3873, %v1233
        %v3890 = vmul.f32 %v3874, %v1238
        %v3891 = vmul.f32 %v3875, %v1243
        %v3892 = vmul.f32 %v3876, %v1248
        %v3893 = vmul.f32 %v3877, %v1253
        %v3894 = vmul.f32 %v3878, %v1258
        %v3895 = vmul.f32 %v3879, %v1263
        %v3896 = vmul.f32 %v3880, %v1268
        %v3897 = vrot.slane %v3881, 7
        %v3898 = vrot.slane %v3882, 7
        %v3899 = vrot.slane %v3883, 7
        %v3900 = vrot.slane %v3884, 7
        %v3901 = vrot.slane %v3885, 7
        %v3902 = vrot.slane %v3886, 7
        %v3903 = vrot.slane %v3887, 7
        %v3904 = vrot.slane %v3888, 7
        %v3905 = vrot.slane %v3889, 7
        %v3906 = vrot.slane %v3890, 7
        %v3907 = vrot.slane %v3891, 7
        %v3908 = vrot.slane %v3892, 7
        %v3909 = vrot.slane %v3893, 7
        %v3910 = vrot.slane %v3894, 7
        %v3911 = vrot.slane %v3895, 7
        %v3912 = vrot.slane %v3896, 7
        %v3913 = vsel %vm3366, %v3911, %v3912
        %v3914 = vsel %vm3366, %v3910, %v3911
        %v3915 = vsel %vm3366, %v3909, %v3910
        %v3916 = vsel %vm3366, %v3908, %v3909
        %v3917 = vsel %vm3366, %v3907, %v3908
        %v3918 = vsel %vm3366, %v3906, %v3907
        %v3919 = vsel %vm3366, %v3905, %v3906
        %v3920 = vsel %vm3366, %v3904, %v3905
        %v3921 = vsel %vm3366, %v3903, %v3904
        %v3922 = vsel %vm3366, %v3902, %v3903
        %v3923 = vsel %vm3366, %v3901, %v3902
        %v3924 = vsel %vm3366, %v3900, %v3901
        %v3925 = vsel %vm3366, %v3899, %v3900
        %v3926 = vsel %vm3366, %v3898, %v3899
        %v3927 = vsel %vm3366, %v3897, %v3898
        %v3928 = vsel %vm3366, %v3912, %v3897
        %v3929 = vmul.f32 %v3928, %v3270
        %v3930 = vmul.f32 %v3927, %v3271
        %v3931 = vmul.f32 %v3926, %v3272
        %v3932 = vmul.f32 %v3925, %v3273
        %v3933 = vmul.f32 %v3924, %v3274
        %v3934 = vmul.f32 %v3923, %v3275
        %v3935 = vmul.f32 %v3922, %v3276
        %v3936 = vmul.f32 %v3921, %v3277
        %v3937 = vmul.f32 %v3920, %v3278
        %v3938 = vmul.f32 %v3919, %v3279
        %v3939 = vmul.f32 %v3918, %v3280
        %v3940 = vmul.f32 %v3917, %v3281
        %v3941 = vmul.f32 %v3916, %v3282
        %v3942 = vmul.f32 %v3915, %v3283
        %v3943 = vmul.f32 %v3914, %v3284
        %v3944 = vmul.f32 %v3913, %v3285
        %v3945 = vrot.slane %v3881, 1
        %v3946 = vrot.slane %v3882, 1
        %v3947 = vrot.slane %v3883, 1
        %v3948 = vrot.slane %v3884, 1
        %v3949 = vrot.slane %v3885, 1
        %v3950 = vrot.slane %v3886, 1
        %v3951 = vrot.slane %v3887, 1
        %v3952 = vrot.slane %v3888, 1
        %v3953 = vrot.slane %v3889, 1
        %v3954 = vrot.slane %v3890, 1
        %v3955 = vrot.slane %v3891, 1
        %v3956 = vrot.slane %v3892, 1
        %v3957 = vrot.slane %v3893, 1
        %v3958 = vrot.slane %v3894, 1
        %v3959 = vrot.slane %v3895, 1
        %v3960 = vrot.slane %v3896, 1
        %v3961 = vsel %vm3415, %v3959, %v3960
        %v3962 = vsel %vm3415, %v3958, %v3959
        %v3963 = vsel %vm3415, %v3957, %v3958
        %v3964 = vsel %vm3415, %v3956, %v3957
        %v3965 = vsel %vm3415, %v3955, %v3956
        %v3966 = vsel %vm3415, %v3954, %v3955
        %v3967 = vsel %vm3415, %v3953, %v3954
        %v3968 = vsel %vm3415, %v3952, %v3953
        %v3969 = vsel %vm3415, %v3951, %v3952
        %v3970 = vsel %vm3415, %v3950, %v3951
        %v3971 = vsel %vm3415, %v3949, %v3950
        %v3972 = vsel %vm3415, %v3948, %v3949
        %v3973 = vsel %vm3415, %v3947, %v3948
        %v3974 = vsel %vm3415, %v3946, %v3947
        %v3975 = vsel %vm3415, %v3945, %v3946
        %v3976 = vsel %vm3415, %v3960, %v3945
        %v3977 = vmul.f32 %v3975, %v3318
        %v3978 = vmul.f32 %v3974, %v3319
        %v3979 = vmul.f32 %v3973, %v3320
        %v3980 = vmul.f32 %v3972, %v3321
        %v3981 = vmul.f32 %v3971, %v3322
        %v3982 = vmul.f32 %v3970, %v3323
        %v3983 = vmul.f32 %v3969, %v3324
        %v3984 = vmul.f32 %v3968, %v3325
        %v3985 = vmul.f32 %v3967, %v3326
        %v3986 = vmul.f32 %v3966, %v3327
        %v3987 = vmul.f32 %v3965, %v3328
        %v3988 = vmul.f32 %v3964, %v3329
        %v3989 = vmul.f32 %v3963, %v3330
        %v3990 = vmul.f32 %v3962, %v3331
        %v3991 = vmul.f32 %v3961, %v3332
        %v3992 = vmul.f32 %v3976, %v3333
        %v3993 = vpack.c.bf16 %v3930, %v3929
        %v3994 = vpack.c.bf16 %v3882, %v3881
        %v3995 = vpack.c.bf16 %v3978, %v3977
        %v3996 = vpack.c.bf16 %v3932, %v3931
        %v3997 = vpack.c.bf16 %v3884, %v3883
        %v3998 = vpack.c.bf16 %v3980, %v3979
        %v3999 = vpack.c.bf16 %v3934, %v3933
        %v4000 = vpack.c.bf16 %v3886, %v3885
        %v4001 = vpack.c.bf16 %v3982, %v3981
        %v4002 = vpack.c.bf16 %v3936, %v3935
        %v4003 = vpack.c.bf16 %v3888, %v3887
        %v4004 = vpack.c.bf16 %v3984, %v3983
        %v4005 = vpack.c.bf16 %v3938, %v3937
        %v4006 = vpack.c.bf16 %v3890, %v3889
        %v4007 = vpack.c.bf16 %v3986, %v3985
        %v4008 = vpack.c.bf16 %v3940, %v3939
        %v4009 = vpack.c.bf16 %v3892, %v3891
        %v4010 = vpack.c.bf16 %v3988, %v3987
        %v4011 = vpack.c.bf16 %v3942, %v3941
        %v4012 = vpack.c.bf16 %v3894, %v3893
        %v4013 = vpack.c.bf16 %v3990, %v3989
        %v4014 = vpack.c.bf16 %v3944, %v3943
        %v4015 = vpack.c.bf16 %v3896, %v3895
        %v4016 = vpack.c.bf16 %v3992, %v3991
        %v4017 = vld [vmem:[#allocation14] sm:$0xf]
        %v4018 = vld [vmem:[#allocation14 + $0x4] sm:$0xf]
        %v4019 = vld [vmem:[#allocation14 + $0x8] sm:$0xf]
        %v4020 = vld [vmem:[#allocation14 + $0xc] sm:$0xf]
        %v4021 = vld [vmem:[#allocation14 + $0x10] sm:$0xf]
        %v4022 = vld [vmem:[#allocation14 + $0x14] sm:$0xf]
        %v4023 = vld [vmem:[#allocation14 + $0x18] sm:$0xf]
        %v4024 = vld [vmem:[#allocation14 + $0x1c] sm:$0xf]
        %v4025 = vld [vmem:[#allocation14 + $0x20] sm:$0xf]
        %v4026 = vld [vmem:[#allocation14 + $0x24] sm:$0xf]
        %v4027 = vld [vmem:[#allocation14 + $0x28] sm:$0xf]
        %v4028 = vld [vmem:[#allocation14 + $0x2c] sm:$0xf]
        %v4029 = vld [vmem:[#allocation14 + $0x30] sm:$0xf]
        %v4030 = vld [vmem:[#allocation14 + $0x34] sm:$0xf]
        %v4031 = vld [vmem:[#allocation14 + $0x38] sm:$0xf]
        %v4032 = vld [vmem:[#allocation14 + $0x3c] sm:$0xf]
        %v4033 = vld [vmem:[#allocation14 + $0x40] sm:$0xf]
        %v4034 = vld [vmem:[#allocation14 + $0x44] sm:$0xf]
        %v4035 = vld [vmem:[#allocation14 + $0x48] sm:$0xf]
        %v4036 = vld [vmem:[#allocation14 + $0x4c] sm:$0xf]
        %v4037 = vld [vmem:[#allocation14 + $0x50] sm:$0xf]
        %v4038 = vld [vmem:[#allocation14 + $0x54] sm:$0xf]
        %v4039 = vld [vmem:[#allocation14 + $0x58] sm:$0xf]
        %v4040 = vld [vmem:[#allocation14 + $0x5c] sm:$0xf]
        %v4041 = vld [vmem:[#allocation14 + $0x60] sm:$0xf]
        %v4042 = vld [vmem:[#allocation14 + $0x64] sm:$0xf]
        %v4043 = vld [vmem:[#allocation14 + $0x68] sm:$0xf]
        %v4044 = vld [vmem:[#allocation14 + $0x6c] sm:$0xf]
        %v4045 = vld [vmem:[#allocation14 + $0x70] sm:$0xf]
        %v4046 = vld [vmem:[#allocation14 + $0x74] sm:$0xf]
        %v4047 = vld [vmem:[#allocation14 + $0x78] sm:$0xf]
        %v4048 = vld [vmem:[#allocation14 + $0x7c] sm:$0xf]
        %v4049 = vld [vmem:[#allocation14 + $0x80] sm:$0xf]
        %v4050 = vld [vmem:[#allocation14 + $0x84] sm:$0xf]
        %v4051 = vld [vmem:[#allocation14 + $0x88] sm:$0xf]
        %v4052 = vld [vmem:[#allocation14 + $0x8c] sm:$0xf]
        %v4053 = vld [vmem:[#allocation14 + $0x90] sm:$0xf]
        %v4054 = vld [vmem:[#allocation14 + $0x94] sm:$0xf]
        %v4055 = vld [vmem:[#allocation14 + $0x98] sm:$0xf]
        %v4056 = vld [vmem:[#allocation14 + $0x9c] sm:$0xf]
        %v4057 = vld [vmem:[#allocation14 + $0xa0] sm:$0xf]
        %v4058 = vld [vmem:[#allocation14 + $0xa4] sm:$0xf]
        %v4059 = vld [vmem:[#allocation14 + $0xa8] sm:$0xf]
        %v4060 = vld [vmem:[#allocation14 + $0xac] sm:$0xf]
        %v4061 = vld [vmem:[#allocation14 + $0xb0] sm:$0xf]
        %v4062 = vld [vmem:[#allocation14 + $0xb4] sm:$0xf]
        %v4063 = vld [vmem:[#allocation14 + $0xb8] sm:$0xf]
        %v4064 = vld [vmem:[#allocation14 + $0xbc] sm:$0xf]
        %v4065 = vld [vmem:[%s19] sm:$0x1]
        %v4067 = vlaneseq
        %v4068 = vshrl.u32 %v4067, 7
        %v4069 = vsub.s32 0, %v4068
        %v4070 = vrot.slane %v4065, %v4069
        %v4120 = vunpack.c.l.b16 %v4017
        %v4121 = vunpack.c.l.b16 %v4018
        %v4122 = vunpack.c.l.b16 %v4019
        %v4123 = vunpack.c.l.b16 %v4020
        %v4124 = vunpack.c.l.b16 %v4021
        %v4125 = vunpack.c.l.b16 %v4022
        %v4126 = vunpack.c.l.b16 %v4023
        %v4127 = vunpack.c.l.b16 %v4024
        %v4128 = vunpack.c.l.b16 %v4025
        %v4129 = vunpack.c.l.b16 %v4026
        %v4130 = vunpack.c.l.b16 %v4027
        %v4131 = vunpack.c.l.b16 %v4028
        %v4132 = vunpack.c.l.b16 %v4029
        %v4133 = vunpack.c.l.b16 %v4030
        %v4134 = vunpack.c.l.b16 %v4031
        %v4135 = vunpack.c.l.b16 %v4032
        %v4136 = vunpack.c.l.b16 %v4033
        %v4137 = vunpack.c.l.b16 %v4034
        %v4138 = vunpack.c.l.b16 %v4035
        %v4139 = vunpack.c.l.b16 %v4036
        %v4140 = vunpack.c.l.b16 %v4037
        %v4141 = vunpack.c.l.b16 %v4038
        %v4142 = vunpack.c.l.b16 %v4039
        %v4143 = vunpack.c.l.b16 %v4040
        %v4144 = vunpack.c.l.b16 %v4041
        %v4145 = vunpack.c.l.b16 %v4042
        %v4146 = vunpack.c.l.b16 %v4043
        %v4147 = vunpack.c.l.b16 %v4044
        %v4148 = vunpack.c.l.b16 %v4045
        %v4149 = vunpack.c.l.b16 %v4046
        %v4150 = vunpack.c.l.b16 %v4047
        %v4151 = vunpack.c.l.b16 %v4048
        %v4152 = vunpack.c.l.b16 %v4049
        %v4153 = vunpack.c.l.b16 %v4050
        %v4154 = vunpack.c.l.b16 %v4051
        %v4155 = vunpack.c.l.b16 %v4052
        %v4156 = vunpack.c.l.b16 %v4053
        %v4157 = vunpack.c.l.b16 %v4054
        %v4158 = vunpack.c.l.b16 %v4055
        %v4159 = vunpack.c.l.b16 %v4056
        %v4160 = vunpack.c.l.b16 %v4057
        %v4161 = vunpack.c.l.b16 %v4058
        %v4162 = vunpack.c.l.b16 %v4059
        %v4163 = vunpack.c.l.b16 %v4060
        %v4164 = vunpack.c.l.b16 %v4061
        %v4165 = vunpack.c.l.b16 %v4062
        %v4166 = vunpack.c.l.b16 %v4063
        %v4167 = vunpack.c.l.b16 %v4064
        %v4168 = vpack.c.b16 %v4121, %v4120
        %v4169 = vpack.c.b16 %v4123, %v4122
        %v4170 = vpack.c.b16 %v4125, %v4124
        %v4171 = vpack.c.b16 %v4127, %v4126
        %v4172 = vpack.c.b16 %v4129, %v4128
        %v4173 = vpack.c.b16 %v4131, %v4130
        %v4174 = vpack.c.b16 %v4133, %v4132
        %v4175 = vpack.c.b16 %v4135, %v4134
        %v4176 = vpack.c.b16 %v4137, %v4136
        %v4177 = vpack.c.b16 %v4139, %v4138
        %v4178 = vpack.c.b16 %v4141, %v4140
        %v4179 = vpack.c.b16 %v4143, %v4142
        %v4180 = vpack.c.b16 %v4145, %v4144
        %v4181 = vpack.c.b16 %v4147, %v4146
        %v4182 = vpack.c.b16 %v4149, %v4148
        %v4183 = vpack.c.b16 %v4151, %v4150
        %v4184 = vpack.c.b16 %v4153, %v4152
        %v4185 = vpack.c.b16 %v4155, %v4154
        %v4186 = vpack.c.b16 %v4157, %v4156
        %v4187 = vpack.c.b16 %v4159, %v4158
        %v4188 = vpack.c.b16 %v4161, %v4160
        %v4189 = vpack.c.b16 %v4163, %v4162
        %v4190 = vpack.c.b16 %v4165, %v4164
        %v4191 = vpack.c.b16 %v4167, %v4166
        %4216 = vmatprep.subr.bf16.mxu0 0
        %4217 = vmatpush1.bf16.msra.mxu0 %v4168
        %4218 = vmatprep.subr.bf16.mxu0 0
        %4219 = vmatpush1.bf16.msra.mxu0 %v4169
        %4220 = vmatprep.subr.bf16.mxu0 0
        %4221 = vmatpush1.bf16.msra.mxu0 %v4170
        %4222 = vmatprep.subr.bf16.mxu0 0
        %4223 = vmatpush1.bf16.msra.mxu0 %v4171
        %4224 = vmatprep.subr.bf16.mxu0 0
        %4225 = vmatpush1.bf16.msra.mxu0 %v4172
        %4226 = vmatprep.subr.bf16.mxu0 0
        %4227 = vmatpush1.bf16.msra.mxu0 %v4173
        %4228 = vmatprep.subr.bf16.mxu0 0
        %4229 = vmatpush1.bf16.msra.mxu0 %v4174
        %4230 = vmatprep.subr.bf16.mxu0 0
        %4231 = vmatpush1.bf16.msra.mxu0 %v4175
        %4232 = vmatprep.subr.bf16.mxu0 0
        %4233 = vmatpush1.bf16.msra.mxu0 %v4176
        %4234 = vmatprep.subr.bf16.mxu0 0
        %4235 = vmatpush1.bf16.msra.mxu0 %v4177
        %4236 = vmatprep.subr.bf16.mxu0 0
        %4237 = vmatpush1.bf16.msra.mxu0 %v4178
        %4238 = vmatprep.subr.bf16.mxu0 0
        %4239 = vmatpush1.bf16.msra.mxu0 %v4179
        %4240 = vmatprep.subr.bf16.mxu0 0
        %4241 = vmatpush1.bf16.msra.mxu0 %v4180
        %4242 = vmatprep.subr.bf16.mxu0 0
        %4243 = vmatpush1.bf16.msra.mxu0 %v4181
        %4244 = vmatprep.subr.bf16.mxu0 0
        %4245 = vmatpush1.bf16.msra.mxu0 %v4182
        %4246 = vmatprep.subr.bf16.mxu0 0
        %4247 = vmatpush1.bf16.msra.mxu0 %v4183
        %4248 = vmatprep.mubr.bf16.mxu0 %v3994
        %4249 = vmatmul.mubr.bf16.gmra.mrb[0].mxu0 %v3993
        %v4250 = vpop.f32.mrb[0].mxu0
        %v4251 = vadd.f32 %v4070, %v4250
        %v4252 = vpop.f32.mrb[0].mxu0
        %v4253 = vpop.f32.mrb[0].mxu0
        %v4254 = vadd.f32 %v4070, %v4253
        %v4255 = vpop.f32.mrb[0].mxu0
        %4256 = vmatprep.mubr.bf16.mxu0 %v3997
        %4257 = vmatmul.mubr.bf16.gmra.mrb[0].mxu0 %v3996
        %v4258 = vpop.f32.mrb[0].mxu0
        %v4259 = vadd.f32 %v4070, %v4258
        %v4260 = vpop.f32.mrb[0].mxu0
        %v4261 = vpop.f32.mrb[0].mxu0
        %v4262 = vadd.f32 %v4070, %v4261
        %v4263 = vpop.f32.mrb[0].mxu0
        %4264 = vmatprep.mubr.bf16.mxu0 %v4000
        %4265 = vmatmul.mubr.bf16.gmra.mrb[0].mxu0 %v3999
        %v4266 = vpop.f32.mrb[0].mxu0
        %v4267 = vadd.f32 %v4070, %v4266
        %v4268 = vpop.f32.mrb[0].mxu0
        %v4269 = vpop.f32.mrb[0].mxu0
        %v4270 = vadd.f32 %v4070, %v4269
        %v4271 = vpop.f32.mrb[0].mxu0
        %4272 = vmatprep.mubr.bf16.mxu0 %v4003
        %4273 = vmatmul.mubr.bf16.gmra.mrb[0].mxu0 %v4002
        %v4274 = vpop.f32.mrb[0].mxu0
        %v4275 = vadd.f32 %v4070, %v4274
        %v4276 = vpop.f32.mrb[0].mxu0
        %v4277 = vpop.f32.mrb[0].mxu0
        %v4278 = vadd.f32 %v4070, %v4277
        %v4279 = vpop.f32.mrb[0].mxu0
        %4280 = vmatprep.mubr.bf16.mxu0 %v4006
        %4281 = vmatmul.mubr.bf16.gmra.mrb[0].mxu0 %v4005
        %v4282 = vpop.f32.mrb[0].mxu0
        %v4283 = vadd.f32 %v4070, %v4282
        %v4284 = vpop.f32.mrb[0].mxu0
        %v4285 = vpop.f32.mrb[0].mxu0
        %v4286 = vadd.f32 %v4070, %v4285
        %v4287 = vpop.f32.mrb[0].mxu0
        %4288 = vmatprep.mubr.bf16.mxu0 %v4009
        %4289 = vmatmul.mubr.bf16.gmra.mrb[0].mxu0 %v4008
        %v4290 = vpop.f32.mrb[0].mxu0
        %v4291 = vadd.f32 %v4070, %v4290
        %v4292 = vpop.f32.mrb[0].mxu0
        %v4293 = vpop.f32.mrb[0].mxu0
        %v4294 = vadd.f32 %v4070, %v4293
        %v4295 = vpop.f32.mrb[0].mxu0
        %4296 = vmatprep.mubr.bf16.mxu0 %v4012
        %4297 = vmatmul.mubr.bf16.gmra.mrb[0].mxu0 %v4011
        %v4298 = vpop.f32.mrb[0].mxu0
        %v4299 = vadd.f32 %v4070, %v4298
        %v4300 = vpop.f32.mrb[0].mxu0
        %v4301 = vpop.f32.mrb[0].mxu0
        %v4302 = vadd.f32 %v4070, %v4301
        %v4303 = vpop.f32.mrb[0].mxu0
        %4304 = vmatprep.mubr.bf16.mxu0 %v4015
        %4305 = vmatmul.mubr.bf16.gmra.mrb[0].mxu0 %v4014
        %v4306 = vpop.f32.mrb[0].mxu0
        %v4307 = vadd.f32 %v4070, %v4306
        %v4308 = vpop.f32.mrb[0].mxu0
        %v4309 = vpop.f32.mrb[0].mxu0
        %v4310 = vadd.f32 %v4070, %v4309
        %v4311 = vpop.f32.mrb[0].mxu0
        %4312 = vdwg.mxu0
        %4313 = vmatprep.subr.bf16.mxu0 0
        %4314 = vmatpush1.bf16.msra.mxu0 %v4184
        %4315 = vmatprep.subr.bf16.mxu0 0
        %4316 = vmatpush1.bf16.msra.mxu0 %v4185
        %4317 = vmatprep.subr.bf16.mxu0 0
        %4318 = vmatpush1.bf16.msra.mxu0 %v4186
        %4319 = vmatprep.subr.bf16.mxu0 0
        %4320 = vmatpush1.bf16.msra.mxu0 %v4187
        %4321 = vmatprep.subr.bf16.mxu0 0
        %4322 = vmatpush1.bf16.msra.mxu0 %v4188
        %4323 = vmatprep.subr.bf16.mxu0 0
        %4324 = vmatpush1.bf16.msra.mxu0 %v4189
        %4325 = vmatprep.subr.bf16.mxu0 0
        %4326 = vmatpush1.bf16.msra.mxu0 %v4190
        %4327 = vmatprep.subr.bf16.mxu0 0
        %4328 = vmatpush1.bf16.msra.mxu0 %v4191
        %4329 = vmatprep.subr.bf16.mxu0 0
        %4330 = vmatpush1.bf16.msra.mxu0 0
        %4331 = vmatprep.subr.bf16.mxu0 0
        %4332 = vmatpush1.bf16.msra.mxu0 0
        %4333 = vmatprep.subr.bf16.mxu0 0
        %4334 = vmatpush1.bf16.msra.mxu0 0
        %4335 = vmatprep.subr.bf16.mxu0 0
        %4336 = vmatpush1.bf16.msra.mxu0 0
        %4337 = vmatprep.subr.bf16.mxu0 0
        %4338 = vmatpush1.bf16.msra.mxu0 0
        %4339 = vmatprep.subr.bf16.mxu0 0
        %4340 = vmatpush1.bf16.msra.mxu0 0
        %4341 = vmatprep.subr.bf16.mxu0 0
        %4342 = vmatpush1.bf16.msra.mxu0 0
        %4343 = vmatprep.subr.bf16.mxu0 0
        %4344 = vmatpush1.bf16.msra.mxu0 0
        %4345 = vmatprep.mubr.bf16.mxu0 0
        %4346 = vmatmul.mubr.bf16.gmra.mrb[0].mxu0 %v3995
        %v4347 = vpop.f32.mrb[0].mxu0
        %v4348 = vadd.f32 %v4251, %v4347
        %v4349 = vpop.f32.mrb[0].mxu0
        %v4350 = vpop.f32.mrb[0].mxu0
        %v4351 = vadd.f32 %v4254, %v4350
        %v4352 = vpop.f32.mrb[0].mxu0
        %4353 = vmatprep.mubr.bf16.mxu0 0
        %4354 = vmatmul.mubr.bf16.gmra.mrb[0].mxu0 %v3998
        %v4355 = vpop.f32.mrb[0].mxu0
        %v4356 = vadd.f32 %v4259, %v4355
        %v4357 = vpop.f32.mrb[0].mxu0
        %v4358 = vpop.f32.mrb[0].mxu0
        %v4359 = vadd.f32 %v4262, %v4358
        %v4360 = vpop.f32.mrb[0].mxu0
        %4361 = vmatprep.mubr.bf16.mxu0 0
        %4362 = vmatmul.mubr.bf16.gmra.mrb[0].mxu0 %v4001
        %v4363 = vpop.f32.mrb[0].mxu0
        %v4364 = vadd.f32 %v4267, %v4363
        %v4365 = vpop.f32.mrb[0].mxu0
        %v4366 = vpop.f32.mrb[0].mxu0
        %v4367 = vadd.f32 %v4270, %v4366
        %v4368 = vpop.f32.mrb[0].mxu0
        %4369 = vmatprep.mubr.bf16.mxu0 0
        %4370 = vmatmul.mubr.bf16.gmra.mrb[0].mxu0 %v4004
        %v4371 = vpop.f32.mrb[0].mxu0
        %v4372 = vadd.f32 %v4275, %v4371
        %v4373 = vpop.f32.mrb[0].mxu0
        %v4374 = vpop.f32.mrb[0].mxu0
        %v4375 = vadd.f32 %v4278, %v4374
        %v4376 = vpop.f32.mrb[0].mxu0
        %4377 = vmatprep.mubr.bf16.mxu0 0
        %4378 = vmatmul.mubr.bf16.gmra.mrb[0].mxu0 %v4007
        %v4379 = vpop.f32.mrb[0].mxu0
        %v4380 = vadd.f32 %v4283, %v4379
        %v4381 = vpop.f32.mrb[0].mxu0
        %v4382 = vpop.f32.mrb[0].mxu0
        %v4383 = vadd.f32 %v4286, %v4382
        %v4384 = vpop.f32.mrb[0].mxu0
        %4385 = vmatprep.mubr.bf16.mxu0 0
        %4386 = vmatmul.mubr.bf16.gmra.mrb[0].mxu0 %v4010
        %v4387 = vpop.f32.mrb[0].mxu0
        %v4388 = vadd.f32 %v4291, %v4387
        %v4389 = vpop.f32.mrb[0].mxu0
        %v4390 = vpop.f32.mrb[0].mxu0
        %v4391 = vadd.f32 %v4294, %v4390
        %v4392 = vpop.f32.mrb[0].mxu0
        %4393 = vmatprep.mubr.bf16.mxu0 0
        %4394 = vmatmul.mubr.bf16.gmra.mrb[0].mxu0 %v4013
        %v4395 = vpop.f32.mrb[0].mxu0
        %v4396 = vadd.f32 %v4299, %v4395
        %v4397 = vpop.f32.mrb[0].mxu0
        %v4398 = vpop.f32.mrb[0].mxu0
        %v4399 = vadd.f32 %v4302, %v4398
        %v4400 = vpop.f32.mrb[0].mxu0
        %4401 = vmatprep.mubr.bf16.mxu0 0
        %4402 = vmatmul.mubr.bf16.gmra.mrb[0].mxu0 %v4016
        %v4403 = vpop.f32.mrb[0].mxu0
        %v4404 = vadd.f32 %v4307, %v4403
        %v4405 = vpop.f32.mrb[0].mxu0
        %v4406 = vpop.f32.mrb[0].mxu0
        %v4407 = vadd.f32 %v4310, %v4406
        %v4408 = vpop.f32.mrb[0].mxu0
        %4409 = vdwg.mxu0
        %v4410 = vmul.f32 %v4348, %v1193
        %v4411 = vmul.f32 %v4351, %v1198
        %v4412 = vmul.f32 %v4356, %v1203
        %v4413 = vmul.f32 %v4359, %v1208
        %v4414 = vmul.f32 %v4364, %v1213
        %v4415 = vmul.f32 %v4367, %v1218
        %v4416 = vmul.f32 %v4372, %v1223
        %v4417 = vmul.f32 %v4375, %v1228
        %v4418 = vmul.f32 %v4380, %v1233
        %v4419 = vmul.f32 %v4383, %v1238
        %v4420 = vmul.f32 %v4388, %v1243
        %v4421 = vmul.f32 %v4391, %v1248
        %v4422 = vmul.f32 %v4396, %v1253
        %v4423 = vmul.f32 %v4399, %v1258
        %v4424 = vmul.f32 %v4404, %v1263
        %v4425 = vmul.f32 %v4407, %v1268
        %v4426 = vadd.f32 %v3205, %v4410
        %v4427 = vadd.f32 %v3206, %v4411
        %v4428 = vadd.f32 %v3207, %v4412
        %v4429 = vadd.f32 %v3208, %v4413
        %v4430 = vadd.f32 %v3209, %v4414
        %v4431 = vadd.f32 %v3210, %v4415
        %v4432 = vadd.f32 %v3211, %v4416
        %v4433 = vadd.f32 %v3212, %v4417
        %v4434 = vadd.f32 %v3213, %v4418
        %v4435 = vadd.f32 %v3214, %v4419
        %v4436 = vadd.f32 %v3215, %v4420
        %v4437 = vadd.f32 %v3216, %v4421
        %v4438 = vadd.f32 %v3217, %v4422
        %v4439 = vadd.f32 %v3218, %v4423
        %v4440 = vadd.f32 %v3219, %v4424
        %v4441 = vadd.f32 %v3220, %v4425
        %v4442 = vld [vmem:[%s20] sm:$0x1]
        %v4443 = vld [vmem:[%s21] sm:$0x1]
        %4444 = vadd.xlane.f32.xlu0 %v4426
        %v4445 = vpop.xlane.xlu0 %4444
        %4446 = vadd.xlane.f32.xlu0 %v4427
        %v4447 = vpop.xlane.xlu0 %4446
        %4448 = vadd.xlane.f32.xlu0 %v4428
        %v4449 = vpop.xlane.xlu0 %4448
        %4450 = vadd.xlane.f32.xlu0 %v4429
        %v4451 = vpop.xlane.xlu0 %4450
        %4452 = vadd.xlane.f32.xlu0 %v4430
        %v4453 = vpop.xlane.xlu0 %4452
        %4454 = vadd.xlane.f32.xlu0 %v4431
        %v4455 = vpop.xlane.xlu0 %4454
        %4456 = vadd.xlane.f32.xlu0 %v4432
        %v4457 = vpop.xlane.xlu0 %4456
        %4458 = vadd.xlane.f32.xlu0 %v4433
        %v4459 = vpop.xlane.xlu0 %4458
        %4460 = vadd.xlane.f32.xlu0 %v4434
        %v4461 = vpop.xlane.xlu0 %4460
        %4462 = vadd.xlane.f32.xlu0 %v4435
        %v4463 = vpop.xlane.xlu0 %4462
        %4464 = vadd.xlane.f32.xlu0 %v4436
        %v4465 = vpop.xlane.xlu0 %4464
        %4466 = vadd.xlane.f32.xlu0 %v4437
        %v4467 = vpop.xlane.xlu0 %4466
        %4468 = vadd.xlane.f32.xlu0 %v4438
        %v4469 = vpop.xlane.xlu0 %4468
        %4470 = vadd.xlane.f32.xlu0 %v4439
        %v4471 = vpop.xlane.xlu0 %4470
        %4472 = vadd.xlane.f32.xlu0 %v4440
        %v4473 = vpop.xlane.xlu0 %4472
        %4474 = vadd.xlane.f32.xlu0 %v4441
        %v4475 = vpop.xlane.xlu0 %4474
        %v4476 = vmul.f32 %v4445, 0.03125
        %v4477 = vmul.f32 %v4447, 0.03125
        %v4478 = vmul.f32 %v4449, 0.03125
        %v4479 = vmul.f32 %v4451, 0.03125
        %v4480 = vmul.f32 %v4453, 0.03125
        %v4481 = vmul.f32 %v4455, 0.03125
        %v4482 = vmul.f32 %v4457, 0.03125
        %v4483 = vmul.f32 %v4459, 0.03125
        %v4484 = vmul.f32 %v4461, 0.03125
        %v4485 = vmul.f32 %v4463, 0.03125
        %v4486 = vmul.f32 %v4465, 0.03125
        %v4487 = vmul.f32 %v4467, 0.03125
        %v4488 = vmul.f32 %v4469, 0.03125
        %v4489 = vmul.f32 %v4471, 0.03125
        %v4490 = vmul.f32 %v4473, 0.03125
        %v4491 = vmul.f32 %v4475, 0.03125
        %v4492 = vmul.f32 %v4426, %v4426
        %v4493 = vmul.f32 %v4427, %v4427
        %v4494 = vmul.f32 %v4428, %v4428
        %v4495 = vmul.f32 %v4429, %v4429
        %v4496 = vmul.f32 %v4430, %v4430
        %v4497 = vmul.f32 %v4431, %v4431
        %v4498 = vmul.f32 %v4432, %v4432
        %v4499 = vmul.f32 %v4433, %v4433
        %v4500 = vmul.f32 %v4434, %v4434
        %v4501 = vmul.f32 %v4435, %v4435
        %v4502 = vmul.f32 %v4436, %v4436
        %v4503 = vmul.f32 %v4437, %v4437
        %v4504 = vmul.f32 %v4438, %v4438
        %v4505 = vmul.f32 %v4439, %v4439
        %v4506 = vmul.f32 %v4440, %v4440
        %v4507 = vmul.f32 %v4441, %v4441
        %4508 = vadd.xlane.f32.xlu0 %v4492
        %v4509 = vpop.xlane.xlu0 %4508
        %4510 = vadd.xlane.f32.xlu0 %v4493
        %v4511 = vpop.xlane.xlu0 %4510
        %4512 = vadd.xlane.f32.xlu0 %v4494
        %v4513 = vpop.xlane.xlu0 %4512
        %4514 = vadd.xlane.f32.xlu0 %v4495
        %v4515 = vpop.xlane.xlu0 %4514
        %4516 = vadd.xlane.f32.xlu0 %v4496
        %v4517 = vpop.xlane.xlu0 %4516
        %4518 = vadd.xlane.f32.xlu0 %v4497
        %v4519 = vpop.xlane.xlu0 %4518
        %4520 = vadd.xlane.f32.xlu0 %v4498
        %v4521 = vpop.xlane.xlu0 %4520
        %4522 = vadd.xlane.f32.xlu0 %v4499
        %v4523 = vpop.xlane.xlu0 %4522
        %4524 = vadd.xlane.f32.xlu0 %v4500
        %v4525 = vpop.xlane.xlu0 %4524
        %4526 = vadd.xlane.f32.xlu0 %v4501
        %v4527 = vpop.xlane.xlu0 %4526
        %4528 = vadd.xlane.f32.xlu0 %v4502
        %v4529 = vpop.xlane.xlu0 %4528
        %4530 = vadd.xlane.f32.xlu0 %v4503
        %v4531 = vpop.xlane.xlu0 %4530
        %4532 = vadd.xlane.f32.xlu0 %v4504
        %v4533 = vpop.xlane.xlu0 %4532
        %4534 = vadd.xlane.f32.xlu0 %v4505
        %v4535 = vpop.xlane.xlu0 %4534
        %4536 = vadd.xlane.f32.xlu0 %v4506
        %v4537 = vpop.xlane.xlu0 %4536
        %4538 = vadd.xlane.f32.xlu0 %v4507
        %v4539 = vpop.xlane.xlu0 %4538
        %v4540 = vmul.f32 %v4509, 0.03125
        %v4541 = vmul.f32 %v4511, 0.03125
        %v4542 = vmul.f32 %v4513, 0.03125
        %v4543 = vmul.f32 %v4515, 0.03125
        %v4544 = vmul.f32 %v4517, 0.03125
        %v4545 = vmul.f32 %v4519, 0.03125
        %v4546 = vmul.f32 %v4521, 0.03125
        %v4547 = vmul.f32 %v4523, 0.03125
        %v4548 = vmul.f32 %v4525, 0.03125
        %v4549 = vmul.f32 %v4527, 0.03125
        %v4550 = vmul.f32 %v4529, 0.03125
        %v4551 = vmul.f32 %v4531, 0.03125
        %v4552 = vmul.f32 %v4533, 0.03125
        %v4553 = vmul.f32 %v4535, 0.03125
        %v4554 = vmul.f32 %v4537, 0.03125
        %v4555 = vmul.f32 %v4539, 0.03125
        %v4556 = vmul.f32 %v4476, %v4476
        %v4557 = vmul.f32 %v4477, %v4477
        %v4558 = vmul.f32 %v4478, %v4478
        %v4559 = vmul.f32 %v4479, %v4479
        %v4560 = vmul.f32 %v4480, %v4480
        %v4561 = vmul.f32 %v4481, %v4481
        %v4562 = vmul.f32 %v4482, %v4482
        %v4563 = vmul.f32 %v4483, %v4483
        %v4564 = vmul.f32 %v4484, %v4484
        %v4565 = vmul.f32 %v4485, %v4485
        %v4566 = vmul.f32 %v4486, %v4486
        %v4567 = vmul.f32 %v4487, %v4487
        %v4568 = vmul.f32 %v4488, %v4488
        %v4569 = vmul.f32 %v4489, %v4489
        %v4570 = vmul.f32 %v4490, %v4490
        %v4571 = vmul.f32 %v4491, %v4491
        %v4572 = vsub.f32 %v4540, %v4556
        %v4573 = vsub.f32 %v4541, %v4557
        %v4574 = vsub.f32 %v4542, %v4558
        %v4575 = vsub.f32 %v4543, %v4559
        %v4576 = vsub.f32 %v4544, %v4560
        %v4577 = vsub.f32 %v4545, %v4561
        %v4578 = vsub.f32 %v4546, %v4562
        %v4579 = vsub.f32 %v4547, %v4563
        %v4580 = vsub.f32 %v4548, %v4564
        %v4581 = vsub.f32 %v4549, %v4565
        %v4582 = vsub.f32 %v4550, %v4566
        %v4583 = vsub.f32 %v4551, %v4567
        %v4584 = vsub.f32 %v4552, %v4568
        %v4585 = vsub.f32 %v4553, %v4569
        %v4586 = vsub.f32 %v4554, %v4570
        %v4587 = vsub.f32 %v4555, %v4571
        %v4588 = vsub.f32 %v4426, %v4476
        %v4589 = vsub.f32 %v4427, %v4477
        %v4590 = vsub.f32 %v4428, %v4478
        %v4591 = vsub.f32 %v4429, %v4479
        %v4592 = vsub.f32 %v4430, %v4480
        %v4593 = vsub.f32 %v4431, %v4481
        %v4594 = vsub.f32 %v4432, %v4482
        %v4595 = vsub.f32 %v4433, %v4483
        %v4596 = vsub.f32 %v4434, %v4484
        %v4597 = vsub.f32 %v4435, %v4485
        %v4598 = vsub.f32 %v4436, %v4486
        %v4599 = vsub.f32 %v4437, %v4487
        %v4600 = vsub.f32 %v4438, %v4488
        %v4601 = vsub.f32 %v4439, %v4489
        %v4602 = vsub.f32 %v4440, %v4490
        %v4603 = vsub.f32 %v4441, %v4491
        %v4604 = vadd.f32 %v4572, 1e-05
        %v4605 = vadd.f32 %v4573, 1e-05
        %v4606 = vadd.f32 %v4574, 1e-05
        %v4607 = vadd.f32 %v4575, 1e-05
        %v4608 = vadd.f32 %v4576, 1e-05
        %v4609 = vadd.f32 %v4577, 1e-05
        %v4610 = vadd.f32 %v4578, 1e-05
        %v4611 = vadd.f32 %v4579, 1e-05
        %v4612 = vadd.f32 %v4580, 1e-05
        %v4613 = vadd.f32 %v4581, 1e-05
        %v4614 = vadd.f32 %v4582, 1e-05
        %v4615 = vadd.f32 %v4583, 1e-05
        %v4616 = vadd.f32 %v4584, 1e-05
        %v4617 = vadd.f32 %v4585, 1e-05
        %v4618 = vadd.f32 %v4586, 1e-05
        %v4619 = vadd.f32 %v4587, 1e-05
        %v4620 = vrsqrt.pop %v4604
        %v4621 = vrsqrt.pop %v4605
        %v4622 = vrsqrt.pop %v4606
        %v4623 = vrsqrt.pop %v4607
        %v4624 = vrsqrt.pop %v4608
        %v4625 = vrsqrt.pop %v4609
        %v4626 = vrsqrt.pop %v4610
        %v4627 = vrsqrt.pop %v4611
        %v4628 = vrsqrt.pop %v4612
        %v4629 = vrsqrt.pop %v4613
        %v4630 = vrsqrt.pop %v4614
        %v4631 = vrsqrt.pop %v4615
        %v4632 = vrsqrt.pop %v4616
        %v4633 = vrsqrt.pop %v4617
        %v4634 = vrsqrt.pop %v4618
        %v4635 = vrsqrt.pop %v4619
        %v4636 = vmul.f32 %v4588, %v4620
        %v4637 = vmul.f32 %v4589, %v4621
        %v4638 = vmul.f32 %v4590, %v4622
        %v4639 = vmul.f32 %v4591, %v4623
        %v4640 = vmul.f32 %v4592, %v4624
        %v4641 = vmul.f32 %v4593, %v4625
        %v4642 = vmul.f32 %v4594, %v4626
        %v4643 = vmul.f32 %v4595, %v4627
        %v4644 = vmul.f32 %v4596, %v4628
        %v4645 = vmul.f32 %v4597, %v4629
        %v4646 = vmul.f32 %v4598, %v4630
        %v4647 = vmul.f32 %v4599, %v4631
        %v4648 = vmul.f32 %v4600, %v4632
        %v4649 = vmul.f32 %v4601, %v4633
        %v4650 = vmul.f32 %v4602, %v4634
        %v4651 = vmul.f32 %v4603, %v4635
        %v4653 = vlaneseq
        %v4654 = vshrl.u32 %v4653, 7
        %v4655 = vsub.s32 0, %v4654
        %v4656 = vrot.slane %v4442, %v4655
        %v4658 = vmul.f32 %v4636, %v4656
        %v4659 = vmul.f32 %v4637, %v4656
        %v4660 = vmul.f32 %v4638, %v4656
        %v4661 = vmul.f32 %v4639, %v4656
        %v4662 = vmul.f32 %v4640, %v4656
        %v4663 = vmul.f32 %v4641, %v4656
        %v4664 = vmul.f32 %v4642, %v4656
        %v4665 = vmul.f32 %v4643, %v4656
        %v4666 = vmul.f32 %v4644, %v4656
        %v4667 = vmul.f32 %v4645, %v4656
        %v4668 = vmul.f32 %v4646, %v4656
        %v4669 = vmul.f32 %v4647, %v4656
        %v4670 = vmul.f32 %v4648, %v4656
        %v4671 = vmul.f32 %v4649, %v4656
        %v4672 = vmul.f32 %v4650, %v4656
        %v4673 = vmul.f32 %v4651, %v4656
        %v4675 = vlaneseq
        %v4676 = vshrl.u32 %v4675, 7
        %v4677 = vsub.s32 0, %v4676
        %v4678 = vrot.slane %v4443, %v4677
        %v4680 = vadd.f32 %v4658, %v4678
        %v4681 = vadd.f32 %v4659, %v4678
        %v4682 = vadd.f32 %v4660, %v4678
        %v4683 = vadd.f32 %v4661, %v4678
        %v4684 = vadd.f32 %v4662, %v4678
        %v4685 = vadd.f32 %v4663, %v4678
        %v4686 = vadd.f32 %v4664, %v4678
        %v4687 = vadd.f32 %v4665, %v4678
        %v4688 = vadd.f32 %v4666, %v4678
        %v4689 = vadd.f32 %v4667, %v4678
        %v4690 = vadd.f32 %v4668, %v4678
        %v4691 = vadd.f32 %v4669, %v4678
        %v4692 = vadd.f32 %v4670, %v4678
        %v4693 = vadd.f32 %v4671, %v4678
        %v4694 = vadd.f32 %v4672, %v4678
        %v4695 = vadd.f32 %v4673, %v4678
        %v4696 = vmul.f32 %v4680, %v1193
        %v4697 = vmul.f32 %v4681, %v1198
        %v4698 = vmul.f32 %v4682, %v1203
        %v4699 = vmul.f32 %v4683, %v1208
        %v4700 = vmul.f32 %v4684, %v1213
        %v4701 = vmul.f32 %v4685, %v1218
        %v4702 = vmul.f32 %v4686, %v1223
        %v4703 = vmul.f32 %v4687, %v1228
        %v4704 = vmul.f32 %v4688, %v1233
        %v4705 = vmul.f32 %v4689, %v1238
        %v4706 = vmul.f32 %v4690, %v1243
        %v4707 = vmul.f32 %v4691, %v1248
        %v4708 = vmul.f32 %v4692, %v1253
        %v4709 = vmul.f32 %v4693, %v1258
        %v4710 = vmul.f32 %v4694, %v1263
        %v4711 = vmul.f32 %v4695, %v1268
        %v4712 = vadd.f32 %v4696, %v1270
        %v4713 = vadd.f32 %v4697, %v1271
        %v4714 = vadd.f32 %v4698, %v1272
        %v4715 = vadd.f32 %v4699, %v1273
        %v4716 = vadd.f32 %v4700, %v1274
        %v4717 = vadd.f32 %v4701, %v1275
        %v4718 = vadd.f32 %v4702, %v1276
        %v4719 = vadd.f32 %v4703, %v1277
        %v4720 = vadd.f32 %v4704, %v1278
        %v4721 = vadd.f32 %v4705, %v1279
        %v4722 = vadd.f32 %v4706, %v1280
        %v4723 = vadd.f32 %v4707, %v1281
        %v4724 = vadd.f32 %v4708, %v1282
        %v4725 = vadd.f32 %v4709, %v1283
        %v4726 = vadd.f32 %v4710, %v1284
        %v4727 = vadd.f32 %v4711, %v1285
        %v4728 = vpack.c.bf16 %v4713, %v4712
        %v4729 = vpack.c.bf16 %v4715, %v4714
        %v4730 = vpack.c.bf16 %v4717, %v4716
        %v4731 = vpack.c.bf16 %v4719, %v4718
        %v4732 = vpack.c.bf16 %v4721, %v4720
        %v4733 = vpack.c.bf16 %v4723, %v4722
        %v4734 = vpack.c.bf16 %v4725, %v4724
        %v4735 = vpack.c.bf16 %v4727, %v4726
        %v4736 = vld [vmem:[#allocation16] sm:$0xff]
        %v4737 = vld [vmem:[#allocation16 + $0x8] sm:$0xff]
        %v4738 = vld [vmem:[#allocation16 + $0x10] sm:$0xff]
        %v4739 = vld [vmem:[#allocation16 + $0x18] sm:$0xff]
        %v4740 = vld [vmem:[#allocation16 + $0x20] sm:$0xff]
        %v4741 = vld [vmem:[#allocation16 + $0x28] sm:$0xff]
        %v4742 = vld [vmem:[#allocation16 + $0x30] sm:$0xff]
        %v4743 = vld [vmem:[#allocation16 + $0x38] sm:$0xff]
        %v4744 = vld [vmem:[#allocation16 + $0x40] sm:$0xff]
        %v4745 = vld [vmem:[#allocation16 + $0x48] sm:$0xff]
        %v4746 = vld [vmem:[#allocation16 + $0x50] sm:$0xff]
        %v4747 = vld [vmem:[#allocation16 + $0x58] sm:$0xff]
        %v4748 = vld [vmem:[#allocation16 + $0x60] sm:$0xff]
        %v4749 = vld [vmem:[#allocation16 + $0x68] sm:$0xff]
        %v4750 = vld [vmem:[#allocation16 + $0x70] sm:$0xff]
        %v4751 = vld [vmem:[#allocation16 + $0x78] sm:$0xff]
        %v4752 = vld [vmem:[%s23] sm:$0x3]
        %v4754 = vlaneseq
        %v4755 = vshrl.u32 %v4754, 7
        %v4756 = vsub.s32 0, %v4755
        %v4757 = vrot.slane %v4752, %v4756
        %v4758 = vlaneseq
        %v4759 = vshrl.u32 %v4758, 7
        %v4760 = vsub.s32 1, %v4759
        %v4761 = vrot.slane %v4752, %v4760
        %v4780 = vunpack.c.l.b16 %v4736
        %v4781 = vunpack.c.h.b16 %v4736
        %v4782 = vunpack.c.l.b16 %v4737
        %v4783 = vunpack.c.h.b16 %v4737
        %v4784 = vunpack.c.l.b16 %v4738
        %v4785 = vunpack.c.h.b16 %v4738
        %v4786 = vunpack.c.l.b16 %v4739
        %v4787 = vunpack.c.h.b16 %v4739
        %v4788 = vunpack.c.l.b16 %v4740
        %v4789 = vunpack.c.h.b16 %v4740
        %v4790 = vunpack.c.l.b16 %v4741
        %v4791 = vunpack.c.h.b16 %v4741
        %v4792 = vunpack.c.l.b16 %v4742
        %v4793 = vunpack.c.h.b16 %v4742
        %v4794 = vunpack.c.l.b16 %v4743
        %v4795 = vunpack.c.h.b16 %v4743
        %v4796 = vunpack.c.l.b16 %v4744
        %v4797 = vunpack.c.h.b16 %v4744
        %v4798 = vunpack.c.l.b16 %v4745
        %v4799 = vunpack.c.h.b16 %v4745
        %v4800 = vunpack.c.l.b16 %v4746
        %v4801 = vunpack.c.h.b16 %v4746
        %v4802 = vunpack.c.l.b16 %v4747
        %v4803 = vunpack.c.h.b16 %v4747
        %v4804 = vunpack.c.l.b16 %v4748
        %v4805 = vunpack.c.h.b16 %v4748
        %v4806 = vunpack.c.l.b16 %v4749
        %v4807 = vunpack.c.h.b16 %v4749
        %v4808 = vunpack.c.l.b16 %v4750
        %v4809 = vunpack.c.h.b16 %v4750
        %v4810 = vunpack.c.l.b16 %v4751
        %v4811 = vunpack.c.h.b16 %v4751
        %v4812 = vpack.c.b16 %v4782, %v4780
        %v4813 = vpack.c.b16 %v4783, %v4781
        %v4814 = vpack.c.b16 %v4786, %v4784
        %v4815 = vpack.c.b16 %v4787, %v4785
        %v4816 = vpack.c.b16 %v4790, %v4788
        %v4817 = vpack.c.b16 %v4791, %v4789
        %v4818 = vpack.c.b16 %v4794, %v4792
        %v4819 = vpack.c.b16 %v4795, %v4793
        %v4820 = vpack.c.b16 %v4798, %v4796
        %v4821 = vpack.c.b16 %v4799, %v4797
        %v4822 = vpack.c.b16 %v4802, %v4800
        %v4823 = vpack.c.b16 %v4803, %v4801
        %v4824 = vpack.c.b16 %v4806, %v4804
        %v4825 = vpack.c.b16 %v4807, %v4805
        %v4826 = vpack.c.b16 %v4810, %v4808
        %v4827 = vpack.c.b16 %v4811, %v4809
        %4844 = vmatprep.subr.bf16.mxu0 %v4813
        %4845 = vmatpush1.bf16.msra.mxu0 %v4812
        %4846 = vmatprep.subr.bf16.mxu0 %v4815
        %4847 = vmatpush1.bf16.msra.mxu0 %v4814
        %4848 = vmatprep.subr.bf16.mxu0 %v4817
        %4849 = vmatpush1.bf16.msra.mxu0 %v4816
        %4850 = vmatprep.subr.bf16.mxu0 %v4819
        %4851 = vmatpush1.bf16.msra.mxu0 %v4818
        %4852 = vmatprep.subr.bf16.mxu0 %v4821
        %4853 = vmatpush1.bf16.msra.mxu0 %v4820
        %4854 = vmatprep.subr.bf16.mxu0 %v4823
        %4855 = vmatpush1.bf16.msra.mxu0 %v4822
        %4856 = vmatprep.subr.bf16.mxu0 %v4825
        %4857 = vmatpush1.bf16.msra.mxu0 %v4824
        %4858 = vmatprep.subr.bf16.mxu0 %v4827
        %4859 = vmatpush1.bf16.msra.mxu0 %v4826
        %4860 = vmatprep.subr.bf16.mxu0 0
        %4861 = vmatpush1.bf16.msra.mxu0 0
        %4862 = vmatprep.subr.bf16.mxu0 0
        %4863 = vmatpush1.bf16.msra.mxu0 0
        %4864 = vmatprep.subr.bf16.mxu0 0
        %4865 = vmatpush1.bf16.msra.mxu0 0
        %4866 = vmatprep.subr.bf16.mxu0 0
        %4867 = vmatpush1.bf16.msra.mxu0 0
        %4868 = vmatprep.subr.bf16.mxu0 0
        %4869 = vmatpush1.bf16.msra.mxu0 0
        %4870 = vmatprep.subr.bf16.mxu0 0
        %4871 = vmatpush1.bf16.msra.mxu0 0
        %4872 = vmatprep.subr.bf16.mxu0 0
        %4873 = vmatpush1.bf16.msra.mxu0 0
        %4874 = vmatprep.subr.bf16.mxu0 0
        %4875 = vmatpush1.bf16.msra.mxu0 0
        %4876 = vmatprep.mubr.bf16.mxu0 0
        %4877 = vmatmul.mubr.bf16.gmra.mrb[0].mxu0 %v4728
        %v4878 = vpop.f32.mrb[0].mxu0
        %v4879 = vadd.f32 %v4757, %v4878
        %v4880 = vpop.f32.mrb[0].mxu0
        %v4881 = vadd.f32 %v4761, %v4880
        %v4882 = vpop.f32.mrb[0].mxu0
        %v4883 = vadd.f32 %v4757, %v4882
        %v4884 = vpop.f32.mrb[0].mxu0
        %v4885 = vadd.f32 %v4761, %v4884
        %4886 = vmatprep.mubr.bf16.mxu0 0
        %4887 = vmatmul.mubr.bf16.gmra.mrb[0].mxu0 %v4729
        %v4888 = vpop.f32.mrb[0].mxu0
        %v4889 = vadd.f32 %v4757, %v4888
        %v4890 = vpop.f32.mrb[0].mxu0
        %v4891 = vadd.f32 %v4761, %v4890
        %v4892 = vpop.f32.mrb[0].mxu0
        %v4893 = vadd.f32 %v4757, %v4892
        %v4894 = vpop.f32.mrb[0].mxu0
        %v4895 = vadd.f32 %v4761, %v4894
        %4896 = vmatprep.mubr.bf16.mxu0 0
        %4897 = vmatmul.mubr.bf16.gmra.mrb[0].mxu0 %v4730
        %v4898 = vpop.f32.mrb[0].mxu0
        %v4899 = vadd.f32 %v4757, %v4898
        %v4900 = vpop.f32.mrb[0].mxu0
        %v4901 = vadd.f32 %v4761, %v4900
        %v4902 = vpop.f32.mrb[0].mxu0
        %v4903 = vadd.f32 %v4757, %v4902
        %v4904 = vpop.f32.mrb[0].mxu0
        %v4905 = vadd.f32 %v4761, %v4904
        %4906 = vmatprep.mubr.bf16.mxu0 0
        %4907 = vmatmul.mubr.bf16.gmra.mrb[0].mxu0 %v4731
        %v4908 = vpop.f32.mrb[0].mxu0
        %v4909 = vadd.f32 %v4757, %v4908
        %v4910 = vpop.f32.mrb[0].mxu0
        %v4911 = vadd.f32 %v4761, %v4910
        %v4912 = vpop.f32.mrb[0].mxu0
        %v4913 = vadd.f32 %v4757, %v4912
        %v4914 = vpop.f32.mrb[0].mxu0
        %v4915 = vadd.f32 %v4761, %v4914
        %4916 = vmatprep.mubr.bf16.mxu0 0
        %4917 = vmatmul.mubr.bf16.gmra.mrb[0].mxu0 %v4732
        %v4918 = vpop.f32.mrb[0].mxu0
        %v4919 = vadd.f32 %v4757, %v4918
        %v4920 = vpop.f32.mrb[0].mxu0
        %v4921 = vadd.f32 %v4761, %v4920
        %v4922 = vpop.f32.mrb[0].mxu0
        %v4923 = vadd.f32 %v4757, %v4922
        %v4924 = vpop.f32.mrb[0].mxu0
        %v4925 = vadd.f32 %v4761, %v4924
        %4926 = vmatprep.mubr.bf16.mxu0 0
        %4927 = vmatmul.mubr.bf16.gmra.mrb[0].mxu0 %v4733
        %v4928 = vpop.f32.mrb[0].mxu0
        %v4929 = vadd.f32 %v4757, %v4928
        %v4930 = vpop.f32.mrb[0].mxu0
        %v4931 = vadd.f32 %v4761, %v4930
        %v4932 = vpop.f32.mrb[0].mxu0
        %v4933 = vadd.f32 %v4757, %v4932
        %v4934 = vpop.f32.mrb[0].mxu0
        %v4935 = vadd.f32 %v4761, %v4934
        %4936 = vmatprep.mubr.bf16.mxu0 0
        %4937 = vmatmul.mubr.bf16.gmra.mrb[0].mxu0 %v4734
        %v4938 = vpop.f32.mrb[0].mxu0
        %v4939 = vadd.f32 %v4757, %v4938
        %v4940 = vpop.f32.mrb[0].mxu0
        %v4941 = vadd.f32 %v4761, %v4940
        %v4942 = vpop.f32.mrb[0].mxu0
        %v4943 = vadd.f32 %v4757, %v4942
        %v4944 = vpop.f32.mrb[0].mxu0
        %v4945 = vadd.f32 %v4761, %v4944
        %4946 = vmatprep.mubr.bf16.mxu0 0
        %4947 = vmatmul.mubr.bf16.gmra.mrb[0].mxu0 %v4735
        %v4948 = vpop.f32.mrb[0].mxu0
        %v4949 = vadd.f32 %v4757, %v4948
        %v4950 = vpop.f32.mrb[0].mxu0
        %v4951 = vadd.f32 %v4761, %v4950
        %v4952 = vpop.f32.mrb[0].mxu0
        %v4953 = vadd.f32 %v4757, %v4952
        %v4954 = vpop.f32.mrb[0].mxu0
        %v4955 = vadd.f32 %v4761, %v4954
        %4956 = vdwg.mxu0
        %v4957 = vmul.f32 %v4879, %v1193
        %v4958 = vmul.f32 %v4881, %v1193
        %v4959 = vmul.f32 %v4883, %v1198
        %v4960 = vmul.f32 %v4885, %v1198
        %v4961 = vmul.f32 %v4889, %v1203
        %v4962 = vmul.f32 %v4891, %v1203
        %v4963 = vmul.f32 %v4893, %v1208
        %v4964 = vmul.f32 %v4895, %v1208
        %v4965 = vmul.f32 %v4899, %v1213
        %v4966 = vmul.f32 %v4901, %v1213
        %v4967 = vmul.f32 %v4903, %v1218
        %v4968 = vmul.f32 %v4905, %v1218
        %v4969 = vmul.f32 %v4909, %v1223
        %v4970 = vmul.f32 %v4911, %v1223
        %v4971 = vmul.f32 %v4913, %v1228
        %v4972 = vmul.f32 %v4915, %v1228
        %v4973 = vmul.f32 %v4919, %v1233
        %v4974 = vmul.f32 %v4921, %v1233
        %v4975 = vmul.f32 %v4923, %v1238
        %v4976 = vmul.f32 %v4925, %v1238
        %v4977 = vmul.f32 %v4929, %v1243
        %v4978 = vmul.f32 %v4931, %v1243
        %v4979 = vmul.f32 %v4933, %v1248
        %v4980 = vmul.f32 %v4935, %v1248
        %v4981 = vmul.f32 %v4939, %v1253
        %v4982 = vmul.f32 %v4941, %v1253
        %v4983 = vmul.f32 %v4943, %v1258
        %v4984 = vmul.f32 %v4945, %v1258
        %v4985 = vmul.f32 %v4949, %v1263
        %v4986 = vmul.f32 %v4951, %v1263
        %v4987 = vmul.f32 %v4953, %v1268
        %v4988 = vmul.f32 %v4955, %v1268
        %v4989 = vmul.f32 %v4958, 1.442695
        %v4990 = vpow.pop %v4989
        %v4991 = vmul.f32 %v4960, 1.442695
        %v4992 = vpow.pop %v4991
        %v4993 = vmul.f32 %v4962, 1.442695
        %v4994 = vpow.pop %v4993
        %v4995 = vmul.f32 %v4964, 1.442695
        %v4996 = vpow.pop %v4995
        %v4997 = vmul.f32 %v4966, 1.442695
        %v4998 = vpow.pop %v4997
        %v4999 = vmul.f32 %v4968, 1.442695
        %v5000 = vpow.pop %v4999
        %v5001 = vmul.f32 %v4970, 1.442695
        %v5002 = vpow.pop %v5001
        %v5003 = vmul.f32 %v4972, 1.442695
        %v5004 = vpow.pop %v5003
        %v5005 = vmul.f32 %v4974, 1.442695
        %v5006 = vpow.pop %v5005
        %v5007 = vmul.f32 %v4976, 1.442695
        %v5008 = vpow.pop %v5007
        %v5009 = vmul.f32 %v4978, 1.442695
        %v5010 = vpow.pop %v5009
        %v5011 = vmul.f32 %v4980, 1.442695
        %v5012 = vpow.pop %v5011
        %v5013 = vmul.f32 %v4982, 1.442695
        %v5014 = vpow.pop %v5013
        %v5015 = vmul.f32 %v4984, 1.442695
        %v5016 = vpow.pop %v5015
        %v5017 = vmul.f32 %v4986, 1.442695
        %v5018 = vpow.pop %v5017
        %v5019 = vmul.f32 %v4988, 1.442695
        %v5020 = vpow.pop %v5019
        %v5021 = vmul.f32 %v979, %v4990
        %v5022 = vmul.f32 %v980, %v4992
        %v5023 = vmul.f32 %v981, %v4994
        %v5024 = vmul.f32 %v982, %v4996
        %v5025 = vmul.f32 %v983, %v4998
        %v5026 = vmul.f32 %v984, %v5000
        %v5027 = vmul.f32 %v985, %v5002
        %v5028 = vmul.f32 %v986, %v5004
        %v5029 = vmul.f32 %v987, %v5006
        %v5030 = vmul.f32 %v988, %v5008
        %v5031 = vmul.f32 %v989, %v5010
        %v5032 = vmul.f32 %v990, %v5012
        %v5033 = vmul.f32 %v991, %v5014
        %v5034 = vmul.f32 %v992, %v5016
        %v5035 = vmul.f32 %v993, %v5018
        %v5036 = vmul.f32 %v994, %v5020
        %v5037 = vmul.f32 %v5021, %v1193
        %v5038 = vmul.f32 %v5022, %v1198
        %v5039 = vmul.f32 %v5023, %v1203
        %v5040 = vmul.f32 %v5024, %v1208
        %v5041 = vmul.f32 %v5025, %v1213
        %v5042 = vmul.f32 %v5026, %v1218
        %v5043 = vmul.f32 %v5027, %v1223
        %v5044 = vmul.f32 %v5028, %v1228
        %v5045 = vmul.f32 %v5029, %v1233
        %v5046 = vmul.f32 %v5030, %v1238
        %v5047 = vmul.f32 %v5031, %v1243
        %v5048 = vmul.f32 %v5032, %v1248
        %v5049 = vmul.f32 %v5033, %v1253
        %v5050 = vmul.f32 %v5034, %v1258
        %v5051 = vmul.f32 %v5035, %v1263
        %v5052 = vmul.f32 %v5036, %v1268
        %v5053 = vadd.f32 %v4957, %v5037
        %v5054 = vadd.f32 %v4959, %v5038
        %v5055 = vadd.f32 %v4961, %v5039
        %v5056 = vadd.f32 %v4963, %v5040
        %v5057 = vadd.f32 %v4965, %v5041
        %v5058 = vadd.f32 %v4967, %v5042
        %v5059 = vadd.f32 %v4969, %v5043
        %v5060 = vadd.f32 %v4971, %v5044
        %v5061 = vadd.f32 %v4973, %v5045
        %v5062 = vadd.f32 %v4975, %v5046
        %v5063 = vadd.f32 %v4977, %v5047
        %v5064 = vadd.f32 %v4979, %v5048
        %v5065 = vadd.f32 %v4981, %v5049
        %v5066 = vadd.f32 %v4983, %v5050
        %v5067 = vadd.f32 %v4985, %v5051
        %v5068 = vadd.f32 %v4987, %v5052
        %5069 = vst [vmem:[%s940] sm:$0xff] %v5053
        %5070 = vst [vmem:[%s940 + $0x8] sm:$0xff] %v5054
        %5071 = vst [vmem:[%s940 + $0x10] sm:$0xff] %v5055
        %5072 = vst [vmem:[%s940 + $0x18] sm:$0xff] %v5056
        %5073 = vst [vmem:[%s940 + $0x20] sm:$0xff] %v5057
        %5074 = vst [vmem:[%s940 + $0x28] sm:$0xff] %v5058
        %5075 = vst [vmem:[%s940 + $0x30] sm:$0xff] %v5059
        %5076 = vst [vmem:[%s940 + $0x38] sm:$0xff] %v5060
        %5077 = vst [vmem:[%s940 + $0x40] sm:$0xff] %v5061
        %5078 = vst [vmem:[%s940 + $0x48] sm:$0xff] %v5062
        %5079 = vst [vmem:[%s940 + $0x50] sm:$0xff] %v5063
        %5080 = vst [vmem:[%s940 + $0x58] sm:$0xff] %v5064
        %5081 = vst [vmem:[%s940 + $0x60] sm:$0xff] %v5065
        %5082 = vst [vmem:[%s940 + $0x68] sm:$0xff] %v5066
        %5083 = vst [vmem:[%s940 + $0x70] sm:$0xff] %v5067
        %5084 = vst [vmem:[%s940 + $0x78] sm:$0xff] %v5068
        %5085 = vadd.xlane.f32.xlu0 %v4958
        %v5086 = vpop.xlane.xlu0 %5085
        %5087 = vadd.xlane.f32.xlu0 %v4960
        %v5088 = vpop.xlane.xlu0 %5087
        %5089 = vadd.xlane.f32.xlu0 %v4962
        %v5090 = vpop.xlane.xlu0 %5089
        %5091 = vadd.xlane.f32.xlu0 %v4964
        %v5092 = vpop.xlane.xlu0 %5091
        %5093 = vadd.xlane.f32.xlu0 %v4966
        %v5094 = vpop.xlane.xlu0 %5093
        %5095 = vadd.xlane.f32.xlu0 %v4968
        %v5096 = vpop.xlane.xlu0 %5095
        %5097 = vadd.xlane.f32.xlu0 %v4970
        %v5098 = vpop.xlane.xlu0 %5097
        %5099 = vadd.xlane.f32.xlu0 %v4972
        %v5100 = vpop.xlane.xlu0 %5099
        %5101 = vadd.xlane.f32.xlu0 %v4974
        %v5102 = vpop.xlane.xlu0 %5101
        %5103 = vadd.xlane.f32.xlu0 %v4976
        %v5104 = vpop.xlane.xlu0 %5103
        %5105 = vadd.xlane.f32.xlu0 %v4978
        %v5106 = vpop.xlane.xlu0 %5105
        %5107 = vadd.xlane.f32.xlu0 %v4980
        %v5108 = vpop.xlane.xlu0 %5107
        %5109 = vadd.xlane.f32.xlu0 %v4982
        %v5110 = vpop.xlane.xlu0 %5109
        %5111 = vadd.xlane.f32.xlu0 %v4984
        %v5112 = vpop.xlane.xlu0 %5111
        %5113 = vadd.xlane.f32.xlu0 %v4986
        %v5114 = vpop.xlane.xlu0 %5113
        %5115 = vadd.xlane.f32.xlu0 %v4988
        %v5116 = vpop.xlane.xlu0 %5115
        %v5117 = vadd.f32 %v5086, %v5088
        %v5118 = vadd.f32 %v5117, %v5090
        %v5119 = vadd.f32 %v5118, %v5092
        %v5120 = vadd.f32 %v5119, %v5094
        %v5121 = vadd.f32 %v5120, %v5096
        %v5122 = vadd.f32 %v5121, %v5098
        %v5123 = vadd.f32 %v5122, %v5100
        %v5124 = vadd.f32 %v5123, %v5102
        %v5125 = vadd.f32 %v5124, %v5104
        %v5126 = vadd.f32 %v5125, %v5106
        %v5127 = vadd.f32 %v5126, %v5108
        %v5128 = vadd.f32 %v5127, %v5110
        %v5129 = vadd.f32 %v5128, %v5112
        %v5130 = vadd.f32 %v5129, %v5114
        %v5131 = vadd.f32 %v5130, %v5116
        %v5132 = vrot.slane %v5131, 4
        %v5133 = vadd.f32 %v5131, %v5132
        %v5134 = vrot.slane %v5133, 2
        %v5135 = vadd.f32 %v5133, %v5134
        %v5136 = vrot.slane %v5135, 1
        %v5137 = vadd.f32 %v5135, %v5136
        %vm5138 = vcmask 0
        %5139 = vst.msk [vmem:[%s961] sm:$0x1] %vm5138, %v5137
        %s5140 = sand.u32 %s579, 1
        %s5141 = scalar_lea.sflag [#allocation4], %s5140
        %s5142 = sand.u32 %s579, 1
        %s5143 = smul.addr %s5142, 128
        %s5144 = scalar_lea.vmem [#allocation17], %s5143
        %p5145 = scmp.lt.s32.totalorder %s47, 1
        %s5146 = scalar_select %p5145, %s47, 1
        %s5147 = scalar_lea.vmem %s25, %s5146
        // Predicated region
        $region153: #{tpu_custom_call.1} parent=115 // pred_check
          %p5148 = pneg %p589
        $region154: #{tpu_custom_call.1} parent=115 // pred_check_branch
          %5150 = sbr.rel (%p5148) target = $region156
        $region155: #{tpu_custom_call.1} parent=115 // pred_region
          %s5152 = ssub.s32 2048, 2048
          %5153 = vsyncadd %s5141, %s5152
          %s5154 = smul.addr %s47, 16
          %s5155 = smul.addr %s5154, 128
          %s5156 = scalar_lea.hbm %s24, %s5155
          %s5157 = sshll.u32 %s5144, 4
          %s5158 = int_to_ptr.vmem [resolvable:$true] %s5157
          %5163 = dma.vmem_to_hbm [thread:$0]  %s5158, 2048, %s5156, %s5141, 128, 128, 8
        $region156: #{tpu_custom_call.1} parent=115 // pred_fallthru
          _
        // Predicated region
        $region157: #{tpu_custom_call.1} parent=115 // pred_check
          %p5164 = pneg %p615
        $region158: #{tpu_custom_call.1} parent=115 // pred_check_branch
          %5166 = sbr.rel (%p5164) target = $region160
        $region159: #{tpu_custom_call.1} parent=115 // pred_region
          _
        $region160: #{tpu_custom_call.1} parent=115 // pred_fallthru
          _
      $region116: #{tpu_custom_call.1} parent=5 // pred_fallthru
        _
      %p5167 = scmp.le.s32.totalorder 2, %s42
      // Predicated region
      $region161: #{tpu_custom_call.1} parent=5 // pred_check
        %p5168 = pneg %p5167
      $region162: #{tpu_custom_call.1} parent=5 // pred_check_branch
        %5170 = sbr.rel (%p5168) target = $region164
      $region163: #{tpu_custom_call.1} parent=5 // pred_region
        %s5171 = ssub.s32 %s42, 2
        // Predicated region
        $region165: #{tpu_custom_call.1} parent=163 // pred_check
          %p5172 = pneg %p595
        $region166: #{tpu_custom_call.1} parent=163 // pred_check_branch
          %5174 = sbr.rel (%p5172) target = $region168
        $region167: #{tpu_custom_call.1} parent=163 // pred_region
          %s5175 = sand.u32 %s580, 1
          %s5176 = scalar_lea.sflag [#allocation4], %s5175
          %s5177 = sand.u32 %s580, 1
          %s5178 = smul.addr %s5177, 128
          %s5179 = scalar_lea.vmem [#allocation17], %s5178
          %5180 = dma.done %s5176, 2048
        $region168: #{tpu_custom_call.1} parent=163 // pred_fallthru
          _
        // Predicated region
        $region169: #{tpu_custom_call.1} parent=163 // pred_check
          %p5181 = pneg %p621
        $region170: #{tpu_custom_call.1} parent=163 // pred_check_branch
          %5183 = sbr.rel (%p5181) target = $region172
        $region171: #{tpu_custom_call.1} parent=163 // pred_region
          %p5184 = scmp.lt.s32.totalorder %s48, 1
          %s5185 = scalar_select %p5184, %s48, 1
          %s5186 = scalar_lea.vmem %s25, %s5185
        $region172: #{tpu_custom_call.1} parent=163 // pred_fallthru
          _
      $region164: #{tpu_custom_call.1} parent=5 // pred_fallthru
        _
    $region6: #{tpu_custom_call.1} parent=1 // loop_footer
      %s46 = sadd.s32 1, %s42
    $region7: #{tpu_custom_call.1} parent=1 // loop_footer_branch
      %41 = sbr.rel target = $region3
    $region8: #{tpu_custom_call.1} parent=1 // loop_exit
      _
    %5187 = vsyncpa [#allocation3], 1
    %s5188 = scalar_lea.sflag [#allocation3], 1
    %5189 = vsyncpa %s5188, 1
    %5190 = vsyncpa [#allocation6], 1
    %5191 = vsyncpa [#allocation9], 1
    %5192 = vsyncpa [#allocation12], 1
    %5193 = vsyncpa [#allocation15], 1
    %5194 = vsyncpa [#allocation4], 1
    %s5195 = scalar_lea.sflag [#allocation4], 1
    %5196 = vsyncpa %s5195, 1

</llo_original>
